<compile_context>
chip_gen: v6e
topology: v6e:2x2x1
jax: 0.10.0
libtpu: 0.0.40
codegen_flags: <defaults>
</compile_context>

<pallas_src>
import functools

import numpy as np

import jax
import jax.numpy as jnp
from jax.experimental import pallas as pl
from jax.experimental.pallas import tpu as pltpu


def _cnn_kernel(x_ref, w1_ref, w2_ref, s1_ref, b1_ref, s2_ref, b2_ref,
                sel1_ref, sel2_ref, o_ref, *,
                offs1, offs2, LW1, L1, WP1, LW2, L2, WP2):
    """Fused Conv+BN+ReLU+Pool (x2) for one sample, in flat row-stride layout.

    x_ref:    (1, 1, LPAD1)      zero-padded flat input (row stride = WP1)
    w1_ref:   (KK, F1, 1)        layer-1 tap weights
    w2_ref:   (KK, F2, F1)       layer-2 tap weights
    s*/b*:    (F, 1)             folded BN scale / bias
    sel1_ref: (L1, LPAD2)        0/1 pool-compaction + re-pad matrix (layer1->2)
    sel2_ref: (L2, H4*W4)        0/1 pool-compaction matrix (layer2 -> output)
    o_ref:    (1, F2, H4*W4)
    """
    f32 = jnp.float32
    x = x_ref[0]                                                  # (1, LPAD1)

    # ---- layer 1: conv(1->F1, kHxkH, 'same') as per-tap broadcast MACs (VPU) ----
    acc1 = w1_ref[0] * x[:, offs1[0]:offs1[0] + LW1]              # (F1, LW1)
    for t in range(1, len(offs1)):
        acc1 = acc1 + w1_ref[t] * x[:, offs1[t]:offs1[t] + LW1]
    y1 = jnp.maximum(acc1 * s1_ref[...] + b1_ref[...], 0.0)       # folded BN + ReLU

    # ---- 2x2 max-pool: max of 4 lane-shifted slices, then exact 0/1 selection
    #      matmul that compacts the pooled pixels AND zero-pads them into the
    #      flat layer-2 input layout (row stride = WP2). ----
    m1 = jnp.maximum(
        jnp.maximum(y1[:, 0:L1], y1[:, 1:L1 + 1]),
        jnp.maximum(y1[:, WP1:WP1 + L1], y1[:, WP1 + 1:WP1 + 1 + L1]))
    xp2 = jnp.dot(m1, sel1_ref[...], preferred_element_type=f32)  # (F1, LPAD2)

    # ---- layer 2: conv(F1->F2, kHxkH, 'same') as per-tap MXU matmuls ----
    acc2 = jnp.dot(w2_ref[0], xp2[:, offs2[0]:offs2[0] + LW2],
                   preferred_element_type=f32)                    # (F2, LW2)
    for t in range(1, len(offs2)):
        acc2 = acc2 + jnp.dot(w2_ref[t], xp2[:, offs2[t]:offs2[t] + LW2],
                              preferred_element_type=f32)
    y2 = jnp.maximum(acc2 * s2_ref[...] + b2_ref[...], 0.0)

    # ---- 2x2 max-pool + compaction straight into the flattened output layout ----
    m2 = jnp.maximum(
        jnp.maximum(y2[:, 0:L2], y2[:, 1:L2 + 1]),
        jnp.maximum(y2[:, WP2:WP2 + L2], y2[:, WP2 + 1:WP2 + 1 + L2]))
    o_ref[0] = jnp.dot(m2, sel2_ref[...], preferred_element_type=f32)  # (F2, H4*W4)


def _fold_bn(conv_bias, gamma, beta, run_mean, run_var, eps=1e-5):
    scale = gamma / jnp.sqrt(run_var + eps)
    bias = beta + scale * (conv_bias - run_mean)
    return scale, bias


def cnn_forward(x, p, eps=1e-5):
    """x: (N, 1, H, W) f32.  Returns (N, F2*(H//4)*(W//4)) f32 (the flattened CNN output)."""
    N, Cin, H, W = x.shape
    w1, w2 = p["w1"], p["w2"]
    F1, F2, kH = w1.shape[0], w2.shape[0], w1.shape[2]
    assert Cin == 1 and w1.shape[1] == 1 and kH % 2 == 1 and H % 4 == 0 and W % 4 == 0
    P = (kH - 1) // 2
    KK = kH * kH

    # --- flat-layout geometry (row stride = padded width, +1 trailing zero row
    #     per layer so every tap slice stays in bounds) ---
    WP1 = W + 2 * P
    LPAD1 = (H + 2 * P + 1) * WP1
    LW1 = H * WP1
    L1 = LW1 - WP1 - 1
    H2, W2 = H // 2, W // 2
    WP2 = W2 + 2 * P
    LPAD2 = (H2 + 2 * P + 1) * WP2
    LW2 = H2 * WP2
    L2 = LW2 - WP2 - 1
    H4, W4 = H2 // 2, W2 // 2

    offs1 = tuple(kh * WP1 + kw for kh in range(kH) for kw in range(kH))
    offs2 = tuple(kh * WP2 + kw for kh in range(kH) for kw in range(kH))

    # --- exact 0/1 selection matrices (built at trace time, constants in VMEM) ---
    sel1_np = np.zeros((L1, LPAD2), np.float32)      # pooled(j,k) -> padded layer-2 input
    for j in range(H2):
        for k in range(W2):
            sel1_np[2 * j * WP1 + 2 * k, (j + P) * WP2 + (k + P)] = 1.0
    sel2_np = np.zeros((L2, H4 * W4), np.float32)    # pooled(j,k) -> flattened output
    for j in range(H4):
        for k in range(W4):
            sel2_np[2 * j * WP2 + 2 * k, j * W4 + k] = 1.0
    sel1 = jnp.asarray(sel1_np)
    sel2 = jnp.asarray(sel2_np)

    # --- weights as per-tap matrices; BN folded to per-channel scale/bias columns ---
    w1t = jnp.transpose(w1, (2, 3, 0, 1)).reshape(KK, F1, 1)
    w2t = jnp.transpose(w2, (2, 3, 0, 1)).reshape(KK, F2, F1)
    s1, b1 = _fold_bn(p["b1"], p["g1"], p["be1"], p["rm1"], p["rv1"], eps)
    s2, b2 = _fold_bn(p["b2"], p["g2"], p["be2"], p["rm2"], p["rv2"], eps)
    s1 = s1.reshape(F1, 1)
    b1 = b1.reshape(F1, 1)
    s2 = s2.reshape(F2, 1)
    b2 = b2.reshape(F2, 1)

    # One tiny zero-pad of the raw input (fused under jit), then a free reshape to
    # the flat row-stride-WP1 layout.  All inter-layer padding is done in-kernel.
    xp = jnp.pad(x, ((0, 0), (0, 0), (P, P + 1), (P, P))).reshape(N, 1, LPAD1)

    kernel = functools.partial(_cnn_kernel, offs1=offs1, offs2=offs2,
                               LW1=LW1, L1=L1, WP1=WP1,
                               LW2=LW2, L2=L2, WP2=WP2)

    out = pl.pallas_call(
        kernel,
        out_shape=jax.ShapeDtypeStruct((N, F2, H4 * W4), jnp.float32),
        grid_spec=pltpu.PrefetchScalarGridSpec(
            num_scalar_prefetch=0,
            grid=(N,),
            in_specs=[
                pl.BlockSpec((1, 1, LPAD1), lambda n: (n, 0, 0)),     # flat padded input
                pl.BlockSpec((KK, F1, 1), lambda n: (0, 0, 0)),       # layer-1 taps
                pl.BlockSpec((KK, F2, F1), lambda n: (0, 0, 0)),      # layer-2 taps
                pl.BlockSpec((F1, 1), lambda n: (0, 0)),              # BN1 scale
                pl.BlockSpec((F1, 1), lambda n: (0, 0)),              # BN1 bias
                pl.BlockSpec((F2, 1), lambda n: (0, 0)),              # BN2 scale
                pl.BlockSpec((F2, 1), lambda n: (0, 0)),              # BN2 bias
                pl.BlockSpec((L1, LPAD2), lambda n: (0, 0)),          # pool1 selection
                pl.BlockSpec((L2, H4 * W4), lambda n: (0, 0)),        # pool2 selection
            ],
            out_specs=pl.BlockSpec((1, F2, H4 * W4), lambda n: (n, 0, 0)),
        ),
        compiler_params=pltpu.CompilerParams(dimension_semantics=("parallel",)),
    )(xp, w1t, w2t, s1, b1, s2, b2, sel1, sel2)

    return out.reshape(N, F2 * H4 * W4)               # == out.view(N, -1)


def reference_forward(x, p, eps=1e-5):
    """Pure-JAX reference of the PyTorch module (eval-mode BN)."""
    def layer(x, w, b, g, be, rm, rv):
        P = (w.shape[2] - 1) // 2
        y = jax.lax.conv_general_dilated(
            x, w, window_strides=(1, 1), padding=[(P, P), (P, P)],
            dimension_numbers=("NCHW", "OIHW", "NCHW"))
        y = y + b[None, :, None, None]
        y = (g[None, :, None, None] * (y - rm[None, :, None, None])
             / jnp.sqrt(rv + eps)[None, :, None, None] + be[None, :, None, None])
        y = jnp.maximum(y, 0.0)
        return jax.lax.reduce_window(y, -jnp.inf, jax.lax.max,
                                     (1, 1, 2, 2), (1, 1, 2, 2), "VALID")
    y = layer(x, p["w1"], p["b1"], p["g1"], p["be1"], p["rm1"], p["rv1"])
    y = layer(y, p["w2"], p["b2"], p["g2"], p["be2"], p["rm2"], p["rv2"])
    return y.reshape(y.shape[0], -1)


def init_params(key, noFilters1, noFilters2, kH):
    ks = jax.random.split(key, 12)
    f32 = jnp.float32
    return {
        "w1": 0.1 * jax.random.normal(ks[0], (noFilters1, 1, kH, kH), f32),
        "b1": 0.1 * jax.random.normal(ks[1], (noFilters1,), f32),
        "g1": 1.0 + 0.1 * jax.random.normal(ks[2], (noFilters1,), f32),
        "be1": 0.1 * jax.random.normal(ks[3], (noFilters1,), f32),
        "rm1": 0.1 * jax.random.normal(ks[4], (noFilters1,), f32),
        "rv1": 1.0 + 0.1 * jnp.abs(jax.random.normal(ks[5], (noFilters1,), f32)),
        "w2": 0.1 * jax.random.normal(ks[6], (noFilters2, noFilters1, kH, kH), f32),
        "b2": 0.1 * jax.random.normal(ks[7], (noFilters2,), f32),
        "g2": 1.0 + 0.1 * jax.random.normal(ks[8], (noFilters2,), f32),
        "be2": 0.1 * jax.random.normal(ks[9], (noFilters2,), f32),
        "rm2": 0.1 * jax.random.normal(ks[10], (noFilters2,), f32),
        "rv2": 1.0 + 0.1 * jnp.abs(jax.random.normal(ks[11], (noFilters2,), f32)),
    }


if __name__ == "__main__":
    kH = 5
    noFilters1 = 4
    noFilters2 = 8

    key = jax.random.PRNGKey(0)
    pkey, xkey = jax.random.split(key)
    params = init_params(pkey, noFilters1, noFilters2, kH)

    # Small input consistent with Conv2d(1, ...): N=2, C=1, H=W=16.
    x = jax.random.normal(xkey, (2, 1, 16, 16), jnp.float32)

    fwd = jax.jit(cnn_forward)
    out = jax.block_until_ready(fwd(x, params))

    assert out.shape == (2, noFilters2 * 4 * 4), out.shape

    ref = jax.block_until_ready(reference_forward(x, params))
    if not jnp.allclose(out, ref, atol=2e-4, rtol=2e-4):
        max_err = float(jnp.max(jnp.abs(out - ref)))
        raise AssertionError(f"mismatch vs reference, max abs err = {max_err}")

    print("KERNEL_OK")
</pallas_src>

<mosaic_0001>
module attributes {stable_mosaic.version = 11 : i64} {
  func.func @_cnn_kernel(%arg0: i32, %arg1: memref<1x1x420xf32, #tpu.memory_space<vmem>>, %arg2: memref<25x4x1xf32, #tpu.memory_space<vmem>>, %arg3: memref<25x8x4xf32, #tpu.memory_space<vmem>>, %arg4: memref<4x1xf32, #tpu.memory_space<vmem>>, %arg5: memref<4x1xf32, #tpu.memory_space<vmem>>, %arg6: memref<8x1xf32, #tpu.memory_space<vmem>>, %arg7: memref<8x1xf32, #tpu.memory_space<vmem>>, %arg8: memref<299x156xf32, #tpu.memory_space<vmem>>, %arg9: memref<83x16xf32, #tpu.memory_space<vmem>>, %arg10: memref<1x8x16xf32, #tpu.memory_space<vmem>>) attributes {dimension_semantics = [#tpu.dimension_semantics<parallel>], iteration_bounds = array<i64: 2>, scalar_prefetch = 0 : i64, scratch_operands = 0 : i64, tpu.core_type = #tpu.core_type<tc>, window_params = [{transform_indices = @transform_0, window_bounds = array<i64: 1, 1, 420>}, {pipeline_mode = #tpu.pipeline_mode<synchronous>, transform_indices = @transform_1, window_bounds = array<i64: 25, 4, 1>}, {pipeline_mode = #tpu.pipeline_mode<synchronous>, transform_indices = @transform_2, window_bounds = array<i64: 25, 8, 4>}, {pipeline_mode = #tpu.pipeline_mode<synchronous>, transform_indices = @transform_3, window_bounds = array<i64: 4, 1>}, {pipeline_mode = #tpu.pipeline_mode<synchronous>, transform_indices = @transform_4, window_bounds = array<i64: 4, 1>}, {pipeline_mode = #tpu.pipeline_mode<synchronous>, transform_indices = @transform_5, window_bounds = array<i64: 8, 1>}, {pipeline_mode = #tpu.pipeline_mode<synchronous>, transform_indices = @transform_6, window_bounds = array<i64: 8, 1>}, {pipeline_mode = #tpu.pipeline_mode<synchronous>, transform_indices = @transform_7, window_bounds = array<i64: 299, 156>}, {pipeline_mode = #tpu.pipeline_mode<synchronous>, transform_indices = @transform_8, window_bounds = array<i64: 83, 16>}, {transform_indices = @transform_9, window_bounds = array<i64: 1, 8, 16>}]} {
    %c0 = arith.constant 0 : index
    %c0_0 = arith.constant 0 : index
    %c0_1 = arith.constant 0 : index
    %0 = vector.load %arg1[%c0, %c0_0, %c0_1] : memref<1x1x420xf32, #tpu.memory_space<vmem>>, vector<1x1x420xf32>
    %1 = vector.shape_cast %0 : vector<1x1x420xf32> to vector<1x420xf32>
    %c0_2 = arith.constant 0 : index
    %c0_3 = arith.constant 0 : index
    %c0_4 = arith.constant 0 : index
    %2 = vector.load %arg2[%c0_2, %c0_3, %c0_4] : memref<25x4x1xf32, #tpu.memory_space<vmem>>, vector<1x4x1xf32>
    %3 = vector.shape_cast %2 : vector<1x4x1xf32> to vector<4x1xf32>
    %4 = vector.extract_strided_slice %1 {offsets = [0, 0], sizes = [1, 320], strides = [1, 1]} : vector<1x420xf32> to vector<1x320xf32>
    %5 = vector.broadcast %3 : vector<4x1xf32> to vector<4x320xf32>
    %6 = vector.broadcast %4 : vector<1x320xf32> to vector<4x320xf32>
    %7 = arith.mulf %5, %6 : vector<4x320xf32>
    %c1 = arith.constant 1 : index
    %c0_5 = arith.constant 0 : index
    %c0_6 = arith.constant 0 : index
    %8 = vector.load %arg2[%c1, %c0_5, %c0_6] : memref<25x4x1xf32, #tpu.memory_space<vmem>>, vector<1x4x1xf32>
    %9 = vector.shape_cast %8 : vector<1x4x1xf32> to vector<4x1xf32>
    %10 = vector.extract_strided_slice %1 {offsets = [0, 1], sizes = [1, 320], strides = [1, 1]} : vector<1x420xf32> to vector<1x320xf32>
    %11 = vector.broadcast %9 : vector<4x1xf32> to vector<4x320xf32>
    %12 = vector.broadcast %10 : vector<1x320xf32> to vector<4x320xf32>
    %13 = arith.mulf %11, %12 : vector<4x320xf32>
    %14 = arith.addf %7, %13 : vector<4x320xf32>
    %c2 = arith.constant 2 : index
    %c0_7 = arith.constant 0 : index
    %c0_8 = arith.constant 0 : index
    %15 = vector.load %arg2[%c2, %c0_7, %c0_8] : memref<25x4x1xf32, #tpu.memory_space<vmem>>, vector<1x4x1xf32>
    %16 = vector.shape_cast %15 : vector<1x4x1xf32> to vector<4x1xf32>
    %17 = vector.extract_strided_slice %1 {offsets = [0, 2], sizes = [1, 320], strides = [1, 1]} : vector<1x420xf32> to vector<1x320xf32>
    %18 = vector.broadcast %16 : vector<4x1xf32> to vector<4x320xf32>
    %19 = vector.broadcast %17 : vector<1x320xf32> to vector<4x320xf32>
    %20 = arith.mulf %18, %19 : vector<4x320xf32>
    %21 = arith.addf %14, %20 : vector<4x320xf32>
    %c3 = arith.constant 3 : index
    %c0_9 = arith.constant 0 : index
    %c0_10 = arith.constant 0 : index
    %22 = vector.load %arg2[%c3, %c0_9, %c0_10] : memref<25x4x1xf32, #tpu.memory_space<vmem>>, vector<1x4x1xf32>
    %23 = vector.shape_cast %22 : vector<1x4x1xf32> to vector<4x1xf32>
    %24 = vector.extract_strided_slice %1 {offsets = [0, 3], sizes = [1, 320], strides = [1, 1]} : vector<1x420xf32> to vector<1x320xf32>
    %25 = vector.broadcast %23 : vector<4x1xf32> to vector<4x320xf32>
    %26 = vector.broadcast %24 : vector<1x320xf32> to vector<4x320xf32>
    %27 = arith.mulf %25, %26 : vector<4x320xf32>
    %28 = arith.addf %21, %27 : vector<4x320xf32>
    %c4 = arith.constant 4 : index
    %c0_11 = arith.constant 0 : index
    %c0_12 = arith.constant 0 : index
    %29 = vector.load %arg2[%c4, %c0_11, %c0_12] : memref<25x4x1xf32, #tpu.memory_space<vmem>>, vector<1x4x1xf32>
    %30 = vector.shape_cast %29 : vector<1x4x1xf32> to vector<4x1xf32>
    %31 = vector.extract_strided_slice %1 {offsets = [0, 4], sizes = [1, 320], strides = [1, 1]} : vector<1x420xf32> to vector<1x320xf32>
    %32 = vector.broadcast %30 : vector<4x1xf32> to vector<4x320xf32>
    %33 = vector.broadcast %31 : vector<1x320xf32> to vector<4x320xf32>
    %34 = arith.mulf %32, %33 : vector<4x320xf32>
    %35 = arith.addf %28, %34 : vector<4x320xf32>
    %c5 = arith.constant 5 : index
    %c0_13 = arith.constant 0 : index
    %c0_14 = arith.constant 0 : index
    %36 = vector.load %arg2[%c5, %c0_13, %c0_14] : memref<25x4x1xf32, #tpu.memory_space<vmem>>, vector<1x4x1xf32>
    %37 = vector.shape_cast %36 : vector<1x4x1xf32> to vector<4x1xf32>
    %38 = vector.extract_strided_slice %1 {offsets = [0, 20], sizes = [1, 320], strides = [1, 1]} : vector<1x420xf32> to vector<1x320xf32>
    %39 = vector.broadcast %37 : vector<4x1xf32> to vector<4x320xf32>
    %40 = vector.broadcast %38 : vector<1x320xf32> to vector<4x320xf32>
    %41 = arith.mulf %39, %40 : vector<4x320xf32>
    %42 = arith.addf %35, %41 : vector<4x320xf32>
    %c6 = arith.constant 6 : index
    %c0_15 = arith.constant 0 : index
    %c0_16 = arith.constant 0 : index
    %43 = vector.load %arg2[%c6, %c0_15, %c0_16] : memref<25x4x1xf32, #tpu.memory_space<vmem>>, vector<1x4x1xf32>
    %44 = vector.shape_cast %43 : vector<1x4x1xf32> to vector<4x1xf32>
    %45 = vector.extract_strided_slice %1 {offsets = [0, 21], sizes = [1, 320], strides = [1, 1]} : vector<1x420xf32> to vector<1x320xf32>
    %46 = vector.broadcast %44 : vector<4x1xf32> to vector<4x320xf32>
    %47 = vector.broadcast %45 : vector<1x320xf32> to vector<4x320xf32>
    %48 = arith.mulf %46, %47 : vector<4x320xf32>
    %49 = arith.addf %42, %48 : vector<4x320xf32>
    %c7 = arith.constant 7 : index
    %c0_17 = arith.constant 0 : index
    %c0_18 = arith.constant 0 : index
    %50 = vector.load %arg2[%c7, %c0_17, %c0_18] : memref<25x4x1xf32, #tpu.memory_space<vmem>>, vector<1x4x1xf32>
    %51 = vector.shape_cast %50 : vector<1x4x1xf32> to vector<4x1xf32>
    %52 = vector.extract_strided_slice %1 {offsets = [0, 22], sizes = [1, 320], strides = [1, 1]} : vector<1x420xf32> to vector<1x320xf32>
    %53 = vector.broadcast %51 : vector<4x1xf32> to vector<4x320xf32>
    %54 = vector.broadcast %52 : vector<1x320xf32> to vector<4x320xf32>
    %55 = arith.mulf %53, %54 : vector<4x320xf32>
    %56 = arith.addf %49, %55 : vector<4x320xf32>
    %c8 = arith.constant 8 : index
    %c0_19 = arith.constant 0 : index
    %c0_20 = arith.constant 0 : index
    %57 = vector.load %arg2[%c8, %c0_19, %c0_20] : memref<25x4x1xf32, #tpu.memory_space<vmem>>, vector<1x4x1xf32>
    %58 = vector.shape_cast %57 : vector<1x4x1xf32> to vector<4x1xf32>
    %59 = vector.extract_strided_slice %1 {offsets = [0, 23], sizes = [1, 320], strides = [1, 1]} : vector<1x420xf32> to vector<1x320xf32>
    %60 = vector.broadcast %58 : vector<4x1xf32> to vector<4x320xf32>
    %61 = vector.broadcast %59 : vector<1x320xf32> to vector<4x320xf32>
    %62 = arith.mulf %60, %61 : vector<4x320xf32>
    %63 = arith.addf %56, %62 : vector<4x320xf32>
    %c9 = arith.constant 9 : index
    %c0_21 = arith.constant 0 : index
    %c0_22 = arith.constant 0 : index
    %64 = vector.load %arg2[%c9, %c0_21, %c0_22] : memref<25x4x1xf32, #tpu.memory_space<vmem>>, vector<1x4x1xf32>
    %65 = vector.shape_cast %64 : vector<1x4x1xf32> to vector<4x1xf32>
    %66 = vector.extract_strided_slice %1 {offsets = [0, 24], sizes = [1, 320], strides = [1, 1]} : vector<1x420xf32> to vector<1x320xf32>
    %67 = vector.broadcast %65 : vector<4x1xf32> to vector<4x320xf32>
    %68 = vector.broadcast %66 : vector<1x320xf32> to vector<4x320xf32>
    %69 = arith.mulf %67, %68 : vector<4x320xf32>
    %70 = arith.addf %63, %69 : vector<4x320xf32>
    %c10 = arith.constant 10 : index
    %c0_23 = arith.constant 0 : index
    %c0_24 = arith.constant 0 : index
    %71 = vector.load %arg2[%c10, %c0_23, %c0_24] : memref<25x4x1xf32, #tpu.memory_space<vmem>>, vector<1x4x1xf32>
    %72 = vector.shape_cast %71 : vector<1x4x1xf32> to vector<4x1xf32>
    %73 = vector.extract_strided_slice %1 {offsets = [0, 40], sizes = [1, 320], strides = [1, 1]} : vector<1x420xf32> to vector<1x320xf32>
    %74 = vector.broadcast %72 : vector<4x1xf32> to vector<4x320xf32>
    %75 = vector.broadcast %73 : vector<1x320xf32> to vector<4x320xf32>
    %76 = arith.mulf %74, %75 : vector<4x320xf32>
    %77 = arith.addf %70, %76 : vector<4x320xf32>
    %c11 = arith.constant 11 : index
    %c0_25 = arith.constant 0 : index
    %c0_26 = arith.constant 0 : index
    %78 = vector.load %arg2[%c11, %c0_25, %c0_26] : memref<25x4x1xf32, #tpu.memory_space<vmem>>, vector<1x4x1xf32>
    %79 = vector.shape_cast %78 : vector<1x4x1xf32> to vector<4x1xf32>
    %80 = vector.extract_strided_slice %1 {offsets = [0, 41], sizes = [1, 320], strides = [1, 1]} : vector<1x420xf32> to vector<1x320xf32>
    %81 = vector.broadcast %79 : vector<4x1xf32> to vector<4x320xf32>
    %82 = vector.broadcast %80 : vector<1x320xf32> to vector<4x320xf32>
    %83 = arith.mulf %81, %82 : vector<4x320xf32>
    %84 = arith.addf %77, %83 : vector<4x320xf32>
    %c12 = arith.constant 12 : index
    %c0_27 = arith.constant 0 : index
    %c0_28 = arith.constant 0 : index
    %85 = vector.load %arg2[%c12, %c0_27, %c0_28] : memref<25x4x1xf32, #tpu.memory_space<vmem>>, vector<1x4x1xf32>
    %86 = vector.shape_cast %85 : vector<1x4x1xf32> to vector<4x1xf32>
    %87 = vector.extract_strided_slice %1 {offsets = [0, 42], sizes = [1, 320], strides = [1, 1]} : vector<1x420xf32> to vector<1x320xf32>
    %88 = vector.broadcast %86 : vector<4x1xf32> to vector<4x320xf32>
    %89 = vector.broadcast %87 : vector<1x320xf32> to vector<4x320xf32>
    %90 = arith.mulf %88, %89 : vector<4x320xf32>
    %91 = arith.addf %84, %90 : vector<4x320xf32>
    %c13 = arith.constant 13 : index
    %c0_29 = arith.constant 0 : index
    %c0_30 = arith.constant 0 : index
    %92 = vector.load %arg2[%c13, %c0_29, %c0_30] : memref<25x4x1xf32, #tpu.memory_space<vmem>>, vector<1x4x1xf32>
    %93 = vector.shape_cast %92 : vector<1x4x1xf32> to vector<4x1xf32>
    %94 = vector.extract_strided_slice %1 {offsets = [0, 43], sizes = [1, 320], strides = [1, 1]} : vector<1x420xf32> to vector<1x320xf32>
    %95 = vector.broadcast %93 : vector<4x1xf32> to vector<4x320xf32>
    %96 = vector.broadcast %94 : vector<1x320xf32> to vector<4x320xf32>
    %97 = arith.mulf %95, %96 : vector<4x320xf32>
    %98 = arith.addf %91, %97 : vector<4x320xf32>
    %c14 = arith.constant 14 : index
    %c0_31 = arith.constant 0 : index
    %c0_32 = arith.constant 0 : index
    %99 = vector.load %arg2[%c14, %c0_31, %c0_32] : memref<25x4x1xf32, #tpu.memory_space<vmem>>, vector<1x4x1xf32>
    %100 = vector.shape_cast %99 : vector<1x4x1xf32> to vector<4x1xf32>
    %101 = vector.extract_strided_slice %1 {offsets = [0, 44], sizes = [1, 320], strides = [1, 1]} : vector<1x420xf32> to vector<1x320xf32>
    %102 = vector.broadcast %100 : vector<4x1xf32> to vector<4x320xf32>
    %103 = vector.broadcast %101 : vector<1x320xf32> to vector<4x320xf32>
    %104 = arith.mulf %102, %103 : vector<4x320xf32>
    %105 = arith.addf %98, %104 : vector<4x320xf32>
    %c15 = arith.constant 15 : index
    %c0_33 = arith.constant 0 : index
    %c0_34 = arith.constant 0 : index
    %106 = vector.load %arg2[%c15, %c0_33, %c0_34] : memref<25x4x1xf32, #tpu.memory_space<vmem>>, vector<1x4x1xf32>
    %107 = vector.shape_cast %106 : vector<1x4x1xf32> to vector<4x1xf32>
    %108 = vector.extract_strided_slice %1 {offsets = [0, 60], sizes = [1, 320], strides = [1, 1]} : vector<1x420xf32> to vector<1x320xf32>
    %109 = vector.broadcast %107 : vector<4x1xf32> to vector<4x320xf32>
    %110 = vector.broadcast %108 : vector<1x320xf32> to vector<4x320xf32>
    %111 = arith.mulf %109, %110 : vector<4x320xf32>
    %112 = arith.addf %105, %111 : vector<4x320xf32>
    %c16 = arith.constant 16 : index
    %c0_35 = arith.constant 0 : index
    %c0_36 = arith.constant 0 : index
    %113 = vector.load %arg2[%c16, %c0_35, %c0_36] : memref<25x4x1xf32, #tpu.memory_space<vmem>>, vector<1x4x1xf32>
    %114 = vector.shape_cast %113 : vector<1x4x1xf32> to vector<4x1xf32>
    %115 = vector.extract_strided_slice %1 {offsets = [0, 61], sizes = [1, 320], strides = [1, 1]} : vector<1x420xf32> to vector<1x320xf32>
    %116 = vector.broadcast %114 : vector<4x1xf32> to vector<4x320xf32>
    %117 = vector.broadcast %115 : vector<1x320xf32> to vector<4x320xf32>
    %118 = arith.mulf %116, %117 : vector<4x320xf32>
    %119 = arith.addf %112, %118 : vector<4x320xf32>
    %c17 = arith.constant 17 : index
    %c0_37 = arith.constant 0 : index
    %c0_38 = arith.constant 0 : index
    %120 = vector.load %arg2[%c17, %c0_37, %c0_38] : memref<25x4x1xf32, #tpu.memory_space<vmem>>, vector<1x4x1xf32>
    %121 = vector.shape_cast %120 : vector<1x4x1xf32> to vector<4x1xf32>
    %122 = vector.extract_strided_slice %1 {offsets = [0, 62], sizes = [1, 320], strides = [1, 1]} : vector<1x420xf32> to vector<1x320xf32>
    %123 = vector.broadcast %121 : vector<4x1xf32> to vector<4x320xf32>
    %124 = vector.broadcast %122 : vector<1x320xf32> to vector<4x320xf32>
    %125 = arith.mulf %123, %124 : vector<4x320xf32>
    %126 = arith.addf %119, %125 : vector<4x320xf32>
    %c18 = arith.constant 18 : index
    %c0_39 = arith.constant 0 : index
    %c0_40 = arith.constant 0 : index
    %127 = vector.load %arg2[%c18, %c0_39, %c0_40] : memref<25x4x1xf32, #tpu.memory_space<vmem>>, vector<1x4x1xf32>
    %128 = vector.shape_cast %127 : vector<1x4x1xf32> to vector<4x1xf32>
    %129 = vector.extract_strided_slice %1 {offsets = [0, 63], sizes = [1, 320], strides = [1, 1]} : vector<1x420xf32> to vector<1x320xf32>
    %130 = vector.broadcast %128 : vector<4x1xf32> to vector<4x320xf32>
    %131 = vector.broadcast %129 : vector<1x320xf32> to vector<4x320xf32>
    %132 = arith.mulf %130, %131 : vector<4x320xf32>
    %133 = arith.addf %126, %132 : vector<4x320xf32>
    %c19 = arith.constant 19 : index
    %c0_41 = arith.constant 0 : index
    %c0_42 = arith.constant 0 : index
    %134 = vector.load %arg2[%c19, %c0_41, %c0_42] : memref<25x4x1xf32, #tpu.memory_space<vmem>>, vector<1x4x1xf32>
    %135 = vector.shape_cast %134 : vector<1x4x1xf32> to vector<4x1xf32>
    %136 = vector.extract_strided_slice %1 {offsets = [0, 64], sizes = [1, 320], strides = [1, 1]} : vector<1x420xf32> to vector<1x320xf32>
    %137 = vector.broadcast %135 : vector<4x1xf32> to vector<4x320xf32>
    %138 = vector.broadcast %136 : vector<1x320xf32> to vector<4x320xf32>
    %139 = arith.mulf %137, %138 : vector<4x320xf32>
    %140 = arith.addf %133, %139 : vector<4x320xf32>
    %c20 = arith.constant 20 : index
    %c0_43 = arith.constant 0 : index
    %c0_44 = arith.constant 0 : index
    %141 = vector.load %arg2[%c20, %c0_43, %c0_44] : memref<25x4x1xf32, #tpu.memory_space<vmem>>, vector<1x4x1xf32>
    %142 = vector.shape_cast %141 : vector<1x4x1xf32> to vector<4x1xf32>
    %143 = vector.extract_strided_slice %1 {offsets = [0, 80], sizes = [1, 320], strides = [1, 1]} : vector<1x420xf32> to vector<1x320xf32>
    %144 = vector.broadcast %142 : vector<4x1xf32> to vector<4x320xf32>
    %145 = vector.broadcast %143 : vector<1x320xf32> to vector<4x320xf32>
    %146 = arith.mulf %144, %145 : vector<4x320xf32>
    %147 = arith.addf %140, %146 : vector<4x320xf32>
    %c21 = arith.constant 21 : index
    %c0_45 = arith.constant 0 : index
    %c0_46 = arith.constant 0 : index
    %148 = vector.load %arg2[%c21, %c0_45, %c0_46] : memref<25x4x1xf32, #tpu.memory_space<vmem>>, vector<1x4x1xf32>
    %149 = vector.shape_cast %148 : vector<1x4x1xf32> to vector<4x1xf32>
    %150 = vector.extract_strided_slice %1 {offsets = [0, 81], sizes = [1, 320], strides = [1, 1]} : vector<1x420xf32> to vector<1x320xf32>
    %151 = vector.broadcast %149 : vector<4x1xf32> to vector<4x320xf32>
    %152 = vector.broadcast %150 : vector<1x320xf32> to vector<4x320xf32>
    %153 = arith.mulf %151, %152 : vector<4x320xf32>
    %154 = arith.addf %147, %153 : vector<4x320xf32>
    %c22 = arith.constant 22 : index
    %c0_47 = arith.constant 0 : index
    %c0_48 = arith.constant 0 : index
    %155 = vector.load %arg2[%c22, %c0_47, %c0_48] : memref<25x4x1xf32, #tpu.memory_space<vmem>>, vector<1x4x1xf32>
    %156 = vector.shape_cast %155 : vector<1x4x1xf32> to vector<4x1xf32>
    %157 = vector.extract_strided_slice %1 {offsets = [0, 82], sizes = [1, 320], strides = [1, 1]} : vector<1x420xf32> to vector<1x320xf32>
    %158 = vector.broadcast %156 : vector<4x1xf32> to vector<4x320xf32>
    %159 = vector.broadcast %157 : vector<1x320xf32> to vector<4x320xf32>
    %160 = arith.mulf %158, %159 : vector<4x320xf32>
    %161 = arith.addf %154, %160 : vector<4x320xf32>
    %c23 = arith.constant 23 : index
    %c0_49 = arith.constant 0 : index
    %c0_50 = arith.constant 0 : index
    %162 = vector.load %arg2[%c23, %c0_49, %c0_50] : memref<25x4x1xf32, #tpu.memory_space<vmem>>, vector<1x4x1xf32>
    %163 = vector.shape_cast %162 : vector<1x4x1xf32> to vector<4x1xf32>
    %164 = vector.extract_strided_slice %1 {offsets = [0, 83], sizes = [1, 320], strides = [1, 1]} : vector<1x420xf32> to vector<1x320xf32>
    %165 = vector.broadcast %163 : vector<4x1xf32> to vector<4x320xf32>
    %166 = vector.broadcast %164 : vector<1x320xf32> to vector<4x320xf32>
    %167 = arith.mulf %165, %166 : vector<4x320xf32>
    %168 = arith.addf %161, %167 : vector<4x320xf32>
    %c24 = arith.constant 24 : index
    %c0_51 = arith.constant 0 : index
    %c0_52 = arith.constant 0 : index
    %169 = vector.load %arg2[%c24, %c0_51, %c0_52] : memref<25x4x1xf32, #tpu.memory_space<vmem>>, vector<1x4x1xf32>
    %170 = vector.shape_cast %169 : vector<1x4x1xf32> to vector<4x1xf32>
    %171 = vector.extract_strided_slice %1 {offsets = [0, 84], sizes = [1, 320], strides = [1, 1]} : vector<1x420xf32> to vector<1x320xf32>
    %172 = vector.broadcast %170 : vector<4x1xf32> to vector<4x320xf32>
    %173 = vector.broadcast %171 : vector<1x320xf32> to vector<4x320xf32>
    %174 = arith.mulf %172, %173 : vector<4x320xf32>
    %175 = arith.addf %168, %174 : vector<4x320xf32>
    %c0_53 = arith.constant 0 : index
    %c0_54 = arith.constant 0 : index
    %176 = vector.load %arg4[%c0_53, %c0_54] : memref<4x1xf32, #tpu.memory_space<vmem>>, vector<4x1xf32>
    %177 = vector.broadcast %176 : vector<4x1xf32> to vector<4x320xf32>
    %178 = arith.mulf %175, %177 : vector<4x320xf32>
    %c0_55 = arith.constant 0 : index
    %c0_56 = arith.constant 0 : index
    %179 = vector.load %arg5[%c0_55, %c0_56] : memref<4x1xf32, #tpu.memory_space<vmem>>, vector<4x1xf32>
    %180 = vector.broadcast %179 : vector<4x1xf32> to vector<4x320xf32>
    %181 = arith.addf %178, %180 : vector<4x320xf32>
    %cst = arith.constant 0.000000e+00 : f32
    %182 = vector.broadcast %cst : f32 to vector<4x320xf32>
    %183 = arith.maximumf %181, %182 : vector<4x320xf32>
    %184 = vector.extract_strided_slice %183 {offsets = [0, 0], sizes = [4, 299], strides = [1, 1]} : vector<4x320xf32> to vector<4x299xf32>
    %185 = vector.extract_strided_slice %183 {offsets = [0, 1], sizes = [4, 299], strides = [1, 1]} : vector<4x320xf32> to vector<4x299xf32>
    %186 = arith.maximumf %184, %185 : vector<4x299xf32>
    %187 = vector.extract_strided_slice %183 {offsets = [0, 20], sizes = [4, 299], strides = [1, 1]} : vector<4x320xf32> to vector<4x299xf32>
    %188 = vector.extract_strided_slice %183 {offsets = [0, 21], sizes = [4, 299], strides = [1, 1]} : vector<4x320xf32> to vector<4x299xf32>
    %189 = arith.maximumf %187, %188 : vector<4x299xf32>
    %190 = arith.maximumf %186, %189 : vector<4x299xf32>
    %c0_57 = arith.constant 0 : index
    %c0_58 = arith.constant 0 : index
    %191 = vector.load %arg8[%c0_57, %c0_58] : memref<299x156xf32, #tpu.memory_space<vmem>>, vector<299x156xf32>
    %cst_59 = arith.constant dense<0.000000e+00> : vector<4x156xf32>
    %192 = tpu.matmul %190, %191, %cst_59 {dimension_numbers = #tpu.dot_dimension_numbers<[1], [0], [0], [1], [0, 0, 1, 1], [], []>} : vector<4x299xf32>, vector<299x156xf32>, vector<4x156xf32> -> vector<4x156xf32>
    %c0_60 = arith.constant 0 : index
    %c0_61 = arith.constant 0 : index
    %c0_62 = arith.constant 0 : index
    %193 = vector.load %arg3[%c0_60, %c0_61, %c0_62] : memref<25x8x4xf32, #tpu.memory_space<vmem>>, vector<1x8x4xf32>
    %194 = vector.shape_cast %193 : vector<1x8x4xf32> to vector<8x4xf32>
    %195 = vector.extract_strided_slice %192 {offsets = [0, 0], sizes = [4, 96], strides = [1, 1]} : vector<4x156xf32> to vector<4x96xf32>
    %cst_63 = arith.constant dense<0.000000e+00> : vector<8x96xf32>
    %196 = tpu.matmul %194, %195, %cst_63 {dimension_numbers = #tpu.dot_dimension_numbers<[1], [0], [0], [1], [0, 0, 1, 1], [], []>} : vector<8x4xf32>, vector<4x96xf32>, vector<8x96xf32> -> vector<8x96xf32>
    %c1_64 = arith.constant 1 : index
    %c0_65 = arith.constant 0 : index
    %c0_66 = arith.constant 0 : index
    %197 = vector.load %arg3[%c1_64, %c0_65, %c0_66] : memref<25x8x4xf32, #tpu.memory_space<vmem>>, vector<1x8x4xf32>
    %198 = vector.shape_cast %197 : vector<1x8x4xf32> to vector<8x4xf32>
    %199 = vector.extract_strided_slice %192 {offsets = [0, 1], sizes = [4, 96], strides = [1, 1]} : vector<4x156xf32> to vector<4x96xf32>
    %cst_67 = arith.constant dense<0.000000e+00> : vector<8x96xf32>
    %200 = tpu.matmul %198, %199, %cst_67 {dimension_numbers = #tpu.dot_dimension_numbers<[1], [0], [0], [1], [0, 0, 1, 1], [], []>} : vector<8x4xf32>, vector<4x96xf32>, vector<8x96xf32> -> vector<8x96xf32>
    %201 = arith.addf %196, %200 : vector<8x96xf32>
    %c2_68 = arith.constant 2 : index
    %c0_69 = arith.constant 0 : index
    %c0_70 = arith.constant 0 : index
    %202 = vector.load %arg3[%c2_68, %c0_69, %c0_70] : memref<25x8x4xf32, #tpu.memory_space<vmem>>, vector<1x8x4xf32>
    %203 = vector.shape_cast %202 : vector<1x8x4xf32> to vector<8x4xf32>
    %204 = vector.extract_strided_slice %192 {offsets = [0, 2], sizes = [4, 96], strides = [1, 1]} : vector<4x156xf32> to vector<4x96xf32>
    %cst_71 = arith.constant dense<0.000000e+00> : vector<8x96xf32>
    %205 = tpu.matmul %203, %204, %cst_71 {dimension_numbers = #tpu.dot_dimension_numbers<[1], [0], [0], [1], [0, 0, 1, 1], [], []>} : vector<8x4xf32>, vector<4x96xf32>, vector<8x96xf32> -> vector<8x96xf32>
    %206 = arith.addf %201, %205 : vector<8x96xf32>
    %c3_72 = arith.constant 3 : index
    %c0_73 = arith.constant 0 : index
    %c0_74 = arith.constant 0 : index
    %207 = vector.load %arg3[%c3_72, %c0_73, %c0_74] : memref<25x8x4xf32, #tpu.memory_space<vmem>>, vector<1x8x4xf32>
    %208 = vector.shape_cast %207 : vector<1x8x4xf32> to vector<8x4xf32>
    %209 = vector.extract_strided_slice %192 {offsets = [0, 3], sizes = [4, 96], strides = [1, 1]} : vector<4x156xf32> to vector<4x96xf32>
    %cst_75 = arith.constant dense<0.000000e+00> : vector<8x96xf32>
    %210 = tpu.matmul %208, %209, %cst_75 {dimension_numbers = #tpu.dot_dimension_numbers<[1], [0], [0], [1], [0, 0, 1, 1], [], []>} : vector<8x4xf32>, vector<4x96xf32>, vector<8x96xf32> -> vector<8x96xf32>
    %211 = arith.addf %206, %210 : vector<8x96xf32>
    %c4_76 = arith.constant 4 : index
    %c0_77 = arith.constant 0 : index
    %c0_78 = arith.constant 0 : index
    %212 = vector.load %arg3[%c4_76, %c0_77, %c0_78] : memref<25x8x4xf32, #tpu.memory_space<vmem>>, vector<1x8x4xf32>
    %213 = vector.shape_cast %212 : vector<1x8x4xf32> to vector<8x4xf32>
    %214 = vector.extract_strided_slice %192 {offsets = [0, 4], sizes = [4, 96], strides = [1, 1]} : vector<4x156xf32> to vector<4x96xf32>
    %cst_79 = arith.constant dense<0.000000e+00> : vector<8x96xf32>
    %215 = tpu.matmul %213, %214, %cst_79 {dimension_numbers = #tpu.dot_dimension_numbers<[1], [0], [0], [1], [0, 0, 1, 1], [], []>} : vector<8x4xf32>, vector<4x96xf32>, vector<8x96xf32> -> vector<8x96xf32>
    %216 = arith.addf %211, %215 : vector<8x96xf32>
    %c5_80 = arith.constant 5 : index
    %c0_81 = arith.constant 0 : index
    %c0_82 = arith.constant 0 : index
    %217 = vector.load %arg3[%c5_80, %c0_81, %c0_82] : memref<25x8x4xf32, #tpu.memory_space<vmem>>, vector<1x8x4xf32>
    %218 = vector.shape_cast %217 : vector<1x8x4xf32> to vector<8x4xf32>
    %219 = vector.extract_strided_slice %192 {offsets = [0, 12], sizes = [4, 96], strides = [1, 1]} : vector<4x156xf32> to vector<4x96xf32>
    %cst_83 = arith.constant dense<0.000000e+00> : vector<8x96xf32>
    %220 = tpu.matmul %218, %219, %cst_83 {dimension_numbers = #tpu.dot_dimension_numbers<[1], [0], [0], [1], [0, 0, 1, 1], [], []>} : vector<8x4xf32>, vector<4x96xf32>, vector<8x96xf32> -> vector<8x96xf32>
    %221 = arith.addf %216, %220 : vector<8x96xf32>
    %c6_84 = arith.constant 6 : index
    %c0_85 = arith.constant 0 : index
    %c0_86 = arith.constant 0 : index
    %222 = vector.load %arg3[%c6_84, %c0_85, %c0_86] : memref<25x8x4xf32, #tpu.memory_space<vmem>>, vector<1x8x4xf32>
    %223 = vector.shape_cast %222 : vector<1x8x4xf32> to vector<8x4xf32>
    %224 = vector.extract_strided_slice %192 {offsets = [0, 13], sizes = [4, 96], strides = [1, 1]} : vector<4x156xf32> to vector<4x96xf32>
    %cst_87 = arith.constant dense<0.000000e+00> : vector<8x96xf32>
    %225 = tpu.matmul %223, %224, %cst_87 {dimension_numbers = #tpu.dot_dimension_numbers<[1], [0], [0], [1], [0, 0, 1, 1], [], []>} : vector<8x4xf32>, vector<4x96xf32>, vector<8x96xf32> -> vector<8x96xf32>
    %226 = arith.addf %221, %225 : vector<8x96xf32>
    %c7_88 = arith.constant 7 : index
    %c0_89 = arith.constant 0 : index
    %c0_90 = arith.constant 0 : index
    %227 = vector.load %arg3[%c7_88, %c0_89, %c0_90] : memref<25x8x4xf32, #tpu.memory_space<vmem>>, vector<1x8x4xf32>
    %228 = vector.shape_cast %227 : vector<1x8x4xf32> to vector<8x4xf32>
    %229 = vector.extract_strided_slice %192 {offsets = [0, 14], sizes = [4, 96], strides = [1, 1]} : vector<4x156xf32> to vector<4x96xf32>
    %cst_91 = arith.constant dense<0.000000e+00> : vector<8x96xf32>
    %230 = tpu.matmul %228, %229, %cst_91 {dimension_numbers = #tpu.dot_dimension_numbers<[1], [0], [0], [1], [0, 0, 1, 1], [], []>} : vector<8x4xf32>, vector<4x96xf32>, vector<8x96xf32> -> vector<8x96xf32>
    %231 = arith.addf %226, %230 : vector<8x96xf32>
    %c8_92 = arith.constant 8 : index
    %c0_93 = arith.constant 0 : index
    %c0_94 = arith.constant 0 : index
    %232 = vector.load %arg3[%c8_92, %c0_93, %c0_94] : memref<25x8x4xf32, #tpu.memory_space<vmem>>, vector<1x8x4xf32>
    %233 = vector.shape_cast %232 : vector<1x8x4xf32> to vector<8x4xf32>
    %234 = vector.extract_strided_slice %192 {offsets = [0, 15], sizes = [4, 96], strides = [1, 1]} : vector<4x156xf32> to vector<4x96xf32>
    %cst_95 = arith.constant dense<0.000000e+00> : vector<8x96xf32>
    %235 = tpu.matmul %233, %234, %cst_95 {dimension_numbers = #tpu.dot_dimension_numbers<[1], [0], [0], [1], [0, 0, 1, 1], [], []>} : vector<8x4xf32>, vector<4x96xf32>, vector<8x96xf32> -> vector<8x96xf32>
    %236 = arith.addf %231, %235 : vector<8x96xf32>
    %c9_96 = arith.constant 9 : index
    %c0_97 = arith.constant 0 : index
    %c0_98 = arith.constant 0 : index
    %237 = vector.load %arg3[%c9_96, %c0_97, %c0_98] : memref<25x8x4xf32, #tpu.memory_space<vmem>>, vector<1x8x4xf32>
    %238 = vector.shape_cast %237 : vector<1x8x4xf32> to vector<8x4xf32>
    %239 = vector.extract_strided_slice %192 {offsets = [0, 16], sizes = [4, 96], strides = [1, 1]} : vector<4x156xf32> to vector<4x96xf32>
    %cst_99 = arith.constant dense<0.000000e+00> : vector<8x96xf32>
    %240 = tpu.matmul %238, %239, %cst_99 {dimension_numbers = #tpu.dot_dimension_numbers<[1], [0], [0], [1], [0, 0, 1, 1], [], []>} : vector<8x4xf32>, vector<4x96xf32>, vector<8x96xf32> -> vector<8x96xf32>
    %241 = arith.addf %236, %240 : vector<8x96xf32>
    %c10_100 = arith.constant 10 : index
    %c0_101 = arith.constant 0 : index
    %c0_102 = arith.constant 0 : index
    %242 = vector.load %arg3[%c10_100, %c0_101, %c0_102] : memref<25x8x4xf32, #tpu.memory_space<vmem>>, vector<1x8x4xf32>
    %243 = vector.shape_cast %242 : vector<1x8x4xf32> to vector<8x4xf32>
    %244 = vector.extract_strided_slice %192 {offsets = [0, 24], sizes = [4, 96], strides = [1, 1]} : vector<4x156xf32> to vector<4x96xf32>
    %cst_103 = arith.constant dense<0.000000e+00> : vector<8x96xf32>
    %245 = tpu.matmul %243, %244, %cst_103 {dimension_numbers = #tpu.dot_dimension_numbers<[1], [0], [0], [1], [0, 0, 1, 1], [], []>} : vector<8x4xf32>, vector<4x96xf32>, vector<8x96xf32> -> vector<8x96xf32>
    %246 = arith.addf %241, %245 : vector<8x96xf32>
    %c11_104 = arith.constant 11 : index
    %c0_105 = arith.constant 0 : index
    %c0_106 = arith.constant 0 : index
    %247 = vector.load %arg3[%c11_104, %c0_105, %c0_106] : memref<25x8x4xf32, #tpu.memory_space<vmem>>, vector<1x8x4xf32>
    %248 = vector.shape_cast %247 : vector<1x8x4xf32> to vector<8x4xf32>
    %249 = vector.extract_strided_slice %192 {offsets = [0, 25], sizes = [4, 96], strides = [1, 1]} : vector<4x156xf32> to vector<4x96xf32>
    %cst_107 = arith.constant dense<0.000000e+00> : vector<8x96xf32>
    %250 = tpu.matmul %248, %249, %cst_107 {dimension_numbers = #tpu.dot_dimension_numbers<[1], [0], [0], [1], [0, 0, 1, 1], [], []>} : vector<8x4xf32>, vector<4x96xf32>, vector<8x96xf32> -> vector<8x96xf32>
    %251 = arith.addf %246, %250 : vector<8x96xf32>
    %c12_108 = arith.constant 12 : index
    %c0_109 = arith.constant 0 : index
    %c0_110 = arith.constant 0 : index
    %252 = vector.load %arg3[%c12_108, %c0_109, %c0_110] : memref<25x8x4xf32, #tpu.memory_space<vmem>>, vector<1x8x4xf32>
    %253 = vector.shape_cast %252 : vector<1x8x4xf32> to vector<8x4xf32>
    %254 = vector.extract_strided_slice %192 {offsets = [0, 26], sizes = [4, 96], strides = [1, 1]} : vector<4x156xf32> to vector<4x96xf32>
    %cst_111 = arith.constant dense<0.000000e+00> : vector<8x96xf32>
    %255 = tpu.matmul %253, %254, %cst_111 {dimension_numbers = #tpu.dot_dimension_numbers<[1], [0], [0], [1], [0, 0, 1, 1], [], []>} : vector<8x4xf32>, vector<4x96xf32>, vector<8x96xf32> -> vector<8x96xf32>
    %256 = arith.addf %251, %255 : vector<8x96xf32>
    %c13_112 = arith.constant 13 : index
    %c0_113 = arith.constant 0 : index
    %c0_114 = arith.constant 0 : index
    %257 = vector.load %arg3[%c13_112, %c0_113, %c0_114] : memref<25x8x4xf32, #tpu.memory_space<vmem>>, vector<1x8x4xf32>
    %258 = vector.shape_cast %257 : vector<1x8x4xf32> to vector<8x4xf32>
    %259 = vector.extract_strided_slice %192 {offsets = [0, 27], sizes = [4, 96], strides = [1, 1]} : vector<4x156xf32> to vector<4x96xf32>
    %cst_115 = arith.constant dense<0.000000e+00> : vector<8x96xf32>
    %260 = tpu.matmul %258, %259, %cst_115 {dimension_numbers = #tpu.dot_dimension_numbers<[1], [0], [0], [1], [0, 0, 1, 1], [], []>} : vector<8x4xf32>, vector<4x96xf32>, vector<8x96xf32> -> vector<8x96xf32>
    %261 = arith.addf %256, %260 : vector<8x96xf32>
    %c14_116 = arith.constant 14 : index
    %c0_117 = arith.constant 0 : index
    %c0_118 = arith.constant 0 : index
    %262 = vector.load %arg3[%c14_116, %c0_117, %c0_118] : memref<25x8x4xf32, #tpu.memory_space<vmem>>, vector<1x8x4xf32>
    %263 = vector.shape_cast %262 : vector<1x8x4xf32> to vector<8x4xf32>
    %264 = vector.extract_strided_slice %192 {offsets = [0, 28], sizes = [4, 96], strides = [1, 1]} : vector<4x156xf32> to vector<4x96xf32>
    %cst_119 = arith.constant dense<0.000000e+00> : vector<8x96xf32>
    %265 = tpu.matmul %263, %264, %cst_119 {dimension_numbers = #tpu.dot_dimension_numbers<[1], [0], [0], [1], [0, 0, 1, 1], [], []>} : vector<8x4xf32>, vector<4x96xf32>, vector<8x96xf32> -> vector<8x96xf32>
    %266 = arith.addf %261, %265 : vector<8x96xf32>
    %c15_120 = arith.constant 15 : index
    %c0_121 = arith.constant 0 : index
    %c0_122 = arith.constant 0 : index
    %267 = vector.load %arg3[%c15_120, %c0_121, %c0_122] : memref<25x8x4xf32, #tpu.memory_space<vmem>>, vector<1x8x4xf32>
    %268 = vector.shape_cast %267 : vector<1x8x4xf32> to vector<8x4xf32>
    %269 = vector.extract_strided_slice %192 {offsets = [0, 36], sizes = [4, 96], strides = [1, 1]} : vector<4x156xf32> to vector<4x96xf32>
    %cst_123 = arith.constant dense<0.000000e+00> : vector<8x96xf32>
    %270 = tpu.matmul %268, %269, %cst_123 {dimension_numbers = #tpu.dot_dimension_numbers<[1], [0], [0], [1], [0, 0, 1, 1], [], []>} : vector<8x4xf32>, vector<4x96xf32>, vector<8x96xf32> -> vector<8x96xf32>
    %271 = arith.addf %266, %270 : vector<8x96xf32>
    %c16_124 = arith.constant 16 : index
    %c0_125 = arith.constant 0 : index
    %c0_126 = arith.constant 0 : index
    %272 = vector.load %arg3[%c16_124, %c0_125, %c0_126] : memref<25x8x4xf32, #tpu.memory_space<vmem>>, vector<1x8x4xf32>
    %273 = vector.shape_cast %272 : vector<1x8x4xf32> to vector<8x4xf32>
    %274 = vector.extract_strided_slice %192 {offsets = [0, 37], sizes = [4, 96], strides = [1, 1]} : vector<4x156xf32> to vector<4x96xf32>
    %cst_127 = arith.constant dense<0.000000e+00> : vector<8x96xf32>
    %275 = tpu.matmul %273, %274, %cst_127 {dimension_numbers = #tpu.dot_dimension_numbers<[1], [0], [0], [1], [0, 0, 1, 1], [], []>} : vector<8x4xf32>, vector<4x96xf32>, vector<8x96xf32> -> vector<8x96xf32>
    %276 = arith.addf %271, %275 : vector<8x96xf32>
    %c17_128 = arith.constant 17 : index
    %c0_129 = arith.constant 0 : index
    %c0_130 = arith.constant 0 : index
    %277 = vector.load %arg3[%c17_128, %c0_129, %c0_130] : memref<25x8x4xf32, #tpu.memory_space<vmem>>, vector<1x8x4xf32>
    %278 = vector.shape_cast %277 : vector<1x8x4xf32> to vector<8x4xf32>
    %279 = vector.extract_strided_slice %192 {offsets = [0, 38], sizes = [4, 96], strides = [1, 1]} : vector<4x156xf32> to vector<4x96xf32>
    %cst_131 = arith.constant dense<0.000000e+00> : vector<8x96xf32>
    %280 = tpu.matmul %278, %279, %cst_131 {dimension_numbers = #tpu.dot_dimension_numbers<[1], [0], [0], [1], [0, 0, 1, 1], [], []>} : vector<8x4xf32>, vector<4x96xf32>, vector<8x96xf32> -> vector<8x96xf32>
    %281 = arith.addf %276, %280 : vector<8x96xf32>
    %c18_132 = arith.constant 18 : index
    %c0_133 = arith.constant 0 : index
    %c0_134 = arith.constant 0 : index
    %282 = vector.load %arg3[%c18_132, %c0_133, %c0_134] : memref<25x8x4xf32, #tpu.memory_space<vmem>>, vector<1x8x4xf32>
    %283 = vector.shape_cast %282 : vector<1x8x4xf32> to vector<8x4xf32>
    %284 = vector.extract_strided_slice %192 {offsets = [0, 39], sizes = [4, 96], strides = [1, 1]} : vector<4x156xf32> to vector<4x96xf32>
    %cst_135 = arith.constant dense<0.000000e+00> : vector<8x96xf32>
    %285 = tpu.matmul %283, %284, %cst_135 {dimension_numbers = #tpu.dot_dimension_numbers<[1], [0], [0], [1], [0, 0, 1, 1], [], []>} : vector<8x4xf32>, vector<4x96xf32>, vector<8x96xf32> -> vector<8x96xf32>
    %286 = arith.addf %281, %285 : vector<8x96xf32>
    %c19_136 = arith.constant 19 : index
    %c0_137 = arith.constant 0 : index
    %c0_138 = arith.constant 0 : index
    %287 = vector.load %arg3[%c19_136, %c0_137, %c0_138] : memref<25x8x4xf32, #tpu.memory_space<vmem>>, vector<1x8x4xf32>
    %288 = vector.shape_cast %287 : vector<1x8x4xf32> to vector<8x4xf32>
    %289 = vector.extract_strided_slice %192 {offsets = [0, 40], sizes = [4, 96], strides = [1, 1]} : vector<4x156xf32> to vector<4x96xf32>
    %cst_139 = arith.constant dense<0.000000e+00> : vector<8x96xf32>
    %290 = tpu.matmul %288, %289, %cst_139 {dimension_numbers = #tpu.dot_dimension_numbers<[1], [0], [0], [1], [0, 0, 1, 1], [], []>} : vector<8x4xf32>, vector<4x96xf32>, vector<8x96xf32> -> vector<8x96xf32>
    %291 = arith.addf %286, %290 : vector<8x96xf32>
    %c20_140 = arith.constant 20 : index
    %c0_141 = arith.constant 0 : index
    %c0_142 = arith.constant 0 : index
    %292 = vector.load %arg3[%c20_140, %c0_141, %c0_142] : memref<25x8x4xf32, #tpu.memory_space<vmem>>, vector<1x8x4xf32>
    %293 = vector.shape_cast %292 : vector<1x8x4xf32> to vector<8x4xf32>
    %294 = vector.extract_strided_slice %192 {offsets = [0, 48], sizes = [4, 96], strides = [1, 1]} : vector<4x156xf32> to vector<4x96xf32>
    %cst_143 = arith.constant dense<0.000000e+00> : vector<8x96xf32>
    %295 = tpu.matmul %293, %294, %cst_143 {dimension_numbers = #tpu.dot_dimension_numbers<[1], [0], [0], [1], [0, 0, 1, 1], [], []>} : vector<8x4xf32>, vector<4x96xf32>, vector<8x96xf32> -> vector<8x96xf32>
    %296 = arith.addf %291, %295 : vector<8x96xf32>
    %c21_144 = arith.constant 21 : index
    %c0_145 = arith.constant 0 : index
    %c0_146 = arith.constant 0 : index
    %297 = vector.load %arg3[%c21_144, %c0_145, %c0_146] : memref<25x8x4xf32, #tpu.memory_space<vmem>>, vector<1x8x4xf32>
    %298 = vector.shape_cast %297 : vector<1x8x4xf32> to vector<8x4xf32>
    %299 = vector.extract_strided_slice %192 {offsets = [0, 49], sizes = [4, 96], strides = [1, 1]} : vector<4x156xf32> to vector<4x96xf32>
    %cst_147 = arith.constant dense<0.000000e+00> : vector<8x96xf32>
    %300 = tpu.matmul %298, %299, %cst_147 {dimension_numbers = #tpu.dot_dimension_numbers<[1], [0], [0], [1], [0, 0, 1, 1], [], []>} : vector<8x4xf32>, vector<4x96xf32>, vector<8x96xf32> -> vector<8x96xf32>
    %301 = arith.addf %296, %300 : vector<8x96xf32>
    %c22_148 = arith.constant 22 : index
    %c0_149 = arith.constant 0 : index
    %c0_150 = arith.constant 0 : index
    %302 = vector.load %arg3[%c22_148, %c0_149, %c0_150] : memref<25x8x4xf32, #tpu.memory_space<vmem>>, vector<1x8x4xf32>
    %303 = vector.shape_cast %302 : vector<1x8x4xf32> to vector<8x4xf32>
    %304 = vector.extract_strided_slice %192 {offsets = [0, 50], sizes = [4, 96], strides = [1, 1]} : vector<4x156xf32> to vector<4x96xf32>
    %cst_151 = arith.constant dense<0.000000e+00> : vector<8x96xf32>
    %305 = tpu.matmul %303, %304, %cst_151 {dimension_numbers = #tpu.dot_dimension_numbers<[1], [0], [0], [1], [0, 0, 1, 1], [], []>} : vector<8x4xf32>, vector<4x96xf32>, vector<8x96xf32> -> vector<8x96xf32>
    %306 = arith.addf %301, %305 : vector<8x96xf32>
    %c23_152 = arith.constant 23 : index
    %c0_153 = arith.constant 0 : index
    %c0_154 = arith.constant 0 : index
    %307 = vector.load %arg3[%c23_152, %c0_153, %c0_154] : memref<25x8x4xf32, #tpu.memory_space<vmem>>, vector<1x8x4xf32>
    %308 = vector.shape_cast %307 : vector<1x8x4xf32> to vector<8x4xf32>
    %309 = vector.extract_strided_slice %192 {offsets = [0, 51], sizes = [4, 96], strides = [1, 1]} : vector<4x156xf32> to vector<4x96xf32>
    %cst_155 = arith.constant dense<0.000000e+00> : vector<8x96xf32>
    %310 = tpu.matmul %308, %309, %cst_155 {dimension_numbers = #tpu.dot_dimension_numbers<[1], [0], [0], [1], [0, 0, 1, 1], [], []>} : vector<8x4xf32>, vector<4x96xf32>, vector<8x96xf32> -> vector<8x96xf32>
    %311 = arith.addf %306, %310 : vector<8x96xf32>
    %c24_156 = arith.constant 24 : index
    %c0_157 = arith.constant 0 : index
    %c0_158 = arith.constant 0 : index
    %312 = vector.load %arg3[%c24_156, %c0_157, %c0_158] : memref<25x8x4xf32, #tpu.memory_space<vmem>>, vector<1x8x4xf32>
    %313 = vector.shape_cast %312 : vector<1x8x4xf32> to vector<8x4xf32>
    %314 = vector.extract_strided_slice %192 {offsets = [0, 52], sizes = [4, 96], strides = [1, 1]} : vector<4x156xf32> to vector<4x96xf32>
    %cst_159 = arith.constant dense<0.000000e+00> : vector<8x96xf32>
    %315 = tpu.matmul %313, %314, %cst_159 {dimension_numbers = #tpu.dot_dimension_numbers<[1], [0], [0], [1], [0, 0, 1, 1], [], []>} : vector<8x4xf32>, vector<4x96xf32>, vector<8x96xf32> -> vector<8x96xf32>
    %316 = arith.addf %311, %315 : vector<8x96xf32>
    %c0_160 = arith.constant 0 : index
    %c0_161 = arith.constant 0 : index
    %317 = vector.load %arg6[%c0_160, %c0_161] : memref<8x1xf32, #tpu.memory_space<vmem>>, vector<8x1xf32>
    %318 = vector.broadcast %317 : vector<8x1xf32> to vector<8x96xf32>
    %319 = arith.mulf %316, %318 : vector<8x96xf32>
    %c0_162 = arith.constant 0 : index
    %c0_163 = arith.constant 0 : index
    %320 = vector.load %arg7[%c0_162, %c0_163] : memref<8x1xf32, #tpu.memory_space<vmem>>, vector<8x1xf32>
    %321 = vector.broadcast %320 : vector<8x1xf32> to vector<8x96xf32>
    %322 = arith.addf %319, %321 : vector<8x96xf32>
    %cst_164 = arith.constant 0.000000e+00 : f32
    %323 = vector.broadcast %cst_164 : f32 to vector<8x96xf32>
    %324 = arith.maximumf %322, %323 : vector<8x96xf32>
    %325 = vector.extract_strided_slice %324 {offsets = [0, 0], sizes = [8, 83], strides = [1, 1]} : vector<8x96xf32> to vector<8x83xf32>
    %326 = vector.extract_strided_slice %324 {offsets = [0, 1], sizes = [8, 83], strides = [1, 1]} : vector<8x96xf32> to vector<8x83xf32>
    %327 = arith.maximumf %325, %326 : vector<8x83xf32>
    %328 = vector.extract_strided_slice %324 {offsets = [0, 12], sizes = [8, 83], strides = [1, 1]} : vector<8x96xf32> to vector<8x83xf32>
    %329 = vector.extract_strided_slice %324 {offsets = [0, 13], sizes = [8, 83], strides = [1, 1]} : vector<8x96xf32> to vector<8x83xf32>
    %330 = arith.maximumf %328, %329 : vector<8x83xf32>
    %331 = arith.maximumf %327, %330 : vector<8x83xf32>
    %c0_165 = arith.constant 0 : index
    %c0_166 = arith.constant 0 : index
    %332 = vector.load %arg9[%c0_165, %c0_166] : memref<83x16xf32, #tpu.memory_space<vmem>>, vector<83x16xf32>
    %cst_167 = arith.constant dense<0.000000e+00> : vector<8x16xf32>
    %333 = tpu.matmul %331, %332, %cst_167 {dimension_numbers = #tpu.dot_dimension_numbers<[1], [0], [0], [1], [0, 0, 1, 1], [], []>} : vector<8x83xf32>, vector<83x16xf32>, vector<8x16xf32> -> vector<8x16xf32>
    %c0_168 = arith.constant 0 : index
    %c0_169 = arith.constant 0 : index
    %c0_170 = arith.constant 0 : index
    %334 = vector.load %arg10[%c0_168, %c0_169, %c0_170] : memref<1x8x16xf32, #tpu.memory_space<vmem>>, vector<1x8x16xf32>
    %335 = vector.shape_cast %334 : vector<1x8x16xf32> to vector<8x16xf32>
    %336 = vector.shape_cast %333 : vector<8x16xf32> to vector<1x8x16xf32>
    tpu.vector_store %arg10[%c0_168, %c0_169, %c0_170], %336 {strides = array<i32>} : memref<1x8x16xf32, #tpu.memory_space<vmem>>, vector<1x8x16xf32>,
    return
  }
  func.func @transform_0(%arg0: i32) -> (i32, i32, i32) {
    %c0_i32 = arith.constant 0 : i32
    %c0_i32_0 = arith.constant 0 : i32
    %c0_i32_1 = arith.constant 0 : i32
    return %arg0, %c0_i32, %c0_i32_0 : i32, i32, i32
  }
  func.func @transform_1(%arg0: i32) -> (i32, i32, i32) {
    %c0_i32 = arith.constant 0 : i32
    %c0_i32_0 = arith.constant 0 : i32
    %c0_i32_1 = arith.constant 0 : i32
    %c0_i32_2 = arith.constant 0 : i32
    return %c0_i32, %c0_i32_0, %c0_i32_1 : i32, i32, i32
  }
  func.func @transform_2(%arg0: i32) -> (i32, i32, i32) {
    %c0_i32 = arith.constant 0 : i32
    %c0_i32_0 = arith.constant 0 : i32
    %c0_i32_1 = arith.constant 0 : i32
    %c0_i32_2 = arith.constant 0 : i32
    return %c0_i32, %c0_i32_0, %c0_i32_1 : i32, i32, i32
  }
  func.func @transform_3(%arg0: i32) -> (i32, i32) {
    %c0_i32 = arith.constant 0 : i32
    %c0_i32_0 = arith.constant 0 : i32
    %c0_i32_1 = arith.constant 0 : i32
    return %c0_i32, %c0_i32_0 : i32, i32
  }
  func.func @transform_4(%arg0: i32) -> (i32, i32) {
    %c0_i32 = arith.constant 0 : i32
    %c0_i32_0 = arith.constant 0 : i32
    %c0_i32_1 = arith.constant 0 : i32
    return %c0_i32, %c0_i32_0 : i32, i32
  }
  func.func @transform_5(%arg0: i32) -> (i32, i32) {
    %c0_i32 = arith.constant 0 : i32
    %c0_i32_0 = arith.constant 0 : i32
    %c0_i32_1 = arith.constant 0 : i32
    return %c0_i32, %c0_i32_0 : i32, i32
  }
  func.func @transform_6(%arg0: i32) -> (i32, i32) {
    %c0_i32 = arith.constant 0 : i32
    %c0_i32_0 = arith.constant 0 : i32
    %c0_i32_1 = arith.constant 0 : i32
    return %c0_i32, %c0_i32_0 : i32, i32
  }
  func.func @transform_7(%arg0: i32) -> (i32, i32) {
    %c0_i32 = arith.constant 0 : i32
    %c0_i32_0 = arith.constant 0 : i32
    %c0_i32_1 = arith.constant 0 : i32
    return %c0_i32, %c0_i32_0 : i32, i32
  }
  func.func @transform_8(%arg0: i32) -> (i32, i32) {
    %c0_i32 = arith.constant 0 : i32
    %c0_i32_0 = arith.constant 0 : i32
    %c0_i32_1 = arith.constant 0 : i32
    return %c0_i32, %c0_i32_0 : i32, i32
  }
  func.func @transform_9(%arg0: i32) -> (i32, i32, i32) {
    %c0_i32 = arith.constant 0 : i32
    %c0_i32_0 = arith.constant 0 : i32
    %c0_i32_1 = arith.constant 0 : i32
    return %arg0, %c0_i32, %c0_i32_0 : i32, i32, i32
  }
}

</mosaic_0001>

<llo_original>
// kernel: cnn_forward.1
$region0: #{cnn_forward.1}
  #allocation0 [shape = 'u32[]', space=smem, size = 0x4, offset = 0x4, fixed_abs, tag = 'smem constant byte address 0x4 - core index']
  #allocation1 [shape = 'u32[144,128]{1,0:T(1,128)}', space=vmem, size = 0x12000, scoped, tag = 'internal scratch']
  %s0 = inlined_call_operand.vmem [shape: f32[2,1,420], index: 0, kind: input, shape index: {}]
  %s1 = inlined_call_operand.vmem [shape: f32[25,4,1], index: 1, kind: input, shape index: {}]
  %s2 = inlined_call_operand.vmem [shape: f32[25,8,4], index: 2, kind: input, shape index: {}]
  %s3 = inlined_call_operand.vmem [shape: f32[4,1], index: 3, kind: input, shape index: {}]
  %s4 = inlined_call_operand.vmem [shape: f32[4,1], index: 4, kind: input, shape index: {}]
  %s5 = inlined_call_operand.vmem [shape: f32[8,1], index: 5, kind: input, shape index: {}]
  %s6 = inlined_call_operand.vmem [shape: f32[8,1], index: 6, kind: input, shape index: {}]
  %s7 = inlined_call_operand.vmem [shape: f32[299,156], index: 7, kind: input, shape index: {}]
  %s8 = inlined_call_operand.vmem [shape: f32[83,16], index: 8, kind: input, shape index: {}]
  %s9 = inlined_call_operand.vmem [shape: f32[2,8,16], index: 9, kind: output, shape index: {}]
  %s10 = sld [smem:[#allocation0]]
  $region69: #{cnn_forward.1} parent=0
    _
  %s12 = ssub.s32 1, %s10
  %s13 = scalar_select 0, %s12, %s10
  loop: start=0, step=1, limit=4
  $region2: #{cnn_forward.1} parent=0 // loop_pre_header
    _
  $region3: #{cnn_forward.1} parent=0 // loop_header
    %s15 = sphi 0, %s19
    %p16 = scmp.ge.s32.totalorder %s15, 4
    %s25 = sphi 0, %s27
    %s28 = sphi 0, %s25
    %s29 = sphi 0, %s28
    %s45 = sphi 0, %s29
    %s49 = sphi 0, %s49
    %s51 = sphi 0, %s49
    %s52 = sphi 0, %s51
    %s66 = sphi 0, %s52
    %s70 = sphi 0, %s70
    %s72 = sphi 0, %s70
    %s73 = sphi 0, %s72
    %s87 = sphi 0, %s73
    %s91 = sphi 0, %s91
    %s93 = sphi 0, %s91
    %s94 = sphi 0, %s93
    %s108 = sphi 0, %s94
    %s112 = sphi 0, %s112
    %s114 = sphi 0, %s112
    %s115 = sphi 0, %s114
    %s129 = sphi 0, %s115
    %s133 = sphi 0, %s133
    %s135 = sphi 0, %s133
    %s136 = sphi 0, %s135
    %s150 = sphi 0, %s136
    %s154 = sphi 0, %s154
    %s156 = sphi 0, %s154
    %s157 = sphi 0, %s156
    %s171 = sphi 0, %s157
    %s175 = sphi 0, %s175
    %s177 = sphi 0, %s175
    %s178 = sphi 0, %s177
    %s192 = sphi 0, %s178
    %s196 = sphi 0, %s196
    %s198 = sphi 0, %s196
    %s199 = sphi 0, %s198
    %s213 = sphi 0, %s199
    %s219 = sphi 0, %s221
    %s222 = sphi 0, %s219
    %s223 = sphi 0, %s222
    %s239 = sphi 0, %s223
  $region4: #{cnn_forward.1} parent=0 // loop_header_branch
    %18 = sbr.rel (%p16) target = $region8
  $region5: #{cnn_forward.1} parent=0 // loop_body
    %s20 = ssub.s32 %s15, 1
    %s21 = ssub.s32 %s15, 2
    %s22 = sadd.s32 %s15, 1
    %s23 = ssub.s32 %s15, %s22
    %p24 = scmp.eq.s32.totalorder %s23, 0
    %s26 = sadd.s32 %s25, 1
    %s27 = scalar_select %p24, %s25, %s26
    %p30 = pneg %p24
    %p31 = scmp.eq.s32.totalorder %s15, 1
    %p32 = por %p30, %p31
    %p33 = scmp.ne.s32.totalorder %s25, %s28
    %p34 = scmp.eq.s32.totalorder %s15, 0
    %p35 = por %p33, %p34
    %p36 = scmp.ne.s32.totalorder %s25, %s28
    %p37 = scmp.eq.s32.totalorder %s20, 1
    %p38 = por %p36, %p37
    %p39 = scmp.ne.s32.totalorder %s28, %s29
    %p40 = scmp.eq.s32.totalorder %s20, 0
    %p41 = por %p39, %p40
    %p42 = scmp.ne.s32.totalorder %s28, %s29
    %p43 = scmp.eq.s32.totalorder %s21, 1
    %p44 = por %p42, %p43
    %p46 = scmp.ne.s32.totalorder %s29, %s45
    %p47 = scmp.eq.s32.totalorder %s21, 0
    %p48 = por %p46, %p47
    %s50 = sadd.s32 %s49, 1
    %p53 = scmp.eq.s32.totalorder %s15, 1
    %p54 = scmp.ne.s32.totalorder %s49, %s51
    %p55 = scmp.eq.s32.totalorder %s15, 0
    %p56 = por %p54, %p55
    %p57 = scmp.ne.s32.totalorder %s49, %s51
    %p58 = scmp.eq.s32.totalorder %s20, 1
    %p59 = por %p57, %p58
    %p60 = scmp.ne.s32.totalorder %s51, %s52
    %p61 = scmp.eq.s32.totalorder %s20, 0
    %p62 = por %p60, %p61
    %p63 = scmp.ne.s32.totalorder %s51, %s52
    %p64 = scmp.eq.s32.totalorder %s21, 1
    %p65 = por %p63, %p64
    %p67 = scmp.ne.s32.totalorder %s52, %s66
    %p68 = scmp.eq.s32.totalorder %s21, 0
    %p69 = por %p67, %p68
    %s71 = sadd.s32 %s70, 1
    %p74 = scmp.eq.s32.totalorder %s15, 1
    %p75 = scmp.ne.s32.totalorder %s70, %s72
    %p76 = scmp.eq.s32.totalorder %s15, 0
    %p77 = por %p75, %p76
    %p78 = scmp.ne.s32.totalorder %s70, %s72
    %p79 = scmp.eq.s32.totalorder %s20, 1
    %p80 = por %p78, %p79
    %p81 = scmp.ne.s32.totalorder %s72, %s73
    %p82 = scmp.eq.s32.totalorder %s20, 0
    %p83 = por %p81, %p82
    %p84 = scmp.ne.s32.totalorder %s72, %s73
    %p85 = scmp.eq.s32.totalorder %s21, 1
    %p86 = por %p84, %p85
    %p88 = scmp.ne.s32.totalorder %s73, %s87
    %p89 = scmp.eq.s32.totalorder %s21, 0
    %p90 = por %p88, %p89
    %s92 = sadd.s32 %s91, 1
    %p95 = scmp.eq.s32.totalorder %s15, 1
    %p96 = scmp.ne.s32.totalorder %s91, %s93
    %p97 = scmp.eq.s32.totalorder %s15, 0
    %p98 = por %p96, %p97
    %p99 = scmp.ne.s32.totalorder %s91, %s93
    %p100 = scmp.eq.s32.totalorder %s20, 1
    %p101 = por %p99, %p100
    %p102 = scmp.ne.s32.totalorder %s93, %s94
    %p103 = scmp.eq.s32.totalorder %s20, 0
    %p104 = por %p102, %p103
    %p105 = scmp.ne.s32.totalorder %s93, %s94
    %p106 = scmp.eq.s32.totalorder %s21, 1
    %p107 = por %p105, %p106
    %p109 = scmp.ne.s32.totalorder %s94, %s108
    %p110 = scmp.eq.s32.totalorder %s21, 0
    %p111 = por %p109, %p110
    %s113 = sadd.s32 %s112, 1
    %p116 = scmp.eq.s32.totalorder %s15, 1
    %p117 = scmp.ne.s32.totalorder %s112, %s114
    %p118 = scmp.eq.s32.totalorder %s15, 0
    %p119 = por %p117, %p118
    %p120 = scmp.ne.s32.totalorder %s112, %s114
    %p121 = scmp.eq.s32.totalorder %s20, 1
    %p122 = por %p120, %p121
    %p123 = scmp.ne.s32.totalorder %s114, %s115
    %p124 = scmp.eq.s32.totalorder %s20, 0
    %p125 = por %p123, %p124
    %p126 = scmp.ne.s32.totalorder %s114, %s115
    %p127 = scmp.eq.s32.totalorder %s21, 1
    %p128 = por %p126, %p127
    %p130 = scmp.ne.s32.totalorder %s115, %s129
    %p131 = scmp.eq.s32.totalorder %s21, 0
    %p132 = por %p130, %p131
    %s134 = sadd.s32 %s133, 1
    %p137 = scmp.eq.s32.totalorder %s15, 1
    %p138 = scmp.ne.s32.totalorder %s133, %s135
    %p139 = scmp.eq.s32.totalorder %s15, 0
    %p140 = por %p138, %p139
    %p141 = scmp.ne.s32.totalorder %s133, %s135
    %p142 = scmp.eq.s32.totalorder %s20, 1
    %p143 = por %p141, %p142
    %p144 = scmp.ne.s32.totalorder %s135, %s136
    %p145 = scmp.eq.s32.totalorder %s20, 0
    %p146 = por %p144, %p145
    %p147 = scmp.ne.s32.totalorder %s135, %s136
    %p148 = scmp.eq.s32.totalorder %s21, 1
    %p149 = por %p147, %p148
    %p151 = scmp.ne.s32.totalorder %s136, %s150
    %p152 = scmp.eq.s32.totalorder %s21, 0
    %p153 = por %p151, %p152
    %s155 = sadd.s32 %s154, 1
    %p158 = scmp.eq.s32.totalorder %s15, 1
    %p159 = scmp.ne.s32.totalorder %s154, %s156
    %p160 = scmp.eq.s32.totalorder %s15, 0
    %p161 = por %p159, %p160
    %p162 = scmp.ne.s32.totalorder %s154, %s156
    %p163 = scmp.eq.s32.totalorder %s20, 1
    %p164 = por %p162, %p163
    %p165 = scmp.ne.s32.totalorder %s156, %s157
    %p166 = scmp.eq.s32.totalorder %s20, 0
    %p167 = por %p165, %p166
    %p168 = scmp.ne.s32.totalorder %s156, %s157
    %p169 = scmp.eq.s32.totalorder %s21, 1
    %p170 = por %p168, %p169
    %p172 = scmp.ne.s32.totalorder %s157, %s171
    %p173 = scmp.eq.s32.totalorder %s21, 0
    %p174 = por %p172, %p173
    %s176 = sadd.s32 %s175, 1
    %p179 = scmp.eq.s32.totalorder %s15, 1
    %p180 = scmp.ne.s32.totalorder %s175, %s177
    %p181 = scmp.eq.s32.totalorder %s15, 0
    %p182 = por %p180, %p181
    %p183 = scmp.ne.s32.totalorder %s175, %s177
    %p184 = scmp.eq.s32.totalorder %s20, 1
    %p185 = por %p183, %p184
    %p186 = scmp.ne.s32.totalorder %s177, %s178
    %p187 = scmp.eq.s32.totalorder %s20, 0
    %p188 = por %p186, %p187
    %p189 = scmp.ne.s32.totalorder %s177, %s178
    %p190 = scmp.eq.s32.totalorder %s21, 1
    %p191 = por %p189, %p190
    %p193 = scmp.ne.s32.totalorder %s178, %s192
    %p194 = scmp.eq.s32.totalorder %s21, 0
    %p195 = por %p193, %p194
    %s197 = sadd.s32 %s196, 1
    %p200 = scmp.eq.s32.totalorder %s15, 1
    %p201 = scmp.ne.s32.totalorder %s196, %s198
    %p202 = scmp.eq.s32.totalorder %s15, 0
    %p203 = por %p201, %p202
    %p204 = scmp.ne.s32.totalorder %s196, %s198
    %p205 = scmp.eq.s32.totalorder %s20, 1
    %p206 = por %p204, %p205
    %p207 = scmp.ne.s32.totalorder %s198, %s199
    %p208 = scmp.eq.s32.totalorder %s20, 0
    %p209 = por %p207, %p208
    %p210 = scmp.ne.s32.totalorder %s198, %s199
    %p211 = scmp.eq.s32.totalorder %s21, 1
    %p212 = por %p210, %p211
    %p214 = scmp.ne.s32.totalorder %s199, %s213
    %p215 = scmp.eq.s32.totalorder %s21, 0
    %p216 = por %p214, %p215
    %s217 = ssub.s32 %s15, %s22
    %p218 = scmp.eq.s32.totalorder %s217, 0
    %s220 = sadd.s32 %s219, 1
    %s221 = scalar_select %p218, %s219, %s220
    %p224 = pneg %p218
    %p225 = scmp.eq.s32.totalorder %s15, 1
    %p226 = por %p224, %p225
    %p227 = scmp.ne.s32.totalorder %s219, %s222
    %p228 = scmp.eq.s32.totalorder %s15, 0
    %p229 = por %p227, %p228
    %p230 = scmp.ne.s32.totalorder %s219, %s222
    %p231 = scmp.eq.s32.totalorder %s20, 1
    %p232 = por %p230, %p231
    %p233 = scmp.ne.s32.totalorder %s222, %s223
    %p234 = scmp.eq.s32.totalorder %s20, 0
    %p235 = por %p233, %p234
    %p236 = scmp.ne.s32.totalorder %s222, %s223
    %p237 = scmp.eq.s32.totalorder %s21, 1
    %p238 = por %p236, %p237
    %p240 = scmp.ne.s32.totalorder %s223, %s239
    %p241 = scmp.eq.s32.totalorder %s21, 0
    %p242 = por %p240, %p241
    %p243 = scmp.le.s32.totalorder 1, %s15
    %p244 = scmp.lt.s32.totalorder %s15, 3
    %p245 = pnand %p243, %p244
    %p246 = pneg %p245
    // Predicated region
    $region9: #{cnn_forward.1} parent=5 // pred_check
      _
    $region10: #{cnn_forward.1} parent=5 // pred_check_branch
      %248 = sbr.rel (%p245) target = $region12
    $region11: #{cnn_forward.1} parent=5 // pred_region
      %s249 = ssub.s32 %s15, 1
      // Predicated region
      $region13: #{cnn_forward.1} parent=11 // pred_check
        %p250 = pneg %p62
      $region14: #{cnn_forward.1} parent=11 // pred_check_branch
        %252 = sbr.rel (%p250) target = $region16
      $region15: #{cnn_forward.1} parent=11 // pred_region
        _
      $region16: #{cnn_forward.1} parent=11 // pred_fallthru
        _
      // Predicated region
      $region17: #{cnn_forward.1} parent=11 // pred_check
        %p253 = pneg %p83
      $region18: #{cnn_forward.1} parent=11 // pred_check_branch
        %255 = sbr.rel (%p253) target = $region20
      $region19: #{cnn_forward.1} parent=11 // pred_region
        _
      $region20: #{cnn_forward.1} parent=11 // pred_fallthru
        _
      // Predicated region
      $region21: #{cnn_forward.1} parent=11 // pred_check
        %p256 = pneg %p104
      $region22: #{cnn_forward.1} parent=11 // pred_check_branch
        %258 = sbr.rel (%p256) target = $region24
      $region23: #{cnn_forward.1} parent=11 // pred_region
        _
      $region24: #{cnn_forward.1} parent=11 // pred_fallthru
        _
      // Predicated region
      $region25: #{cnn_forward.1} parent=11 // pred_check
        %p259 = pneg %p125
      $region26: #{cnn_forward.1} parent=11 // pred_check_branch
        %261 = sbr.rel (%p259) target = $region28
      $region27: #{cnn_forward.1} parent=11 // pred_region
        _
      $region28: #{cnn_forward.1} parent=11 // pred_fallthru
        _
      // Predicated region
      $region29: #{cnn_forward.1} parent=11 // pred_check
        %p262 = pneg %p146
      $region30: #{cnn_forward.1} parent=11 // pred_check_branch
        %264 = sbr.rel (%p262) target = $region32
      $region31: #{cnn_forward.1} parent=11 // pred_region
        _
      $region32: #{cnn_forward.1} parent=11 // pred_fallthru
        _
      // Predicated region
      $region33: #{cnn_forward.1} parent=11 // pred_check
        %p265 = pneg %p167
      $region34: #{cnn_forward.1} parent=11 // pred_check_branch
        %267 = sbr.rel (%p265) target = $region36
      $region35: #{cnn_forward.1} parent=11 // pred_region
        _
      $region36: #{cnn_forward.1} parent=11 // pred_fallthru
        _
      // Predicated region
      $region37: #{cnn_forward.1} parent=11 // pred_check
        %p268 = pneg %p188
      $region38: #{cnn_forward.1} parent=11 // pred_check_branch
        %270 = sbr.rel (%p268) target = $region40
      $region39: #{cnn_forward.1} parent=11 // pred_region
        _
      $region40: #{cnn_forward.1} parent=11 // pred_fallthru
        _
      // Predicated region
      $region41: #{cnn_forward.1} parent=11 // pred_check
        %p271 = pneg %p209
      $region42: #{cnn_forward.1} parent=11 // pred_check_branch
        %273 = sbr.rel (%p271) target = $region44
      $region43: #{cnn_forward.1} parent=11 // pred_region
        _
      $region44: #{cnn_forward.1} parent=11 // pred_fallthru
        _
    $region12: #{cnn_forward.1} parent=5 // pred_fallthru
      _
    %p274 = scmp.lt.s32.totalorder %s15, 2
    // Predicated region
    $region45: #{cnn_forward.1} parent=5 // pred_check
      %p275 = pneg %p274
    $region46: #{cnn_forward.1} parent=5 // pred_check_branch
      %277 = sbr.rel (%p275) target = $region48
    $region47: #{cnn_forward.1} parent=5 // pred_region
      // Predicated region
      $region49: #{cnn_forward.1} parent=47 // pred_check
        %p278 = pneg %p35
      $region50: #{cnn_forward.1} parent=47 // pred_check_branch
        %280 = sbr.rel (%p278) target = $region52
      $region51: #{cnn_forward.1} parent=47 // pred_region
        %p281 = scmp.lt.s32.totalorder %s15, 1
        %s282 = scalar_select %p281, %s15, 1
        %s283 = smul.addr %s282, 4
        %s284 = scalar_lea.vmem %s0, %s283
      $region52: #{cnn_forward.1} parent=47 // pred_fallthru
        _
    $region48: #{cnn_forward.1} parent=5 // pred_fallthru
      _
    %p285 = scmp.le.s32.totalorder 1, %s15
    %p286 = scmp.lt.s32.totalorder %s15, 3
    %p287 = pnand %p285, %p286
    %p288 = pneg %p287
    // Predicated region
    $region53: #{cnn_forward.1} parent=5 // pred_check
      _
    $region54: #{cnn_forward.1} parent=5 // pred_check_branch
      %290 = sbr.rel (%p287) target = $region56
    $region55: #{cnn_forward.1} parent=5 // pred_region
      %s291 = ssub.s32 %s15, 1
      %p292 = scmp.lt.s32.totalorder %s20, 1
      %s293 = scalar_select %p292, %s20, 1
      %s294 = smul.addr %s293, 4
      %s295 = scalar_lea.vmem %s0, %s294
      %p296 = pneg %p41
      %p297 = pneg %p38
      %p298 = pneg %p62
      %p299 = pneg %p59
      %p300 = pneg %p83
      %p301 = pneg %p80
      %p302 = pneg %p104
      %p303 = pneg %p101
      %p304 = pneg %p125
      %p305 = pneg %p122
      %p306 = pneg %p146
      %p307 = pneg %p143
      %p308 = pneg %p167
      %p309 = pneg %p164
      %p310 = pneg %p188
      %p311 = pneg %p185
      %p312 = pneg %p209
      %p313 = pneg %p206
      %p314 = pneg %p235
      %p315 = pneg %p232
      %p316 = scmp.lt.s32.totalorder %s20, 1
      %s317 = scalar_select %p316, %s20, 1
      %s318 = smul.addr %s317, 8
      %s319 = scalar_lea.vmem %s9, %s318
      %p320 = scmp.lt.s32.totalorder %s20, 1
      %s321 = scalar_select %p320, %s20, 1
      %s322 = smul.addr %s321, 4
      %s323 = scalar_lea.vmem %s0, %s322
      %p324 = scmp.lt.s32.totalorder %s20, 1
      %s325 = scalar_select %p324, %s20, 1
      %s326 = smul.addr %s325, 8
      %s327 = scalar_lea.vmem %s9, %s326
      %v328 = vld [vmem:[%s323] sm:$0xf]
      %v329 = vld [vmem:[%s1] sm:$0xf]
      %331 = vset.pattern.permute.xlu0 0
      %332 = vperm.xlu0 %331, %v329
      %v333 = vpop.permute.xlu0 %332
      %v336 = vlaneseq
      %v337 = vshrl.u32 %v336, 7
      %v338 = vsub.s32 0, %v337
      %v339 = vrot.slane %v328, %v338
      %v340 = vlaneseq
      %v341 = vshrl.u32 %v340, 7
      %v342 = vsub.s32 1, %v341
      %v343 = vrot.slane %v328, %v342
      %v344 = vlaneseq
      %v345 = vshrl.u32 %v344, 7
      %v346 = vsub.s32 2, %v345
      %v347 = vrot.slane %v328, %v346
      %v351 = vmul.f32 %v333, %v339
      %v352 = vmul.f32 %v333, %v343
      %v353 = vmul.f32 %v333, %v347
      %s354 = scalar_lea.vmem %s1, 4
      %v355 = vld [vmem:[%s354] sm:$0xf]
      %357 = vset.pattern.permute.xlu0 0
      %358 = vperm.xlu0 %357, %v355
      %v359 = vpop.permute.xlu0 %358
      %v361 = vmul.f32 %v359, %v339
      %v362 = vmul.f32 %v359, %v343
      %v363 = vmul.f32 %v359, %v347
      %367 = vrot.lane.b32.xlu0 %v361, 127
      %v368 = vpop.permute.xlu0 %367
      %369 = vrot.lane.b32.xlu0 %v362, 127
      %v370 = vpop.permute.xlu0 %369
      %371 = vrot.lane.b32.xlu0 %v363, 127
      %v372 = vpop.permute.xlu0 %371
      %vm373 = vcmask 1039360
      %v374 = vsel %vm373, %v368, %v370
      %v375 = vsel %vm373, %v370, %v372
      %v379 = vadd.f32 %v351, %v374
      %v380 = vadd.f32 %v352, %v375
      %v381 = vadd.f32 %v353, %v372
      %s382 = scalar_lea.vmem %s1, 8
      %v383 = vld [vmem:[%s382] sm:$0xf]
      %385 = vset.pattern.permute.xlu0 0
      %386 = vperm.xlu0 %385, %v383
      %v387 = vpop.permute.xlu0 %386
      %v389 = vmul.f32 %v387, %v339
      %v390 = vmul.f32 %v387, %v343
      %v391 = vmul.f32 %v387, %v347
      %395 = vrot.lane.b32.xlu0 %v389, 126
      %v396 = vpop.permute.xlu0 %395
      %397 = vrot.lane.b32.xlu0 %v390, 126
      %v398 = vpop.permute.xlu0 %397
      %399 = vrot.lane.b32.xlu0 %v391, 126
      %v400 = vpop.permute.xlu0 %399
      %vm401 = vcmask 1031168
      %v402 = vsel %vm401, %v396, %v398
      %v403 = vsel %vm401, %v398, %v400
      %v407 = vadd.f32 %v379, %v402
      %v408 = vadd.f32 %v380, %v403
      %v409 = vadd.f32 %v381, %v400
      %s410 = scalar_lea.vmem %s1, 12
      %v411 = vld [vmem:[%s410] sm:$0xf]
      %413 = vset.pattern.permute.xlu0 0
      %414 = vperm.xlu0 %413, %v411
      %v415 = vpop.permute.xlu0 %414
      %v417 = vmul.f32 %v415, %v339
      %v418 = vmul.f32 %v415, %v343
      %v419 = vmul.f32 %v415, %v347
      %423 = vrot.lane.b32.xlu0 %v417, 125
      %v424 = vpop.permute.xlu0 %423
      %425 = vrot.lane.b32.xlu0 %v418, 125
      %v426 = vpop.permute.xlu0 %425
      %427 = vrot.lane.b32.xlu0 %v419, 125
      %v428 = vpop.permute.xlu0 %427
      %vm429 = vcmask 1022976
      %v430 = vsel %vm429, %v424, %v426
      %v431 = vsel %vm429, %v426, %v428
      %v435 = vadd.f32 %v407, %v430
      %v436 = vadd.f32 %v408, %v431
      %v437 = vadd.f32 %v409, %v428
      %s438 = scalar_lea.vmem %s1, 16
      %v439 = vld [vmem:[%s438] sm:$0xf]
      %441 = vset.pattern.permute.xlu0 0
      %442 = vperm.xlu0 %441, %v439
      %v443 = vpop.permute.xlu0 %442
      %v445 = vmul.f32 %v443, %v339
      %v446 = vmul.f32 %v443, %v343
      %v447 = vmul.f32 %v443, %v347
      %451 = vrot.lane.b32.xlu0 %v445, 124
      %v452 = vpop.permute.xlu0 %451
      %453 = vrot.lane.b32.xlu0 %v446, 124
      %v454 = vpop.permute.xlu0 %453
      %455 = vrot.lane.b32.xlu0 %v447, 124
      %v456 = vpop.permute.xlu0 %455
      %vm457 = vcmask 1014784
      %v458 = vsel %vm457, %v452, %v454
      %v459 = vsel %vm457, %v454, %v456
      %v463 = vadd.f32 %v435, %v458
      %v464 = vadd.f32 %v436, %v459
      %v465 = vadd.f32 %v437, %v456
      %s466 = scalar_lea.vmem %s1, 20
      %v467 = vld [vmem:[%s466] sm:$0xf]
      %469 = vset.pattern.permute.xlu0 0
      %470 = vperm.xlu0 %469, %v467
      %v471 = vpop.permute.xlu0 %470
      %v473 = vmul.f32 %v471, %v339
      %v474 = vmul.f32 %v471, %v343
      %v475 = vmul.f32 %v471, %v347
      %479 = vrot.lane.b32.xlu0 %v473, 108
      %v480 = vpop.permute.xlu0 %479
      %481 = vrot.lane.b32.xlu0 %v474, 108
      %v482 = vpop.permute.xlu0 %481
      %483 = vrot.lane.b32.xlu0 %v475, 108
      %v484 = vpop.permute.xlu0 %483
      %vm485 = vcmask 883712
      %v486 = vsel %vm485, %v480, %v482
      %v487 = vsel %vm485, %v482, %v484
      %v491 = vadd.f32 %v463, %v486
      %v492 = vadd.f32 %v464, %v487
      %v493 = vadd.f32 %v465, %v484
      %s494 = scalar_lea.vmem %s1, 24
      %v495 = vld [vmem:[%s494] sm:$0xf]
      %497 = vset.pattern.permute.xlu0 0
      %498 = vperm.xlu0 %497, %v495
      %v499 = vpop.permute.xlu0 %498
      %v501 = vmul.f32 %v499, %v339
      %v502 = vmul.f32 %v499, %v343
      %v503 = vmul.f32 %v499, %v347
      %507 = vrot.lane.b32.xlu0 %v501, 107
      %v508 = vpop.permute.xlu0 %507
      %509 = vrot.lane.b32.xlu0 %v502, 107
      %v510 = vpop.permute.xlu0 %509
      %511 = vrot.lane.b32.xlu0 %v503, 107
      %v512 = vpop.permute.xlu0 %511
      %vm513 = vcmask 875520
      %v514 = vsel %vm513, %v508, %v510
      %v515 = vsel %vm513, %v510, %v512
      %v519 = vadd.f32 %v491, %v514
      %v520 = vadd.f32 %v492, %v515
      %v521 = vadd.f32 %v493, %v512
      %s522 = scalar_lea.vmem %s1, 28
      %v523 = vld [vmem:[%s522] sm:$0xf]
      %525 = vset.pattern.permute.xlu0 0
      %526 = vperm.xlu0 %525, %v523
      %v527 = vpop.permute.xlu0 %526
      %v529 = vmul.f32 %v527, %v339
      %v530 = vmul.f32 %v527, %v343
      %v531 = vmul.f32 %v527, %v347
      %535 = vrot.lane.b32.xlu0 %v529, 106
      %v536 = vpop.permute.xlu0 %535
      %537 = vrot.lane.b32.xlu0 %v530, 106
      %v538 = vpop.permute.xlu0 %537
      %539 = vrot.lane.b32.xlu0 %v531, 106
      %v540 = vpop.permute.xlu0 %539
      %vm541 = vcmask 867328
      %v542 = vsel %vm541, %v536, %v538
      %v543 = vsel %vm541, %v538, %v540
      %v547 = vadd.f32 %v519, %v542
      %v548 = vadd.f32 %v520, %v543
      %v549 = vadd.f32 %v521, %v540
      %s550 = scalar_lea.vmem %s1, 32
      %v551 = vld [vmem:[%s550] sm:$0xf]
      %553 = vset.pattern.permute.xlu0 0
      %554 = vperm.xlu0 %553, %v551
      %v555 = vpop.permute.xlu0 %554
      %v557 = vmul.f32 %v555, %v339
      %v558 = vmul.f32 %v555, %v343
      %v559 = vmul.f32 %v555, %v347
      %563 = vrot.lane.b32.xlu0 %v557, 105
      %v564 = vpop.permute.xlu0 %563
      %565 = vrot.lane.b32.xlu0 %v558, 105
      %v566 = vpop.permute.xlu0 %565
      %567 = vrot.lane.b32.xlu0 %v559, 105
      %v568 = vpop.permute.xlu0 %567
      %vm569 = vcmask 859136
      %v570 = vsel %vm569, %v564, %v566
      %v571 = vsel %vm569, %v566, %v568
      %v575 = vadd.f32 %v547, %v570
      %v576 = vadd.f32 %v548, %v571
      %v577 = vadd.f32 %v549, %v568
      %s578 = scalar_lea.vmem %s1, 36
      %v579 = vld [vmem:[%s578] sm:$0xf]
      %581 = vset.pattern.permute.xlu0 0
      %582 = vperm.xlu0 %581, %v579
      %v583 = vpop.permute.xlu0 %582
      %v585 = vmul.f32 %v583, %v339
      %v586 = vmul.f32 %v583, %v343
      %v587 = vmul.f32 %v583, %v347
      %591 = vrot.lane.b32.xlu0 %v585, 104
      %v592 = vpop.permute.xlu0 %591
      %593 = vrot.lane.b32.xlu0 %v586, 104
      %v594 = vpop.permute.xlu0 %593
      %595 = vrot.lane.b32.xlu0 %v587, 104
      %v596 = vpop.permute.xlu0 %595
      %vm597 = vcmask 850944
      %v598 = vsel %vm597, %v592, %v594
      %v599 = vsel %vm597, %v594, %v596
      %v603 = vadd.f32 %v575, %v598
      %v604 = vadd.f32 %v576, %v599
      %v605 = vadd.f32 %v577, %v596
      %s606 = scalar_lea.vmem %s1, 40
      %v607 = vld [vmem:[%s606] sm:$0xf]
      %609 = vset.pattern.permute.xlu0 0
      %610 = vperm.xlu0 %609, %v607
      %v611 = vpop.permute.xlu0 %610
      %v613 = vmul.f32 %v611, %v339
      %v614 = vmul.f32 %v611, %v343
      %v615 = vmul.f32 %v611, %v347
      %619 = vrot.lane.b32.xlu0 %v613, 88
      %v620 = vpop.permute.xlu0 %619
      %621 = vrot.lane.b32.xlu0 %v614, 88
      %v622 = vpop.permute.xlu0 %621
      %623 = vrot.lane.b32.xlu0 %v615, 88
      %v624 = vpop.permute.xlu0 %623
      %vm625 = vcmask 719872
      %v626 = vsel %vm625, %v620, %v622
      %v627 = vsel %vm625, %v622, %v624
      %v631 = vadd.f32 %v603, %v626
      %v632 = vadd.f32 %v604, %v627
      %v633 = vadd.f32 %v605, %v624
      %s634 = scalar_lea.vmem %s1, 44
      %v635 = vld [vmem:[%s634] sm:$0xf]
      %637 = vset.pattern.permute.xlu0 0
      %638 = vperm.xlu0 %637, %v635
      %v639 = vpop.permute.xlu0 %638
      %v641 = vmul.f32 %v639, %v339
      %v642 = vmul.f32 %v639, %v343
      %v643 = vmul.f32 %v639, %v347
      %647 = vrot.lane.b32.xlu0 %v641, 87
      %v648 = vpop.permute.xlu0 %647
      %649 = vrot.lane.b32.xlu0 %v642, 87
      %v650 = vpop.permute.xlu0 %649
      %651 = vrot.lane.b32.xlu0 %v643, 87
      %v652 = vpop.permute.xlu0 %651
      %vm653 = vcmask 711680
      %v654 = vsel %vm653, %v648, %v650
      %v655 = vsel %vm653, %v650, %v652
      %v659 = vadd.f32 %v631, %v654
      %v660 = vadd.f32 %v632, %v655
      %v661 = vadd.f32 %v633, %v652
      %s662 = scalar_lea.vmem %s1, 48
      %v663 = vld [vmem:[%s662] sm:$0xf]
      %665 = vset.pattern.permute.xlu0 0
      %666 = vperm.xlu0 %665, %v663
      %v667 = vpop.permute.xlu0 %666
      %v669 = vmul.f32 %v667, %v339
      %v670 = vmul.f32 %v667, %v343
      %v671 = vmul.f32 %v667, %v347
      %675 = vrot.lane.b32.xlu0 %v669, 86
      %v676 = vpop.permute.xlu0 %675
      %677 = vrot.lane.b32.xlu0 %v670, 86
      %v678 = vpop.permute.xlu0 %677
      %679 = vrot.lane.b32.xlu0 %v671, 86
      %v680 = vpop.permute.xlu0 %679
      %vm681 = vcmask 703488
      %v682 = vsel %vm681, %v676, %v678
      %v683 = vsel %vm681, %v678, %v680
      %v687 = vadd.f32 %v659, %v682
      %v688 = vadd.f32 %v660, %v683
      %v689 = vadd.f32 %v661, %v680
      %s690 = scalar_lea.vmem %s1, 52
      %v691 = vld [vmem:[%s690] sm:$0xf]
      %693 = vset.pattern.permute.xlu0 0
      %694 = vperm.xlu0 %693, %v691
      %v695 = vpop.permute.xlu0 %694
      %v697 = vmul.f32 %v695, %v339
      %v698 = vmul.f32 %v695, %v343
      %v699 = vmul.f32 %v695, %v347
      %703 = vrot.lane.b32.xlu0 %v697, 85
      %v704 = vpop.permute.xlu0 %703
      %705 = vrot.lane.b32.xlu0 %v698, 85
      %v706 = vpop.permute.xlu0 %705
      %707 = vrot.lane.b32.xlu0 %v699, 85
      %v708 = vpop.permute.xlu0 %707
      %vm709 = vcmask 695296
      %v710 = vsel %vm709, %v704, %v706
      %v711 = vsel %vm709, %v706, %v708
      %v715 = vadd.f32 %v687, %v710
      %v716 = vadd.f32 %v688, %v711
      %v717 = vadd.f32 %v689, %v708
      %s718 = scalar_lea.vmem %s1, 56
      %v719 = vld [vmem:[%s718] sm:$0xf]
      %721 = vset.pattern.permute.xlu0 0
      %722 = vperm.xlu0 %721, %v719
      %v723 = vpop.permute.xlu0 %722
      %v725 = vmul.f32 %v723, %v339
      %v726 = vmul.f32 %v723, %v343
      %v727 = vmul.f32 %v723, %v347
      %731 = vrot.lane.b32.xlu0 %v725, 84
      %v732 = vpop.permute.xlu0 %731
      %733 = vrot.lane.b32.xlu0 %v726, 84
      %v734 = vpop.permute.xlu0 %733
      %735 = vrot.lane.b32.xlu0 %v727, 84
      %v736 = vpop.permute.xlu0 %735
      %vm737 = vcmask 687104
      %v738 = vsel %vm737, %v732, %v734
      %v739 = vsel %vm737, %v734, %v736
      %v743 = vadd.f32 %v715, %v738
      %v744 = vadd.f32 %v716, %v739
      %v745 = vadd.f32 %v717, %v736
      %s746 = scalar_lea.vmem %s1, 60
      %v747 = vld [vmem:[%s746] sm:$0xf]
      %749 = vset.pattern.permute.xlu0 0
      %750 = vperm.xlu0 %749, %v747
      %v751 = vpop.permute.xlu0 %750
      %v753 = vmul.f32 %v751, %v339
      %v754 = vmul.f32 %v751, %v343
      %v755 = vmul.f32 %v751, %v347
      %759 = vrot.lane.b32.xlu0 %v753, 68
      %v760 = vpop.permute.xlu0 %759
      %761 = vrot.lane.b32.xlu0 %v754, 68
      %v762 = vpop.permute.xlu0 %761
      %763 = vrot.lane.b32.xlu0 %v755, 68
      %v764 = vpop.permute.xlu0 %763
      %vm765 = vcmask 556032
      %v766 = vsel %vm765, %v760, %v762
      %v767 = vsel %vm765, %v762, %v764
      %v771 = vadd.f32 %v743, %v766
      %v772 = vadd.f32 %v744, %v767
      %v773 = vadd.f32 %v745, %v764
      %s774 = scalar_lea.vmem %s1, 64
      %v775 = vld [vmem:[%s774] sm:$0xf]
      %777 = vset.pattern.permute.xlu0 0
      %778 = vperm.xlu0 %777, %v775
      %v779 = vpop.permute.xlu0 %778
      %v781 = vmul.f32 %v779, %v339
      %v782 = vmul.f32 %v779, %v343
      %v783 = vmul.f32 %v779, %v347
      %787 = vrot.lane.b32.xlu0 %v781, 67
      %v788 = vpop.permute.xlu0 %787
      %789 = vrot.lane.b32.xlu0 %v782, 67
      %v790 = vpop.permute.xlu0 %789
      %791 = vrot.lane.b32.xlu0 %v783, 67
      %v792 = vpop.permute.xlu0 %791
      %vm793 = vcmask 547840
      %v794 = vsel %vm793, %v788, %v790
      %v795 = vsel %vm793, %v790, %v792
      %v799 = vadd.f32 %v771, %v794
      %v800 = vadd.f32 %v772, %v795
      %v801 = vadd.f32 %v773, %v792
      %s802 = scalar_lea.vmem %s1, 68
      %v803 = vld [vmem:[%s802] sm:$0xf]
      %805 = vset.pattern.permute.xlu0 0
      %806 = vperm.xlu0 %805, %v803
      %v807 = vpop.permute.xlu0 %806
      %v809 = vmul.f32 %v807, %v339
      %v810 = vmul.f32 %v807, %v343
      %v811 = vmul.f32 %v807, %v347
      %815 = vrot.lane.b32.xlu0 %v809, 66
      %v816 = vpop.permute.xlu0 %815
      %817 = vrot.lane.b32.xlu0 %v810, 66
      %v818 = vpop.permute.xlu0 %817
      %819 = vrot.lane.b32.xlu0 %v811, 66
      %v820 = vpop.permute.xlu0 %819
      %vm821 = vcmask 539648
      %v822 = vsel %vm821, %v816, %v818
      %v823 = vsel %vm821, %v818, %v820
      %v827 = vadd.f32 %v799, %v822
      %v828 = vadd.f32 %v800, %v823
      %v829 = vadd.f32 %v801, %v820
      %s830 = scalar_lea.vmem %s1, 72
      %v831 = vld [vmem:[%s830] sm:$0xf]
      %833 = vset.pattern.permute.xlu0 0
      %834 = vperm.xlu0 %833, %v831
      %v835 = vpop.permute.xlu0 %834
      %v837 = vmul.f32 %v835, %v339
      %v838 = vmul.f32 %v835, %v343
      %v839 = vmul.f32 %v835, %v347
      %843 = vrot.lane.b32.xlu0 %v837, 65
      %v844 = vpop.permute.xlu0 %843
      %845 = vrot.lane.b32.xlu0 %v838, 65
      %v846 = vpop.permute.xlu0 %845
      %847 = vrot.lane.b32.xlu0 %v839, 65
      %v848 = vpop.permute.xlu0 %847
      %vm849 = vcmask 531456
      %v850 = vsel %vm849, %v844, %v846
      %v851 = vsel %vm849, %v846, %v848
      %v855 = vadd.f32 %v827, %v850
      %v856 = vadd.f32 %v828, %v851
      %v857 = vadd.f32 %v829, %v848
      %s858 = scalar_lea.vmem %s1, 76
      %v859 = vld [vmem:[%s858] sm:$0xf]
      %861 = vset.pattern.permute.xlu0 0
      %862 = vperm.xlu0 %861, %v859
      %v863 = vpop.permute.xlu0 %862
      %v865 = vmul.f32 %v863, %v339
      %v866 = vmul.f32 %v863, %v343
      %v867 = vmul.f32 %v863, %v347
      %871 = vrot.lane.b32.xlu0 %v865, 64
      %v872 = vpop.permute.xlu0 %871
      %873 = vrot.lane.b32.xlu0 %v866, 64
      %v874 = vpop.permute.xlu0 %873
      %875 = vrot.lane.b32.xlu0 %v867, 64
      %v876 = vpop.permute.xlu0 %875
      %vm877 = vcmask 523264
      %v878 = vsel %vm877, %v872, %v874
      %v879 = vsel %vm877, %v874, %v876
      %v883 = vadd.f32 %v855, %v878
      %v884 = vadd.f32 %v856, %v879
      %v885 = vadd.f32 %v857, %v876
      %s886 = scalar_lea.vmem %s1, 80
      %v887 = vld [vmem:[%s886] sm:$0xf]
      %889 = vset.pattern.permute.xlu0 0
      %890 = vperm.xlu0 %889, %v887
      %v891 = vpop.permute.xlu0 %890
      %v893 = vlaneseq
      %v894 = vshrl.u32 %v893, 7
      %v895 = vsub.s32 3, %v894
      %v896 = vrot.slane %v328, %v895
      %v898 = vmul.f32 %v891, %v339
      %v899 = vmul.f32 %v891, %v343
      %v900 = vmul.f32 %v891, %v347
      %v901 = vmul.f32 %v891, %v896
      %906 = vrot.lane.b32.xlu0 %v898, 48
      %v907 = vpop.permute.xlu0 %906
      %908 = vrot.lane.b32.xlu0 %v899, 48
      %v909 = vpop.permute.xlu0 %908
      %910 = vrot.lane.b32.xlu0 %v900, 48
      %v911 = vpop.permute.xlu0 %910
      %912 = vrot.lane.b32.xlu0 %v901, 48
      %v913 = vpop.permute.xlu0 %912
      %vm914 = vcmask 392192
      %v915 = vsel %vm914, %v907, %v909
      %v916 = vsel %vm914, %v909, %v911
      %v917 = vsel %vm914, %v911, %v913
      %v921 = vadd.f32 %v883, %v915
      %v922 = vadd.f32 %v884, %v916
      %v923 = vadd.f32 %v885, %v917
      %s924 = scalar_lea.vmem %s1, 84
      %v925 = vld [vmem:[%s924] sm:$0xf]
      %927 = vset.pattern.permute.xlu0 0
      %928 = vperm.xlu0 %927, %v925
      %v929 = vpop.permute.xlu0 %928
      %v931 = vmul.f32 %v929, %v339
      %v932 = vmul.f32 %v929, %v343
      %v933 = vmul.f32 %v929, %v347
      %v934 = vmul.f32 %v929, %v896
      %939 = vrot.lane.b32.xlu0 %v931, 47
      %v940 = vpop.permute.xlu0 %939
      %941 = vrot.lane.b32.xlu0 %v932, 47
      %v942 = vpop.permute.xlu0 %941
      %943 = vrot.lane.b32.xlu0 %v933, 47
      %v944 = vpop.permute.xlu0 %943
      %945 = vrot.lane.b32.xlu0 %v934, 47
      %v946 = vpop.permute.xlu0 %945
      %vm947 = vcmask 384000
      %v948 = vsel %vm947, %v940, %v942
      %v949 = vsel %vm947, %v942, %v944
      %v950 = vsel %vm947, %v944, %v946
      %v954 = vadd.f32 %v921, %v948
      %v955 = vadd.f32 %v922, %v949
      %v956 = vadd.f32 %v923, %v950
      %s957 = scalar_lea.vmem %s1, 88
      %v958 = vld [vmem:[%s957] sm:$0xf]
      %960 = vset.pattern.permute.xlu0 0
      %961 = vperm.xlu0 %960, %v958
      %v962 = vpop.permute.xlu0 %961
      %v964 = vmul.f32 %v962, %v339
      %v965 = vmul.f32 %v962, %v343
      %v966 = vmul.f32 %v962, %v347
      %v967 = vmul.f32 %v962, %v896
      %972 = vrot.lane.b32.xlu0 %v964, 46
      %v973 = vpop.permute.xlu0 %972
      %974 = vrot.lane.b32.xlu0 %v965, 46
      %v975 = vpop.permute.xlu0 %974
      %976 = vrot.lane.b32.xlu0 %v966, 46
      %v977 = vpop.permute.xlu0 %976
      %978 = vrot.lane.b32.xlu0 %v967, 46
      %v979 = vpop.permute.xlu0 %978
      %vm980 = vcmask 375808
      %v981 = vsel %vm980, %v973, %v975
      %v982 = vsel %vm980, %v975, %v977
      %v983 = vsel %vm980, %v977, %v979
      %v987 = vadd.f32 %v954, %v981
      %v988 = vadd.f32 %v955, %v982
      %v989 = vadd.f32 %v956, %v983
      %s990 = scalar_lea.vmem %s1, 92
      %v991 = vld [vmem:[%s990] sm:$0xf]
      %993 = vset.pattern.permute.xlu0 0
      %994 = vperm.xlu0 %993, %v991
      %v995 = vpop.permute.xlu0 %994
      %v997 = vmul.f32 %v995, %v339
      %v998 = vmul.f32 %v995, %v343
      %v999 = vmul.f32 %v995, %v347
      %v1000 = vmul.f32 %v995, %v896
      %1005 = vrot.lane.b32.xlu0 %v997, 45
      %v1006 = vpop.permute.xlu0 %1005
      %1007 = vrot.lane.b32.xlu0 %v998, 45
      %v1008 = vpop.permute.xlu0 %1007
      %1009 = vrot.lane.b32.xlu0 %v999, 45
      %v1010 = vpop.permute.xlu0 %1009
      %1011 = vrot.lane.b32.xlu0 %v1000, 45
      %v1012 = vpop.permute.xlu0 %1011
      %vm1013 = vcmask 367616
      %v1014 = vsel %vm1013, %v1006, %v1008
      %v1015 = vsel %vm1013, %v1008, %v1010
      %v1016 = vsel %vm1013, %v1010, %v1012
      %v1020 = vadd.f32 %v987, %v1014
      %v1021 = vadd.f32 %v988, %v1015
      %v1022 = vadd.f32 %v989, %v1016
      %s1023 = scalar_lea.vmem %s1, 96
      %v1024 = vld [vmem:[%s1023] sm:$0xf]
      %1026 = vset.pattern.permute.xlu0 0
      %1027 = vperm.xlu0 %1026, %v1024
      %v1028 = vpop.permute.xlu0 %1027
      %v1030 = vmul.f32 %v1028, %v339
      %v1031 = vmul.f32 %v1028, %v343
      %v1032 = vmul.f32 %v1028, %v347
      %v1033 = vmul.f32 %v1028, %v896
      %1038 = vrot.lane.b32.xlu0 %v1030, 44
      %v1039 = vpop.permute.xlu0 %1038
      %1040 = vrot.lane.b32.xlu0 %v1031, 44
      %v1041 = vpop.permute.xlu0 %1040
      %1042 = vrot.lane.b32.xlu0 %v1032, 44
      %v1043 = vpop.permute.xlu0 %1042
      %1044 = vrot.lane.b32.xlu0 %v1033, 44
      %v1045 = vpop.permute.xlu0 %1044
      %vm1046 = vcmask 359424
      %v1047 = vsel %vm1046, %v1039, %v1041
      %v1048 = vsel %vm1046, %v1041, %v1043
      %v1049 = vsel %vm1046, %v1043, %v1045
      %v1053 = vadd.f32 %v1020, %v1047
      %v1054 = vadd.f32 %v1021, %v1048
      %v1055 = vadd.f32 %v1022, %v1049
      %v1056 = vld [vmem:[%s3] sm:$0xf]
      %1058 = vset.pattern.permute.xlu0 0
      %1059 = vperm.xlu0 %1058, %v1056
      %v1060 = vpop.permute.xlu0 %1059
      %v1062 = vmul.f32 %v1053, %v1060
      %v1063 = vmul.f32 %v1054, %v1060
      %v1064 = vmul.f32 %v1055, %v1060
      %v1065 = vld [vmem:[%s4] sm:$0xf]
      %1067 = vset.pattern.permute.xlu0 0
      %1068 = vperm.xlu0 %1067, %v1065
      %v1069 = vpop.permute.xlu0 %1068
      %v1071 = vadd.f32 %v1062, %v1069
      %v1072 = vadd.f32 %v1063, %v1069
      %v1073 = vadd.f32 %v1064, %v1069
      %v1074 = vmax.f32 %v1071, 0.0
      %v1075 = vmax.f32 %v1072, 0.0
      %v1076 = vmax.f32 %v1073, 0.0
      %1080 = vrot.lane.b32.xlu0 %v1074, 127
      %v1081 = vpop.permute.xlu0 %1080
      %1082 = vrot.lane.b32.xlu0 %v1075, 127
      %v1083 = vpop.permute.xlu0 %1082
      %1084 = vrot.lane.b32.xlu0 %v1076, 127
      %v1085 = vpop.permute.xlu0 %1084
      %v1086 = vsel %vm373, %v1081, %v1083
      %v1087 = vsel %vm373, %v1083, %v1085
      %v1091 = vmax.f32 %v1074, %v1086
      %v1092 = vmax.f32 %v1075, %v1087
      %v1093 = vmax.f32 %v1076, %v1085
      %1097 = vrot.lane.b32.xlu0 %v1091, 108
      %v1098 = vpop.permute.xlu0 %1097
      %1099 = vrot.lane.b32.xlu0 %v1092, 108
      %v1100 = vpop.permute.xlu0 %1099
      %1101 = vrot.lane.b32.xlu0 %v1093, 108
      %v1102 = vpop.permute.xlu0 %1101
      %v1103 = vsel %vm485, %v1098, %v1100
      %v1104 = vsel %vm485, %v1100, %v1102
      %v1108 = vmax.f32 %v1091, %v1103
      %v1109 = vmax.f32 %v1092, %v1104
      %v1110 = vmax.f32 %v1093, %v1102
      %v1111 = vld [vmem:[%s7] sm:$0xff]
      %v1112 = vld [vmem:[%s7 + $0x8] sm:$0xff]
      %v1113 = vld [vmem:[%s7 + $0x10] sm:$0xff]
      %v1114 = vld [vmem:[%s7 + $0x18] sm:$0xff]
      %v1115 = vld [vmem:[%s7 + $0x20] sm:$0xff]
      %v1116 = vld [vmem:[%s7 + $0x28] sm:$0xff]
      %v1117 = vld [vmem:[%s7 + $0x30] sm:$0xff]
      %v1118 = vld [vmem:[%s7 + $0x38] sm:$0xff]
      %v1119 = vld [vmem:[%s7 + $0x40] sm:$0xff]
      %v1120 = vld [vmem:[%s7 + $0x48] sm:$0xff]
      %v1121 = vld [vmem:[%s7 + $0x50] sm:$0xff]
      %v1122 = vld [vmem:[%s7 + $0x58] sm:$0xff]
      %v1123 = vld [vmem:[%s7 + $0x60] sm:$0xff]
      %v1124 = vld [vmem:[%s7 + $0x68] sm:$0xff]
      %v1125 = vld [vmem:[%s7 + $0x70] sm:$0xff]
      %v1126 = vld [vmem:[%s7 + $0x78] sm:$0xff]
      %v1127 = vld [vmem:[%s7 + $0x80] sm:$0xff]
      %v1128 = vld [vmem:[%s7 + $0x88] sm:$0xff]
      %v1129 = vld [vmem:[%s7 + $0x90] sm:$0xff]
      %v1130 = vld [vmem:[%s7 + $0x98] sm:$0xff]
      %v1131 = vld [vmem:[%s7 + $0xa0] sm:$0xff]
      %v1132 = vld [vmem:[%s7 + $0xa8] sm:$0xff]
      %v1133 = vld [vmem:[%s7 + $0xb0] sm:$0xff]
      %v1134 = vld [vmem:[%s7 + $0xb8] sm:$0xff]
      %v1135 = vld [vmem:[%s7 + $0xc0] sm:$0xff]
      %v1136 = vld [vmem:[%s7 + $0xc8] sm:$0xff]
      %v1137 = vld [vmem:[%s7 + $0xd0] sm:$0xff]
      %v1138 = vld [vmem:[%s7 + $0xd8] sm:$0xff]
      %v1139 = vld [vmem:[%s7 + $0xe0] sm:$0xff]
      %v1140 = vld [vmem:[%s7 + $0xe8] sm:$0xff]
      %v1141 = vld [vmem:[%s7 + $0xf0] sm:$0xff]
      %v1142 = vld [vmem:[%s7 + $0xf8] sm:$0xff]
      %v1143 = vld [vmem:[%s7 + $0x100] sm:$0xff]
      %v1144 = vld [vmem:[%s7 + $0x108] sm:$0xff]
      %v1145 = vld [vmem:[%s7 + $0x110] sm:$0xff]
      %v1146 = vld [vmem:[%s7 + $0x118] sm:$0xff]
      %v1147 = vld [vmem:[%s7 + $0x120] sm:$0xff]
      %v1148 = vld [vmem:[%s7 + $0x128] sm:$0xff]
      %v1149 = vld [vmem:[%s7 + $0x130] sm:$0xff]
      %v1150 = vld [vmem:[%s7 + $0x138] sm:$0xff]
      %v1151 = vld [vmem:[%s7 + $0x140] sm:$0xff]
      %v1152 = vld [vmem:[%s7 + $0x148] sm:$0xff]
      %v1153 = vld [vmem:[%s7 + $0x150] sm:$0xff]
      %v1154 = vld [vmem:[%s7 + $0x158] sm:$0xff]
      %v1155 = vld [vmem:[%s7 + $0x160] sm:$0xff]
      %v1156 = vld [vmem:[%s7 + $0x168] sm:$0xff]
      %v1157 = vld [vmem:[%s7 + $0x170] sm:$0xff]
      %v1158 = vld [vmem:[%s7 + $0x178] sm:$0xff]
      %v1159 = vld [vmem:[%s7 + $0x180] sm:$0xff]
      %v1160 = vld [vmem:[%s7 + $0x188] sm:$0xff]
      %v1161 = vld [vmem:[%s7 + $0x190] sm:$0xff]
      %v1162 = vld [vmem:[%s7 + $0x198] sm:$0xff]
      %v1163 = vld [vmem:[%s7 + $0x1a0] sm:$0xff]
      %v1164 = vld [vmem:[%s7 + $0x1a8] sm:$0xff]
      %v1165 = vld [vmem:[%s7 + $0x1b0] sm:$0xff]
      %v1166 = vld [vmem:[%s7 + $0x1b8] sm:$0xff]
      %v1167 = vld [vmem:[%s7 + $0x1c0] sm:$0xff]
      %v1168 = vld [vmem:[%s7 + $0x1c8] sm:$0xff]
      %v1169 = vld [vmem:[%s7 + $0x1d0] sm:$0xff]
      %v1170 = vld [vmem:[%s7 + $0x1d8] sm:$0xff]
      %v1171 = vld [vmem:[%s7 + $0x1e0] sm:$0xff]
      %v1172 = vld [vmem:[%s7 + $0x1e8] sm:$0xff]
      %v1173 = vld [vmem:[%s7 + $0x1f0] sm:$0xff]
      %v1174 = vld [vmem:[%s7 + $0x1f8] sm:$0xff]
      %v1175 = vld [vmem:[%s7 + $0x200] sm:$0xff]
      %v1176 = vld [vmem:[%s7 + $0x208] sm:$0xff]
      %v1177 = vld [vmem:[%s7 + $0x210] sm:$0xff]
      %v1178 = vld [vmem:[%s7 + $0x218] sm:$0xff]
      %v1179 = vld [vmem:[%s7 + $0x220] sm:$0xff]
      %v1180 = vld [vmem:[%s7 + $0x228] sm:$0xff]
      %v1181 = vld [vmem:[%s7 + $0x230] sm:$0xff]
      %v1182 = vld [vmem:[%s7 + $0x238] sm:$0xff]
      %v1183 = vld [vmem:[%s7 + $0x240] sm:$0xff]
      %v1184 = vld [vmem:[%s7 + $0x248] sm:$0xff]
      %v1185 = vld [vmem:[%s7 + $0x250] sm:$0x7]
      %v1186 = vld [vmem:[%s7 + $0x258] sm:$0x7]
      %vm1187 = vcmask 351232
      %v1189 = vsel %vm1187, %v1110, 0
      %vm1191 = vcmask 1042432
      %v1193 = vsel %vm1191, %v1185, 0
      %v1196 = vsel %vm1191, %v1186, 0
      %1198 = vmatprep.subr.mxu0 %v1142
      %1199 = vmatpush1.msra.mxu0 %v1141
      %1200 = vmatprep.subr.mxu0 %v1140
      %1201 = vmatpush1.msra.mxu0 %v1139
      %1202 = vmatprep.subr.mxu0 %v1138
      %1203 = vmatpush1.msra.mxu0 %v1137
      %1204 = vmatprep.subr.mxu0 %v1136
      %1205 = vmatpush1.msra.mxu0 %v1135
      %1206 = vmatprep.subr.mxu0 %v1134
      %1207 = vmatpush1.msra.mxu0 %v1133
      %1208 = vmatprep.subr.mxu0 %v1132
      %1209 = vmatpush1.msra.mxu0 %v1131
      %1210 = vmatprep.subr.mxu0 %v1130
      %1211 = vmatpush1.msra.mxu0 %v1129
      %1212 = vmatprep.subr.mxu0 %v1128
      %1213 = vmatpush1.msra.mxu0 %v1127
      %1214 = vmatprep.subr.mxu0 %v1126
      %1215 = vmatpush1.msra.mxu0 %v1125
      %1216 = vmatprep.subr.mxu0 %v1124
      %1217 = vmatpush1.msra.mxu0 %v1123
      %1218 = vmatprep.subr.mxu0 %v1122
      %1219 = vmatpush1.msra.mxu0 %v1121
      %1220 = vmatprep.subr.mxu0 %v1120
      %1221 = vmatpush1.msra.mxu0 %v1119
      %1222 = vmatprep.subr.mxu0 %v1118
      %1223 = vmatpush1.msra.mxu0 %v1117
      %1224 = vmatprep.subr.mxu0 %v1116
      %1225 = vmatpush1.msra.mxu0 %v1115
      %1226 = vmatprep.subr.mxu0 %v1114
      %1227 = vmatpush1.msra.mxu0 %v1113
      %1228 = vmatprep.subr.mxu0 %v1112
      %1229 = vmatpush1.msra.mxu0 %v1111
      %1230 = vmatprep.subr.mxu0 %v1174
      %1231 = vmatpush2.msra.mxu0 %v1173
      %1232 = vmatprep.subr.mxu0 %v1172
      %1233 = vmatpush2.msra.mxu0 %v1171
      %1234 = vmatprep.subr.mxu0 %v1170
      %1235 = vmatpush2.msra.mxu0 %v1169
      %1236 = vmatprep.subr.mxu0 %v1168
      %1237 = vmatpush2.msra.mxu0 %v1167
      %1238 = vmatprep.subr.mxu0 %v1166
      %1239 = vmatpush2.msra.mxu0 %v1165
      %1240 = vmatprep.subr.mxu0 %v1164
      %1241 = vmatpush2.msra.mxu0 %v1163
      %1242 = vmatprep.subr.mxu0 %v1162
      %1243 = vmatpush2.msra.mxu0 %v1161
      %1244 = vmatprep.subr.mxu0 %v1160
      %1245 = vmatpush2.msra.mxu0 %v1159
      %1246 = vmatprep.subr.mxu0 %v1158
      %1247 = vmatpush2.msra.mxu0 %v1157
      %1248 = vmatprep.subr.mxu0 %v1156
      %1249 = vmatpush2.msra.mxu0 %v1155
      %1250 = vmatprep.subr.mxu0 %v1154
      %1251 = vmatpush2.msra.mxu0 %v1153
      %1252 = vmatprep.subr.mxu0 %v1152
      %1253 = vmatpush2.msra.mxu0 %v1151
      %1254 = vmatprep.subr.mxu0 %v1150
      %1255 = vmatpush2.msra.mxu0 %v1149
      %1256 = vmatprep.subr.mxu0 %v1148
      %1257 = vmatpush2.msra.mxu0 %v1147
      %1258 = vmatprep.subr.mxu0 %v1146
      %1259 = vmatpush2.msra.mxu0 %v1145
      %1260 = vmatprep.subr.mxu0 %v1144
      %1261 = vmatpush2.msra.mxu0 %v1143
      %1262 = vmatprep.mubr.f32.mxu0 %v1109
      %1263 = vmatmul.mubr.f32.gmra.mxu0 %v1108
      %v1264 = vpop.f32.mrf.mxu0
      %v1265 = vadd.f32 0.0, %v1264
      %v1266 = vpop.f32.mrf.mxu0
      %v1267 = vadd.f32 0.0, %v1266
      %1268 = vdwg.mxu0
      %1269 = vmatprep.subr.mxu0 0.0
      %1270 = vmatpush1.msra.mxu0 0.0
      %1271 = vmatprep.subr.mxu0 0.0
      %1272 = vmatpush1.msra.mxu0 0.0
      %1273 = vmatprep.subr.mxu0 0.0
      %1274 = vmatpush1.msra.mxu0 0.0
      %1275 = vmatprep.subr.mxu0 0.0
      %1276 = vmatpush1.msra.mxu0 0.0
      %1277 = vmatprep.subr.mxu0 0.0
      %1278 = vmatpush1.msra.mxu0 0.0
      %1279 = vmatprep.subr.mxu0 0.0
      %1280 = vmatpush1.msra.mxu0 0.0
      %1281 = vmatprep.subr.mxu0 0.0
      %1282 = vmatpush1.msra.mxu0 0.0
      %1283 = vmatprep.subr.mxu0 0.0
      %1284 = vmatpush1.msra.mxu0 0.0
      %1285 = vmatprep.subr.mxu0 0.0
      %1286 = vmatpush1.msra.mxu0 0.0
      %1287 = vmatprep.subr.mxu0 0.0
      %1288 = vmatpush1.msra.mxu0 0.0
      %1289 = vmatprep.subr.mxu0 %v1196
      %1290 = vmatpush1.msra.mxu0 %v1193
      %1291 = vmatprep.subr.mxu0 %v1184
      %1292 = vmatpush1.msra.mxu0 %v1183
      %1293 = vmatprep.subr.mxu0 %v1182
      %1294 = vmatpush1.msra.mxu0 %v1181
      %1295 = vmatprep.subr.mxu0 %v1180
      %1296 = vmatpush1.msra.mxu0 %v1179
      %1297 = vmatprep.subr.mxu0 %v1178
      %1298 = vmatpush1.msra.mxu0 %v1177
      %1299 = vmatprep.subr.mxu0 %v1176
      %1300 = vmatpush1.msra.mxu0 %v1175
      %1301 = vmatprep.subr.mxu0 0.0
      %1302 = vmatpush2.msra.mxu0 0.0
      %1303 = vmatprep.subr.mxu0 0.0
      %1304 = vmatpush2.msra.mxu0 0.0
      %1305 = vmatprep.subr.mxu0 0.0
      %1306 = vmatpush2.msra.mxu0 0.0
      %1307 = vmatprep.subr.mxu0 0.0
      %1308 = vmatpush2.msra.mxu0 0.0
      %1309 = vmatprep.subr.mxu0 0.0
      %1310 = vmatpush2.msra.mxu0 0.0
      %1311 = vmatprep.subr.mxu0 0.0
      %1312 = vmatpush2.msra.mxu0 0.0
      %1313 = vmatprep.subr.mxu0 0.0
      %1314 = vmatpush2.msra.mxu0 0.0
      %1315 = vmatprep.subr.mxu0 0.0
      %1316 = vmatpush2.msra.mxu0 0.0
      %1317 = vmatprep.subr.mxu0 0.0
      %1318 = vmatpush2.msra.mxu0 0.0
      %1319 = vmatprep.subr.mxu0 0.0
      %1320 = vmatpush2.msra.mxu0 0.0
      %1321 = vmatprep.subr.mxu0 0.0
      %1322 = vmatpush2.msra.mxu0 0.0
      %1323 = vmatprep.subr.mxu0 0.0
      %1324 = vmatpush2.msra.mxu0 0.0
      %1325 = vmatprep.subr.mxu0 0.0
      %1326 = vmatpush2.msra.mxu0 0.0
      %1327 = vmatprep.subr.mxu0 0.0
      %1328 = vmatpush2.msra.mxu0 0.0
      %1329 = vmatprep.subr.mxu0 0.0
      %1330 = vmatpush2.msra.mxu0 0.0
      %1331 = vmatprep.subr.mxu0 0.0
      %1332 = vmatpush2.msra.mxu0 0.0
      %1333 = vmatprep.mubr.f32.mxu0 0.0
      %1334 = vmatmul.mubr.f32.gmra.mxu0 %v1189
      %v1335 = vpop.f32.mrf.mxu0
      %v1336 = vadd.f32 %v1265, %v1335
      %v1337 = vpop.f32.mrf.mxu0
      %v1338 = vadd.f32 %v1267, %v1337
      %1339 = vdwg.mxu0
      %v1340 = vld [vmem:[%s2] sm:$0xff]
      %s1341 = scalar_lea.vmem %s2, 8
      %v1342 = vld [vmem:[%s1341] sm:$0xff]
      %1344 = vrot.lane.b32.xlu0 %v1336, 127
      %v1345 = vpop.permute.xlu0 %1344
      %vm1346 = vcmask 31744
      %v1348 = vsel %vm1346, %v1342, 0
      %vm1350 = vcmask 1043456
      %v1351 = vsel %vm1350, %v1345, 0
      %1353 = vmatprep.subr.mxu0 0.0
      %1354 = vmatpush1.msra.mxu0 0.0
      %1355 = vmatprep.subr.mxu0 0.0
      %1356 = vmatpush1.msra.mxu0 0.0
      %1357 = vmatprep.subr.mxu0 0.0
      %1358 = vmatpush1.msra.mxu0 0.0
      %1359 = vmatprep.subr.mxu0 0.0
      %1360 = vmatpush1.msra.mxu0 0.0
      %1361 = vmatprep.subr.mxu0 0.0
      %1362 = vmatpush1.msra.mxu0 0.0
      %1363 = vmatprep.subr.mxu0 0.0
      %1364 = vmatpush1.msra.mxu0 0.0
      %1365 = vmatprep.subr.mxu0 0.0
      %1366 = vmatpush1.msra.mxu0 0.0
      %1367 = vmatprep.subr.mxu0 0.0
      %1368 = vmatpush1.msra.mxu0 0.0
      %1369 = vmatprep.subr.mxu0 0.0
      %1370 = vmatpush1.msra.mxu0 0.0
      %1371 = vmatprep.subr.mxu0 0.0
      %1372 = vmatpush1.msra.mxu0 0.0
      %1373 = vmatprep.subr.mxu0 0.0
      %1374 = vmatpush1.msra.mxu0 0.0
      %1375 = vmatprep.subr.mxu0 0.0
      %1376 = vmatpush1.msra.mxu0 0.0
      %1377 = vmatprep.subr.mxu0 0.0
      %1378 = vmatpush1.msra.mxu0 0.0
      %1379 = vmatprep.subr.mxu0 0.0
      %1380 = vmatpush1.msra.mxu0 0.0
      %1381 = vmatprep.subr.mxu0 0.0
      %1382 = vmatpush1.msra.mxu0 0.0
      %1383 = vmatprep.subr.mxu0 0.0
      %1384 = vmatpush1.msra.mxu0 %v1351
      %1385 = vmatprep.subr.mxu0 0.0
      %1386 = vmatpush2.msra.mxu0 0.0
      %1387 = vmatprep.subr.mxu0 0.0
      %1388 = vmatpush2.msra.mxu0 0.0
      %1389 = vmatprep.subr.mxu0 0.0
      %1390 = vmatpush2.msra.mxu0 0.0
      %1391 = vmatprep.subr.mxu0 0.0
      %1392 = vmatpush2.msra.mxu0 0.0
      %1393 = vmatprep.subr.mxu0 0.0
      %1394 = vmatpush2.msra.mxu0 0.0
      %1395 = vmatprep.subr.mxu0 0.0
      %1396 = vmatpush2.msra.mxu0 0.0
      %1397 = vmatprep.subr.mxu0 0.0
      %1398 = vmatpush2.msra.mxu0 0.0
      %1399 = vmatprep.subr.mxu0 0.0
      %1400 = vmatpush2.msra.mxu0 0.0
      %1401 = vmatprep.subr.mxu0 0.0
      %1402 = vmatpush2.msra.mxu0 0.0
      %1403 = vmatprep.subr.mxu0 0.0
      %1404 = vmatpush2.msra.mxu0 0.0
      %1405 = vmatprep.subr.mxu0 0.0
      %1406 = vmatpush2.msra.mxu0 0.0
      %1407 = vmatprep.subr.mxu0 0.0
      %1408 = vmatpush2.msra.mxu0 0.0
      %1409 = vmatprep.subr.mxu0 0.0
      %1410 = vmatpush2.msra.mxu0 0.0
      %1411 = vmatprep.subr.mxu0 0.0
      %1412 = vmatpush2.msra.mxu0 0.0
      %1413 = vmatprep.subr.mxu0 0.0
      %1414 = vmatpush2.msra.mxu0 0.0
      %1415 = vmatprep.subr.mxu0 0.0
      %1416 = vmatpush2.msra.mxu0 0.0
      %1417 = vmatprep.mubr.f32.mxu0 0.0
      %1418 = vmatmul.mubr.f32.gmra.mxu0 %v1348
      %v1419 = vpop.f32.mrf.mxu0
      %v1420 = vadd.f32 0.0, %v1419
      %v1421 = vpop.f32.mrf.mxu0
      %1422 = vdwg.mxu0
      %v1424 = vsel %vm1346, %v1340, 0
      %v1426 = vsel %vm1350, %v1336, 0
      %1428 = vmatprep.subr.mxu0 0.0
      %1429 = vmatpush1.msra.mxu0 0.0
      %1430 = vmatprep.subr.mxu0 0.0
      %1431 = vmatpush1.msra.mxu0 0.0
      %1432 = vmatprep.subr.mxu0 0.0
      %1433 = vmatpush1.msra.mxu0 0.0
      %1434 = vmatprep.subr.mxu0 0.0
      %1435 = vmatpush1.msra.mxu0 0.0
      %1436 = vmatprep.subr.mxu0 0.0
      %1437 = vmatpush1.msra.mxu0 0.0
      %1438 = vmatprep.subr.mxu0 0.0
      %1439 = vmatpush1.msra.mxu0 0.0
      %1440 = vmatprep.subr.mxu0 0.0
      %1441 = vmatpush1.msra.mxu0 0.0
      %1442 = vmatprep.subr.mxu0 0.0
      %1443 = vmatpush1.msra.mxu0 0.0
      %1444 = vmatprep.subr.mxu0 0.0
      %1445 = vmatpush1.msra.mxu0 0.0
      %1446 = vmatprep.subr.mxu0 0.0
      %1447 = vmatpush1.msra.mxu0 0.0
      %1448 = vmatprep.subr.mxu0 0.0
      %1449 = vmatpush1.msra.mxu0 0.0
      %1450 = vmatprep.subr.mxu0 0.0
      %1451 = vmatpush1.msra.mxu0 0.0
      %1452 = vmatprep.subr.mxu0 0.0
      %1453 = vmatpush1.msra.mxu0 0.0
      %1454 = vmatprep.subr.mxu0 0.0
      %1455 = vmatpush1.msra.mxu0 0.0
      %1456 = vmatprep.subr.mxu0 0.0
      %1457 = vmatpush1.msra.mxu0 0.0
      %1458 = vmatprep.subr.mxu0 0.0
      %1459 = vmatpush1.msra.mxu0 %v1426
      %1460 = vmatprep.subr.mxu0 0.0
      %1461 = vmatpush2.msra.mxu0 0.0
      %1462 = vmatprep.subr.mxu0 0.0
      %1463 = vmatpush2.msra.mxu0 0.0
      %1464 = vmatprep.subr.mxu0 0.0
      %1465 = vmatpush2.msra.mxu0 0.0
      %1466 = vmatprep.subr.mxu0 0.0
      %1467 = vmatpush2.msra.mxu0 0.0
      %1468 = vmatprep.subr.mxu0 0.0
      %1469 = vmatpush2.msra.mxu0 0.0
      %1470 = vmatprep.subr.mxu0 0.0
      %1471 = vmatpush2.msra.mxu0 0.0
      %1472 = vmatprep.subr.mxu0 0.0
      %1473 = vmatpush2.msra.mxu0 0.0
      %1474 = vmatprep.subr.mxu0 0.0
      %1475 = vmatpush2.msra.mxu0 0.0
      %1476 = vmatprep.subr.mxu0 0.0
      %1477 = vmatpush2.msra.mxu0 0.0
      %1478 = vmatprep.subr.mxu0 0.0
      %1479 = vmatpush2.msra.mxu0 0.0
      %1480 = vmatprep.subr.mxu0 0.0
      %1481 = vmatpush2.msra.mxu0 0.0
      %1482 = vmatprep.subr.mxu0 0.0
      %1483 = vmatpush2.msra.mxu0 0.0
      %1484 = vmatprep.subr.mxu0 0.0
      %1485 = vmatpush2.msra.mxu0 0.0
      %1486 = vmatprep.subr.mxu0 0.0
      %1487 = vmatpush2.msra.mxu0 0.0
      %1488 = vmatprep.subr.mxu0 0.0
      %1489 = vmatpush2.msra.mxu0 0.0
      %1490 = vmatprep.subr.mxu0 0.0
      %1491 = vmatpush2.msra.mxu0 0.0
      %1492 = vmatprep.mubr.f32.mxu0 0.0
      %1493 = vmatmul.mubr.f32.gmra.mxu0 %v1424
      %v1494 = vpop.f32.mrf.mxu0
      %v1495 = vadd.f32 %v1420, %v1494
      %v1496 = vpop.f32.mrf.mxu0
      %1497 = vdwg.mxu0
      %s1498 = scalar_lea.vmem %s2, 16
      %v1499 = vld [vmem:[%s1498] sm:$0xff]
      %1500 = vrot.lane.b32.xlu0 %v1336, 126
      %v1501 = vpop.permute.xlu0 %1500
      %v1503 = vsel %vm1346, %v1499, 0
      %v1505 = vsel %vm1350, %v1501, 0
      %1507 = vmatprep.subr.mxu0 0.0
      %1508 = vmatpush1.msra.mxu0 0.0
      %1509 = vmatprep.subr.mxu0 0.0
      %1510 = vmatpush1.msra.mxu0 0.0
      %1511 = vmatprep.subr.mxu0 0.0
      %1512 = vmatpush1.msra.mxu0 0.0
      %1513 = vmatprep.subr.mxu0 0.0
      %1514 = vmatpush1.msra.mxu0 0.0
      %1515 = vmatprep.subr.mxu0 0.0
      %1516 = vmatpush1.msra.mxu0 0.0
      %1517 = vmatprep.subr.mxu0 0.0
      %1518 = vmatpush1.msra.mxu0 0.0
      %1519 = vmatprep.subr.mxu0 0.0
      %1520 = vmatpush1.msra.mxu0 0.0
      %1521 = vmatprep.subr.mxu0 0.0
      %1522 = vmatpush1.msra.mxu0 0.0
      %1523 = vmatprep.subr.mxu0 0.0
      %1524 = vmatpush1.msra.mxu0 0.0
      %1525 = vmatprep.subr.mxu0 0.0
      %1526 = vmatpush1.msra.mxu0 0.0
      %1527 = vmatprep.subr.mxu0 0.0
      %1528 = vmatpush1.msra.mxu0 0.0
      %1529 = vmatprep.subr.mxu0 0.0
      %1530 = vmatpush1.msra.mxu0 0.0
      %1531 = vmatprep.subr.mxu0 0.0
      %1532 = vmatpush1.msra.mxu0 0.0
      %1533 = vmatprep.subr.mxu0 0.0
      %1534 = vmatpush1.msra.mxu0 0.0
      %1535 = vmatprep.subr.mxu0 0.0
      %1536 = vmatpush1.msra.mxu0 0.0
      %1537 = vmatprep.subr.mxu0 0.0
      %1538 = vmatpush1.msra.mxu0 %v1505
      %1539 = vmatprep.subr.mxu0 0.0
      %1540 = vmatpush2.msra.mxu0 0.0
      %1541 = vmatprep.subr.mxu0 0.0
      %1542 = vmatpush2.msra.mxu0 0.0
      %1543 = vmatprep.subr.mxu0 0.0
      %1544 = vmatpush2.msra.mxu0 0.0
      %1545 = vmatprep.subr.mxu0 0.0
      %1546 = vmatpush2.msra.mxu0 0.0
      %1547 = vmatprep.subr.mxu0 0.0
      %1548 = vmatpush2.msra.mxu0 0.0
      %1549 = vmatprep.subr.mxu0 0.0
      %1550 = vmatpush2.msra.mxu0 0.0
      %1551 = vmatprep.subr.mxu0 0.0
      %1552 = vmatpush2.msra.mxu0 0.0
      %1553 = vmatprep.subr.mxu0 0.0
      %1554 = vmatpush2.msra.mxu0 0.0
      %1555 = vmatprep.subr.mxu0 0.0
      %1556 = vmatpush2.msra.mxu0 0.0
      %1557 = vmatprep.subr.mxu0 0.0
      %1558 = vmatpush2.msra.mxu0 0.0
      %1559 = vmatprep.subr.mxu0 0.0
      %1560 = vmatpush2.msra.mxu0 0.0
      %1561 = vmatprep.subr.mxu0 0.0
      %1562 = vmatpush2.msra.mxu0 0.0
      %1563 = vmatprep.subr.mxu0 0.0
      %1564 = vmatpush2.msra.mxu0 0.0
      %1565 = vmatprep.subr.mxu0 0.0
      %1566 = vmatpush2.msra.mxu0 0.0
      %1567 = vmatprep.subr.mxu0 0.0
      %1568 = vmatpush2.msra.mxu0 0.0
      %1569 = vmatprep.subr.mxu0 0.0
      %1570 = vmatpush2.msra.mxu0 0.0
      %1571 = vmatprep.mubr.f32.mxu0 0.0
      %1572 = vmatmul.mubr.f32.gmra.mxu0 %v1503
      %v1573 = vpop.f32.mrf.mxu0
      %v1574 = vadd.f32 0.0, %v1573
      %v1575 = vpop.f32.mrf.mxu0
      %1576 = vdwg.mxu0
      %v1577 = vadd.f32 %v1495, %v1574
      %s1578 = scalar_lea.vmem %s2, 24
      %v1579 = vld [vmem:[%s1578] sm:$0xff]
      %1580 = vrot.lane.b32.xlu0 %v1336, 125
      %v1581 = vpop.permute.xlu0 %1580
      %v1583 = vsel %vm1346, %v1579, 0
      %v1585 = vsel %vm1350, %v1581, 0
      %1587 = vmatprep.subr.mxu0 0.0
      %1588 = vmatpush1.msra.mxu0 0.0
      %1589 = vmatprep.subr.mxu0 0.0
      %1590 = vmatpush1.msra.mxu0 0.0
      %1591 = vmatprep.subr.mxu0 0.0
      %1592 = vmatpush1.msra.mxu0 0.0
      %1593 = vmatprep.subr.mxu0 0.0
      %1594 = vmatpush1.msra.mxu0 0.0
      %1595 = vmatprep.subr.mxu0 0.0
      %1596 = vmatpush1.msra.mxu0 0.0
      %1597 = vmatprep.subr.mxu0 0.0
      %1598 = vmatpush1.msra.mxu0 0.0
      %1599 = vmatprep.subr.mxu0 0.0
      %1600 = vmatpush1.msra.mxu0 0.0
      %1601 = vmatprep.subr.mxu0 0.0
      %1602 = vmatpush1.msra.mxu0 0.0
      %1603 = vmatprep.subr.mxu0 0.0
      %1604 = vmatpush1.msra.mxu0 0.0
      %1605 = vmatprep.subr.mxu0 0.0
      %1606 = vmatpush1.msra.mxu0 0.0
      %1607 = vmatprep.subr.mxu0 0.0
      %1608 = vmatpush1.msra.mxu0 0.0
      %1609 = vmatprep.subr.mxu0 0.0
      %1610 = vmatpush1.msra.mxu0 0.0
      %1611 = vmatprep.subr.mxu0 0.0
      %1612 = vmatpush1.msra.mxu0 0.0
      %1613 = vmatprep.subr.mxu0 0.0
      %1614 = vmatpush1.msra.mxu0 0.0
      %1615 = vmatprep.subr.mxu0 0.0
      %1616 = vmatpush1.msra.mxu0 0.0
      %1617 = vmatprep.subr.mxu0 0.0
      %1618 = vmatpush1.msra.mxu0 %v1585
      %1619 = vmatprep.subr.mxu0 0.0
      %1620 = vmatpush2.msra.mxu0 0.0
      %1621 = vmatprep.subr.mxu0 0.0
      %1622 = vmatpush2.msra.mxu0 0.0
      %1623 = vmatprep.subr.mxu0 0.0
      %1624 = vmatpush2.msra.mxu0 0.0
      %1625 = vmatprep.subr.mxu0 0.0
      %1626 = vmatpush2.msra.mxu0 0.0
      %1627 = vmatprep.subr.mxu0 0.0
      %1628 = vmatpush2.msra.mxu0 0.0
      %1629 = vmatprep.subr.mxu0 0.0
      %1630 = vmatpush2.msra.mxu0 0.0
      %1631 = vmatprep.subr.mxu0 0.0
      %1632 = vmatpush2.msra.mxu0 0.0
      %1633 = vmatprep.subr.mxu0 0.0
      %1634 = vmatpush2.msra.mxu0 0.0
      %1635 = vmatprep.subr.mxu0 0.0
      %1636 = vmatpush2.msra.mxu0 0.0
      %1637 = vmatprep.subr.mxu0 0.0
      %1638 = vmatpush2.msra.mxu0 0.0
      %1639 = vmatprep.subr.mxu0 0.0
      %1640 = vmatpush2.msra.mxu0 0.0
      %1641 = vmatprep.subr.mxu0 0.0
      %1642 = vmatpush2.msra.mxu0 0.0
      %1643 = vmatprep.subr.mxu0 0.0
      %1644 = vmatpush2.msra.mxu0 0.0
      %1645 = vmatprep.subr.mxu0 0.0
      %1646 = vmatpush2.msra.mxu0 0.0
      %1647 = vmatprep.subr.mxu0 0.0
      %1648 = vmatpush2.msra.mxu0 0.0
      %1649 = vmatprep.subr.mxu0 0.0
      %1650 = vmatpush2.msra.mxu0 0.0
      %1651 = vmatprep.mubr.f32.mxu0 0.0
      %1652 = vmatmul.mubr.f32.gmra.mxu0 %v1583
      %v1653 = vpop.f32.mrf.mxu0
      %v1654 = vadd.f32 0.0, %v1653
      %v1655 = vpop.f32.mrf.mxu0
      %1656 = vdwg.mxu0
      %v1657 = vadd.f32 %v1577, %v1654
      %s1658 = scalar_lea.vmem %s2, 32
      %v1659 = vld [vmem:[%s1658] sm:$0xff]
      %1660 = vrot.lane.b32.xlu0 %v1336, 124
      %v1661 = vpop.permute.xlu0 %1660
      %v1663 = vsel %vm1346, %v1659, 0
      %v1665 = vsel %vm1350, %v1661, 0
      %1667 = vmatprep.subr.mxu0 0.0
      %1668 = vmatpush1.msra.mxu0 0.0
      %1669 = vmatprep.subr.mxu0 0.0
      %1670 = vmatpush1.msra.mxu0 0.0
      %1671 = vmatprep.subr.mxu0 0.0
      %1672 = vmatpush1.msra.mxu0 0.0
      %1673 = vmatprep.subr.mxu0 0.0
      %1674 = vmatpush1.msra.mxu0 0.0
      %1675 = vmatprep.subr.mxu0 0.0
      %1676 = vmatpush1.msra.mxu0 0.0
      %1677 = vmatprep.subr.mxu0 0.0
      %1678 = vmatpush1.msra.mxu0 0.0
      %1679 = vmatprep.subr.mxu0 0.0
      %1680 = vmatpush1.msra.mxu0 0.0
      %1681 = vmatprep.subr.mxu0 0.0
      %1682 = vmatpush1.msra.mxu0 0.0
      %1683 = vmatprep.subr.mxu0 0.0
      %1684 = vmatpush1.msra.mxu0 0.0
      %1685 = vmatprep.subr.mxu0 0.0
      %1686 = vmatpush1.msra.mxu0 0.0
      %1687 = vmatprep.subr.mxu0 0.0
      %1688 = vmatpush1.msra.mxu0 0.0
      %1689 = vmatprep.subr.mxu0 0.0
      %1690 = vmatpush1.msra.mxu0 0.0
      %1691 = vmatprep.subr.mxu0 0.0
      %1692 = vmatpush1.msra.mxu0 0.0
      %1693 = vmatprep.subr.mxu0 0.0
      %1694 = vmatpush1.msra.mxu0 0.0
      %1695 = vmatprep.subr.mxu0 0.0
      %1696 = vmatpush1.msra.mxu0 0.0
      %1697 = vmatprep.subr.mxu0 0.0
      %1698 = vmatpush1.msra.mxu0 %v1665
      %1699 = vmatprep.subr.mxu0 0.0
      %1700 = vmatpush2.msra.mxu0 0.0
      %1701 = vmatprep.subr.mxu0 0.0
      %1702 = vmatpush2.msra.mxu0 0.0
      %1703 = vmatprep.subr.mxu0 0.0
      %1704 = vmatpush2.msra.mxu0 0.0
      %1705 = vmatprep.subr.mxu0 0.0
      %1706 = vmatpush2.msra.mxu0 0.0
      %1707 = vmatprep.subr.mxu0 0.0
      %1708 = vmatpush2.msra.mxu0 0.0
      %1709 = vmatprep.subr.mxu0 0.0
      %1710 = vmatpush2.msra.mxu0 0.0
      %1711 = vmatprep.subr.mxu0 0.0
      %1712 = vmatpush2.msra.mxu0 0.0
      %1713 = vmatprep.subr.mxu0 0.0
      %1714 = vmatpush2.msra.mxu0 0.0
      %1715 = vmatprep.subr.mxu0 0.0
      %1716 = vmatpush2.msra.mxu0 0.0
      %1717 = vmatprep.subr.mxu0 0.0
      %1718 = vmatpush2.msra.mxu0 0.0
      %1719 = vmatprep.subr.mxu0 0.0
      %1720 = vmatpush2.msra.mxu0 0.0
      %1721 = vmatprep.subr.mxu0 0.0
      %1722 = vmatpush2.msra.mxu0 0.0
      %1723 = vmatprep.subr.mxu0 0.0
      %1724 = vmatpush2.msra.mxu0 0.0
      %1725 = vmatprep.subr.mxu0 0.0
      %1726 = vmatpush2.msra.mxu0 0.0
      %1727 = vmatprep.subr.mxu0 0.0
      %1728 = vmatpush2.msra.mxu0 0.0
      %1729 = vmatprep.subr.mxu0 0.0
      %1730 = vmatpush2.msra.mxu0 0.0
      %1731 = vmatprep.mubr.f32.mxu0 0.0
      %1732 = vmatmul.mubr.f32.gmra.mxu0 %v1663
      %v1733 = vpop.f32.mrf.mxu0
      %v1734 = vadd.f32 0.0, %v1733
      %v1735 = vpop.f32.mrf.mxu0
      %1736 = vdwg.mxu0
      %v1737 = vadd.f32 %v1657, %v1734
      %s1738 = scalar_lea.vmem %s2, 40
      %v1739 = vld [vmem:[%s1738] sm:$0xff]
      %1740 = vrot.lane.b32.xlu0 %v1336, 116
      %v1741 = vpop.permute.xlu0 %1740
      %v1743 = vsel %vm1346, %v1739, 0
      %v1745 = vsel %vm1350, %v1741, 0
      %1747 = vmatprep.subr.mxu0 0.0
      %1748 = vmatpush1.msra.mxu0 0.0
      %1749 = vmatprep.subr.mxu0 0.0
      %1750 = vmatpush1.msra.mxu0 0.0
      %1751 = vmatprep.subr.mxu0 0.0
      %1752 = vmatpush1.msra.mxu0 0.0
      %1753 = vmatprep.subr.mxu0 0.0
      %1754 = vmatpush1.msra.mxu0 0.0
      %1755 = vmatprep.subr.mxu0 0.0
      %1756 = vmatpush1.msra.mxu0 0.0
      %1757 = vmatprep.subr.mxu0 0.0
      %1758 = vmatpush1.msra.mxu0 0.0
      %1759 = vmatprep.subr.mxu0 0.0
      %1760 = vmatpush1.msra.mxu0 0.0
      %1761 = vmatprep.subr.mxu0 0.0
      %1762 = vmatpush1.msra.mxu0 0.0
      %1763 = vmatprep.subr.mxu0 0.0
      %1764 = vmatpush1.msra.mxu0 0.0
      %1765 = vmatprep.subr.mxu0 0.0
      %1766 = vmatpush1.msra.mxu0 0.0
      %1767 = vmatprep.subr.mxu0 0.0
      %1768 = vmatpush1.msra.mxu0 0.0
      %1769 = vmatprep.subr.mxu0 0.0
      %1770 = vmatpush1.msra.mxu0 0.0
      %1771 = vmatprep.subr.mxu0 0.0
      %1772 = vmatpush1.msra.mxu0 0.0
      %1773 = vmatprep.subr.mxu0 0.0
      %1774 = vmatpush1.msra.mxu0 0.0
      %1775 = vmatprep.subr.mxu0 0.0
      %1776 = vmatpush1.msra.mxu0 0.0
      %1777 = vmatprep.subr.mxu0 0.0
      %1778 = vmatpush1.msra.mxu0 %v1745
      %1779 = vmatprep.subr.mxu0 0.0
      %1780 = vmatpush2.msra.mxu0 0.0
      %1781 = vmatprep.subr.mxu0 0.0
      %1782 = vmatpush2.msra.mxu0 0.0
      %1783 = vmatprep.subr.mxu0 0.0
      %1784 = vmatpush2.msra.mxu0 0.0
      %1785 = vmatprep.subr.mxu0 0.0
      %1786 = vmatpush2.msra.mxu0 0.0
      %1787 = vmatprep.subr.mxu0 0.0
      %1788 = vmatpush2.msra.mxu0 0.0
      %1789 = vmatprep.subr.mxu0 0.0
      %1790 = vmatpush2.msra.mxu0 0.0
      %1791 = vmatprep.subr.mxu0 0.0
      %1792 = vmatpush2.msra.mxu0 0.0
      %1793 = vmatprep.subr.mxu0 0.0
      %1794 = vmatpush2.msra.mxu0 0.0
      %1795 = vmatprep.subr.mxu0 0.0
      %1796 = vmatpush2.msra.mxu0 0.0
      %1797 = vmatprep.subr.mxu0 0.0
      %1798 = vmatpush2.msra.mxu0 0.0
      %1799 = vmatprep.subr.mxu0 0.0
      %1800 = vmatpush2.msra.mxu0 0.0
      %1801 = vmatprep.subr.mxu0 0.0
      %1802 = vmatpush2.msra.mxu0 0.0
      %1803 = vmatprep.subr.mxu0 0.0
      %1804 = vmatpush2.msra.mxu0 0.0
      %1805 = vmatprep.subr.mxu0 0.0
      %1806 = vmatpush2.msra.mxu0 0.0
      %1807 = vmatprep.subr.mxu0 0.0
      %1808 = vmatpush2.msra.mxu0 0.0
      %1809 = vmatprep.subr.mxu0 0.0
      %1810 = vmatpush2.msra.mxu0 0.0
      %1811 = vmatprep.mubr.f32.mxu0 0.0
      %1812 = vmatmul.mubr.f32.gmra.mxu0 %v1743
      %v1813 = vpop.f32.mrf.mxu0
      %v1814 = vadd.f32 0.0, %v1813
      %v1815 = vpop.f32.mrf.mxu0
      %1816 = vdwg.mxu0
      %v1817 = vadd.f32 %v1737, %v1814
      %s1818 = scalar_lea.vmem %s2, 48
      %v1819 = vld [vmem:[%s1818] sm:$0xff]
      %1820 = vrot.lane.b32.xlu0 %v1336, 115
      %v1821 = vpop.permute.xlu0 %1820
      %v1823 = vsel %vm1346, %v1819, 0
      %v1825 = vsel %vm1350, %v1821, 0
      %1827 = vmatprep.subr.mxu0 0.0
      %1828 = vmatpush1.msra.mxu0 0.0
      %1829 = vmatprep.subr.mxu0 0.0
      %1830 = vmatpush1.msra.mxu0 0.0
      %1831 = vmatprep.subr.mxu0 0.0
      %1832 = vmatpush1.msra.mxu0 0.0
      %1833 = vmatprep.subr.mxu0 0.0
      %1834 = vmatpush1.msra.mxu0 0.0
      %1835 = vmatprep.subr.mxu0 0.0
      %1836 = vmatpush1.msra.mxu0 0.0
      %1837 = vmatprep.subr.mxu0 0.0
      %1838 = vmatpush1.msra.mxu0 0.0
      %1839 = vmatprep.subr.mxu0 0.0
      %1840 = vmatpush1.msra.mxu0 0.0
      %1841 = vmatprep.subr.mxu0 0.0
      %1842 = vmatpush1.msra.mxu0 0.0
      %1843 = vmatprep.subr.mxu0 0.0
      %1844 = vmatpush1.msra.mxu0 0.0
      %1845 = vmatprep.subr.mxu0 0.0
      %1846 = vmatpush1.msra.mxu0 0.0
      %1847 = vmatprep.subr.mxu0 0.0
      %1848 = vmatpush1.msra.mxu0 0.0
      %1849 = vmatprep.subr.mxu0 0.0
      %1850 = vmatpush1.msra.mxu0 0.0
      %1851 = vmatprep.subr.mxu0 0.0
      %1852 = vmatpush1.msra.mxu0 0.0
      %1853 = vmatprep.subr.mxu0 0.0
      %1854 = vmatpush1.msra.mxu0 0.0
      %1855 = vmatprep.subr.mxu0 0.0
      %1856 = vmatpush1.msra.mxu0 0.0
      %1857 = vmatprep.subr.mxu0 0.0
      %1858 = vmatpush1.msra.mxu0 %v1825
      %1859 = vmatprep.subr.mxu0 0.0
      %1860 = vmatpush2.msra.mxu0 0.0
      %1861 = vmatprep.subr.mxu0 0.0
      %1862 = vmatpush2.msra.mxu0 0.0
      %1863 = vmatprep.subr.mxu0 0.0
      %1864 = vmatpush2.msra.mxu0 0.0
      %1865 = vmatprep.subr.mxu0 0.0
      %1866 = vmatpush2.msra.mxu0 0.0
      %1867 = vmatprep.subr.mxu0 0.0
      %1868 = vmatpush2.msra.mxu0 0.0
      %1869 = vmatprep.subr.mxu0 0.0
      %1870 = vmatpush2.msra.mxu0 0.0
      %1871 = vmatprep.subr.mxu0 0.0
      %1872 = vmatpush2.msra.mxu0 0.0
      %1873 = vmatprep.subr.mxu0 0.0
      %1874 = vmatpush2.msra.mxu0 0.0
      %1875 = vmatprep.subr.mxu0 0.0
      %1876 = vmatpush2.msra.mxu0 0.0
      %1877 = vmatprep.subr.mxu0 0.0
      %1878 = vmatpush2.msra.mxu0 0.0
      %1879 = vmatprep.subr.mxu0 0.0
      %1880 = vmatpush2.msra.mxu0 0.0
      %1881 = vmatprep.subr.mxu0 0.0
      %1882 = vmatpush2.msra.mxu0 0.0
      %1883 = vmatprep.subr.mxu0 0.0
      %1884 = vmatpush2.msra.mxu0 0.0
      %1885 = vmatprep.subr.mxu0 0.0
      %1886 = vmatpush2.msra.mxu0 0.0
      %1887 = vmatprep.subr.mxu0 0.0
      %1888 = vmatpush2.msra.mxu0 0.0
      %1889 = vmatprep.subr.mxu0 0.0
      %1890 = vmatpush2.msra.mxu0 0.0
      %1891 = vmatprep.mubr.f32.mxu0 0.0
      %1892 = vmatmul.mubr.f32.gmra.mxu0 %v1823
      %v1893 = vpop.f32.mrf.mxu0
      %v1894 = vadd.f32 0.0, %v1893
      %v1895 = vpop.f32.mrf.mxu0
      %1896 = vdwg.mxu0
      %v1897 = vadd.f32 %v1817, %v1894
      %s1898 = scalar_lea.vmem %s2, 56
      %v1899 = vld [vmem:[%s1898] sm:$0xff]
      %1900 = vrot.lane.b32.xlu0 %v1336, 114
      %v1901 = vpop.permute.xlu0 %1900
      %v1903 = vsel %vm1346, %v1899, 0
      %v1905 = vsel %vm1350, %v1901, 0
      %1907 = vmatprep.subr.mxu0 0.0
      %1908 = vmatpush1.msra.mxu0 0.0
      %1909 = vmatprep.subr.mxu0 0.0
      %1910 = vmatpush1.msra.mxu0 0.0
      %1911 = vmatprep.subr.mxu0 0.0
      %1912 = vmatpush1.msra.mxu0 0.0
      %1913 = vmatprep.subr.mxu0 0.0
      %1914 = vmatpush1.msra.mxu0 0.0
      %1915 = vmatprep.subr.mxu0 0.0
      %1916 = vmatpush1.msra.mxu0 0.0
      %1917 = vmatprep.subr.mxu0 0.0
      %1918 = vmatpush1.msra.mxu0 0.0
      %1919 = vmatprep.subr.mxu0 0.0
      %1920 = vmatpush1.msra.mxu0 0.0
      %1921 = vmatprep.subr.mxu0 0.0
      %1922 = vmatpush1.msra.mxu0 0.0
      %1923 = vmatprep.subr.mxu0 0.0
      %1924 = vmatpush1.msra.mxu0 0.0
      %1925 = vmatprep.subr.mxu0 0.0
      %1926 = vmatpush1.msra.mxu0 0.0
      %1927 = vmatprep.subr.mxu0 0.0
      %1928 = vmatpush1.msra.mxu0 0.0
      %1929 = vmatprep.subr.mxu0 0.0
      %1930 = vmatpush1.msra.mxu0 0.0
      %1931 = vmatprep.subr.mxu0 0.0
      %1932 = vmatpush1.msra.mxu0 0.0
      %1933 = vmatprep.subr.mxu0 0.0
      %1934 = vmatpush1.msra.mxu0 0.0
      %1935 = vmatprep.subr.mxu0 0.0
      %1936 = vmatpush1.msra.mxu0 0.0
      %1937 = vmatprep.subr.mxu0 0.0
      %1938 = vmatpush1.msra.mxu0 %v1905
      %1939 = vmatprep.subr.mxu0 0.0
      %1940 = vmatpush2.msra.mxu0 0.0
      %1941 = vmatprep.subr.mxu0 0.0
      %1942 = vmatpush2.msra.mxu0 0.0
      %1943 = vmatprep.subr.mxu0 0.0
      %1944 = vmatpush2.msra.mxu0 0.0
      %1945 = vmatprep.subr.mxu0 0.0
      %1946 = vmatpush2.msra.mxu0 0.0
      %1947 = vmatprep.subr.mxu0 0.0
      %1948 = vmatpush2.msra.mxu0 0.0
      %1949 = vmatprep.subr.mxu0 0.0
      %1950 = vmatpush2.msra.mxu0 0.0
      %1951 = vmatprep.subr.mxu0 0.0
      %1952 = vmatpush2.msra.mxu0 0.0
      %1953 = vmatprep.subr.mxu0 0.0
      %1954 = vmatpush2.msra.mxu0 0.0
      %1955 = vmatprep.subr.mxu0 0.0
      %1956 = vmatpush2.msra.mxu0 0.0
      %1957 = vmatprep.subr.mxu0 0.0
      %1958 = vmatpush2.msra.mxu0 0.0
      %1959 = vmatprep.subr.mxu0 0.0
      %1960 = vmatpush2.msra.mxu0 0.0
      %1961 = vmatprep.subr.mxu0 0.0
      %1962 = vmatpush2.msra.mxu0 0.0
      %1963 = vmatprep.subr.mxu0 0.0
      %1964 = vmatpush2.msra.mxu0 0.0
      %1965 = vmatprep.subr.mxu0 0.0
      %1966 = vmatpush2.msra.mxu0 0.0
      %1967 = vmatprep.subr.mxu0 0.0
      %1968 = vmatpush2.msra.mxu0 0.0
      %1969 = vmatprep.subr.mxu0 0.0
      %1970 = vmatpush2.msra.mxu0 0.0
      %1971 = vmatprep.mubr.f32.mxu0 0.0
      %1972 = vmatmul.mubr.f32.gmra.mxu0 %v1903
      %v1973 = vpop.f32.mrf.mxu0
      %v1974 = vadd.f32 0.0, %v1973
      %v1975 = vpop.f32.mrf.mxu0
      %1976 = vdwg.mxu0
      %v1977 = vadd.f32 %v1897, %v1974
      %s1978 = scalar_lea.vmem %s2, 64
      %v1979 = vld [vmem:[%s1978] sm:$0xff]
      %1980 = vrot.lane.b32.xlu0 %v1336, 113
      %v1981 = vpop.permute.xlu0 %1980
      %v1983 = vsel %vm1346, %v1979, 0
      %v1985 = vsel %vm1350, %v1981, 0
      %1987 = vmatprep.subr.mxu0 0.0
      %1988 = vmatpush1.msra.mxu0 0.0
      %1989 = vmatprep.subr.mxu0 0.0
      %1990 = vmatpush1.msra.mxu0 0.0
      %1991 = vmatprep.subr.mxu0 0.0
      %1992 = vmatpush1.msra.mxu0 0.0
      %1993 = vmatprep.subr.mxu0 0.0
      %1994 = vmatpush1.msra.mxu0 0.0
      %1995 = vmatprep.subr.mxu0 0.0
      %1996 = vmatpush1.msra.mxu0 0.0
      %1997 = vmatprep.subr.mxu0 0.0
      %1998 = vmatpush1.msra.mxu0 0.0
      %1999 = vmatprep.subr.mxu0 0.0
      %2000 = vmatpush1.msra.mxu0 0.0
      %2001 = vmatprep.subr.mxu0 0.0
      %2002 = vmatpush1.msra.mxu0 0.0
      %2003 = vmatprep.subr.mxu0 0.0
      %2004 = vmatpush1.msra.mxu0 0.0
      %2005 = vmatprep.subr.mxu0 0.0
      %2006 = vmatpush1.msra.mxu0 0.0
      %2007 = vmatprep.subr.mxu0 0.0
      %2008 = vmatpush1.msra.mxu0 0.0
      %2009 = vmatprep.subr.mxu0 0.0
      %2010 = vmatpush1.msra.mxu0 0.0
      %2011 = vmatprep.subr.mxu0 0.0
      %2012 = vmatpush1.msra.mxu0 0.0
      %2013 = vmatprep.subr.mxu0 0.0
      %2014 = vmatpush1.msra.mxu0 0.0
      %2015 = vmatprep.subr.mxu0 0.0
      %2016 = vmatpush1.msra.mxu0 0.0
      %2017 = vmatprep.subr.mxu0 0.0
      %2018 = vmatpush1.msra.mxu0 %v1985
      %2019 = vmatprep.subr.mxu0 0.0
      %2020 = vmatpush2.msra.mxu0 0.0
      %2021 = vmatprep.subr.mxu0 0.0
      %2022 = vmatpush2.msra.mxu0 0.0
      %2023 = vmatprep.subr.mxu0 0.0
      %2024 = vmatpush2.msra.mxu0 0.0
      %2025 = vmatprep.subr.mxu0 0.0
      %2026 = vmatpush2.msra.mxu0 0.0
      %2027 = vmatprep.subr.mxu0 0.0
      %2028 = vmatpush2.msra.mxu0 0.0
      %2029 = vmatprep.subr.mxu0 0.0
      %2030 = vmatpush2.msra.mxu0 0.0
      %2031 = vmatprep.subr.mxu0 0.0
      %2032 = vmatpush2.msra.mxu0 0.0
      %2033 = vmatprep.subr.mxu0 0.0
      %2034 = vmatpush2.msra.mxu0 0.0
      %2035 = vmatprep.subr.mxu0 0.0
      %2036 = vmatpush2.msra.mxu0 0.0
      %2037 = vmatprep.subr.mxu0 0.0
      %2038 = vmatpush2.msra.mxu0 0.0
      %2039 = vmatprep.subr.mxu0 0.0
      %2040 = vmatpush2.msra.mxu0 0.0
      %2041 = vmatprep.subr.mxu0 0.0
      %2042 = vmatpush2.msra.mxu0 0.0
      %2043 = vmatprep.subr.mxu0 0.0
      %2044 = vmatpush2.msra.mxu0 0.0
      %2045 = vmatprep.subr.mxu0 0.0
      %2046 = vmatpush2.msra.mxu0 0.0
      %2047 = vmatprep.subr.mxu0 0.0
      %2048 = vmatpush2.msra.mxu0 0.0
      %2049 = vmatprep.subr.mxu0 0.0
      %2050 = vmatpush2.msra.mxu0 0.0
      %2051 = vmatprep.mubr.f32.mxu0 0.0
      %2052 = vmatmul.mubr.f32.gmra.mxu0 %v1983
      %v2053 = vpop.f32.mrf.mxu0
      %v2054 = vadd.f32 0.0, %v2053
      %v2055 = vpop.f32.mrf.mxu0
      %2056 = vdwg.mxu0
      %v2057 = vadd.f32 %v1977, %v2054
      %s2058 = scalar_lea.vmem %s2, 72
      %v2059 = vld [vmem:[%s2058] sm:$0xff]
      %2060 = vrot.lane.b32.xlu0 %v1336, 112
      %v2061 = vpop.permute.xlu0 %2060
      %v2063 = vsel %vm1346, %v2059, 0
      %v2065 = vsel %vm1350, %v2061, 0
      %2067 = vmatprep.subr.mxu0 0.0
      %2068 = vmatpush1.msra.mxu0 0.0
      %2069 = vmatprep.subr.mxu0 0.0
      %2070 = vmatpush1.msra.mxu0 0.0
      %2071 = vmatprep.subr.mxu0 0.0
      %2072 = vmatpush1.msra.mxu0 0.0
      %2073 = vmatprep.subr.mxu0 0.0
      %2074 = vmatpush1.msra.mxu0 0.0
      %2075 = vmatprep.subr.mxu0 0.0
      %2076 = vmatpush1.msra.mxu0 0.0
      %2077 = vmatprep.subr.mxu0 0.0
      %2078 = vmatpush1.msra.mxu0 0.0
      %2079 = vmatprep.subr.mxu0 0.0
      %2080 = vmatpush1.msra.mxu0 0.0
      %2081 = vmatprep.subr.mxu0 0.0
      %2082 = vmatpush1.msra.mxu0 0.0
      %2083 = vmatprep.subr.mxu0 0.0
      %2084 = vmatpush1.msra.mxu0 0.0
      %2085 = vmatprep.subr.mxu0 0.0
      %2086 = vmatpush1.msra.mxu0 0.0
      %2087 = vmatprep.subr.mxu0 0.0
      %2088 = vmatpush1.msra.mxu0 0.0
      %2089 = vmatprep.subr.mxu0 0.0
      %2090 = vmatpush1.msra.mxu0 0.0
      %2091 = vmatprep.subr.mxu0 0.0
      %2092 = vmatpush1.msra.mxu0 0.0
      %2093 = vmatprep.subr.mxu0 0.0
      %2094 = vmatpush1.msra.mxu0 0.0
      %2095 = vmatprep.subr.mxu0 0.0
      %2096 = vmatpush1.msra.mxu0 0.0
      %2097 = vmatprep.subr.mxu0 0.0
      %2098 = vmatpush1.msra.mxu0 %v2065
      %2099 = vmatprep.subr.mxu0 0.0
      %2100 = vmatpush2.msra.mxu0 0.0
      %2101 = vmatprep.subr.mxu0 0.0
      %2102 = vmatpush2.msra.mxu0 0.0
      %2103 = vmatprep.subr.mxu0 0.0
      %2104 = vmatpush2.msra.mxu0 0.0
      %2105 = vmatprep.subr.mxu0 0.0
      %2106 = vmatpush2.msra.mxu0 0.0
      %2107 = vmatprep.subr.mxu0 0.0
      %2108 = vmatpush2.msra.mxu0 0.0
      %2109 = vmatprep.subr.mxu0 0.0
      %2110 = vmatpush2.msra.mxu0 0.0
      %2111 = vmatprep.subr.mxu0 0.0
      %2112 = vmatpush2.msra.mxu0 0.0
      %2113 = vmatprep.subr.mxu0 0.0
      %2114 = vmatpush2.msra.mxu0 0.0
      %2115 = vmatprep.subr.mxu0 0.0
      %2116 = vmatpush2.msra.mxu0 0.0
      %2117 = vmatprep.subr.mxu0 0.0
      %2118 = vmatpush2.msra.mxu0 0.0
      %2119 = vmatprep.subr.mxu0 0.0
      %2120 = vmatpush2.msra.mxu0 0.0
      %2121 = vmatprep.subr.mxu0 0.0
      %2122 = vmatpush2.msra.mxu0 0.0
      %2123 = vmatprep.subr.mxu0 0.0
      %2124 = vmatpush2.msra.mxu0 0.0
      %2125 = vmatprep.subr.mxu0 0.0
      %2126 = vmatpush2.msra.mxu0 0.0
      %2127 = vmatprep.subr.mxu0 0.0
      %2128 = vmatpush2.msra.mxu0 0.0
      %2129 = vmatprep.subr.mxu0 0.0
      %2130 = vmatpush2.msra.mxu0 0.0
      %2131 = vmatprep.mubr.f32.mxu0 0.0
      %2132 = vmatmul.mubr.f32.gmra.mxu0 %v2063
      %v2133 = vpop.f32.mrf.mxu0
      %v2134 = vadd.f32 0.0, %v2133
      %v2135 = vpop.f32.mrf.mxu0
      %2136 = vdwg.mxu0
      %v2137 = vadd.f32 %v2057, %v2134
      %s2138 = scalar_lea.vmem %s2, 80
      %v2139 = vld [vmem:[%s2138] sm:$0xff]
      %2140 = vrot.lane.b32.xlu0 %v1336, 104
      %v2141 = vpop.permute.xlu0 %2140
      %v2143 = vsel %vm1346, %v2139, 0
      %v2145 = vsel %vm1350, %v2141, 0
      %2147 = vmatprep.subr.mxu0 0.0
      %2148 = vmatpush1.msra.mxu0 0.0
      %2149 = vmatprep.subr.mxu0 0.0
      %2150 = vmatpush1.msra.mxu0 0.0
      %2151 = vmatprep.subr.mxu0 0.0
      %2152 = vmatpush1.msra.mxu0 0.0
      %2153 = vmatprep.subr.mxu0 0.0
      %2154 = vmatpush1.msra.mxu0 0.0
      %2155 = vmatprep.subr.mxu0 0.0
      %2156 = vmatpush1.msra.mxu0 0.0
      %2157 = vmatprep.subr.mxu0 0.0
      %2158 = vmatpush1.msra.mxu0 0.0
      %2159 = vmatprep.subr.mxu0 0.0
      %2160 = vmatpush1.msra.mxu0 0.0
      %2161 = vmatprep.subr.mxu0 0.0
      %2162 = vmatpush1.msra.mxu0 0.0
      %2163 = vmatprep.subr.mxu0 0.0
      %2164 = vmatpush1.msra.mxu0 0.0
      %2165 = vmatprep.subr.mxu0 0.0
      %2166 = vmatpush1.msra.mxu0 0.0
      %2167 = vmatprep.subr.mxu0 0.0
      %2168 = vmatpush1.msra.mxu0 0.0
      %2169 = vmatprep.subr.mxu0 0.0
      %2170 = vmatpush1.msra.mxu0 0.0
      %2171 = vmatprep.subr.mxu0 0.0
      %2172 = vmatpush1.msra.mxu0 0.0
      %2173 = vmatprep.subr.mxu0 0.0
      %2174 = vmatpush1.msra.mxu0 0.0
      %2175 = vmatprep.subr.mxu0 0.0
      %2176 = vmatpush1.msra.mxu0 0.0
      %2177 = vmatprep.subr.mxu0 0.0
      %2178 = vmatpush1.msra.mxu0 %v2145
      %2179 = vmatprep.subr.mxu0 0.0
      %2180 = vmatpush2.msra.mxu0 0.0
      %2181 = vmatprep.subr.mxu0 0.0
      %2182 = vmatpush2.msra.mxu0 0.0
      %2183 = vmatprep.subr.mxu0 0.0
      %2184 = vmatpush2.msra.mxu0 0.0
      %2185 = vmatprep.subr.mxu0 0.0
      %2186 = vmatpush2.msra.mxu0 0.0
      %2187 = vmatprep.subr.mxu0 0.0
      %2188 = vmatpush2.msra.mxu0 0.0
      %2189 = vmatprep.subr.mxu0 0.0
      %2190 = vmatpush2.msra.mxu0 0.0
      %2191 = vmatprep.subr.mxu0 0.0
      %2192 = vmatpush2.msra.mxu0 0.0
      %2193 = vmatprep.subr.mxu0 0.0
      %2194 = vmatpush2.msra.mxu0 0.0
      %2195 = vmatprep.subr.mxu0 0.0
      %2196 = vmatpush2.msra.mxu0 0.0
      %2197 = vmatprep.subr.mxu0 0.0
      %2198 = vmatpush2.msra.mxu0 0.0
      %2199 = vmatprep.subr.mxu0 0.0
      %2200 = vmatpush2.msra.mxu0 0.0
      %2201 = vmatprep.subr.mxu0 0.0
      %2202 = vmatpush2.msra.mxu0 0.0
      %2203 = vmatprep.subr.mxu0 0.0
      %2204 = vmatpush2.msra.mxu0 0.0
      %2205 = vmatprep.subr.mxu0 0.0
      %2206 = vmatpush2.msra.mxu0 0.0
      %2207 = vmatprep.subr.mxu0 0.0
      %2208 = vmatpush2.msra.mxu0 0.0
      %2209 = vmatprep.subr.mxu0 0.0
      %2210 = vmatpush2.msra.mxu0 0.0
      %2211 = vmatprep.mubr.f32.mxu0 0.0
      %2212 = vmatmul.mubr.f32.gmra.mxu0 %v2143
      %v2213 = vpop.f32.mrf.mxu0
      %v2214 = vadd.f32 0.0, %v2213
      %v2215 = vpop.f32.mrf.mxu0
      %2216 = vdwg.mxu0
      %v2217 = vadd.f32 %v2137, %v2214
      %s2218 = scalar_lea.vmem %s2, 88
      %v2219 = vld [vmem:[%s2218] sm:$0xff]
      %2220 = vrot.lane.b32.xlu0 %v1336, 103
      %v2221 = vpop.permute.xlu0 %2220
      %v2223 = vsel %vm1346, %v2219, 0
      %v2225 = vsel %vm1350, %v2221, 0
      %2227 = vmatprep.subr.mxu0 0.0
      %2228 = vmatpush1.msra.mxu0 0.0
      %2229 = vmatprep.subr.mxu0 0.0
      %2230 = vmatpush1.msra.mxu0 0.0
      %2231 = vmatprep.subr.mxu0 0.0
      %2232 = vmatpush1.msra.mxu0 0.0
      %2233 = vmatprep.subr.mxu0 0.0
      %2234 = vmatpush1.msra.mxu0 0.0
      %2235 = vmatprep.subr.mxu0 0.0
      %2236 = vmatpush1.msra.mxu0 0.0
      %2237 = vmatprep.subr.mxu0 0.0
      %2238 = vmatpush1.msra.mxu0 0.0
      %2239 = vmatprep.subr.mxu0 0.0
      %2240 = vmatpush1.msra.mxu0 0.0
      %2241 = vmatprep.subr.mxu0 0.0
      %2242 = vmatpush1.msra.mxu0 0.0
      %2243 = vmatprep.subr.mxu0 0.0
      %2244 = vmatpush1.msra.mxu0 0.0
      %2245 = vmatprep.subr.mxu0 0.0
      %2246 = vmatpush1.msra.mxu0 0.0
      %2247 = vmatprep.subr.mxu0 0.0
      %2248 = vmatpush1.msra.mxu0 0.0
      %2249 = vmatprep.subr.mxu0 0.0
      %2250 = vmatpush1.msra.mxu0 0.0
      %2251 = vmatprep.subr.mxu0 0.0
      %2252 = vmatpush1.msra.mxu0 0.0
      %2253 = vmatprep.subr.mxu0 0.0
      %2254 = vmatpush1.msra.mxu0 0.0
      %2255 = vmatprep.subr.mxu0 0.0
      %2256 = vmatpush1.msra.mxu0 0.0
      %2257 = vmatprep.subr.mxu0 0.0
      %2258 = vmatpush1.msra.mxu0 %v2225
      %2259 = vmatprep.subr.mxu0 0.0
      %2260 = vmatpush2.msra.mxu0 0.0
      %2261 = vmatprep.subr.mxu0 0.0
      %2262 = vmatpush2.msra.mxu0 0.0
      %2263 = vmatprep.subr.mxu0 0.0
      %2264 = vmatpush2.msra.mxu0 0.0
      %2265 = vmatprep.subr.mxu0 0.0
      %2266 = vmatpush2.msra.mxu0 0.0
      %2267 = vmatprep.subr.mxu0 0.0
      %2268 = vmatpush2.msra.mxu0 0.0
      %2269 = vmatprep.subr.mxu0 0.0
      %2270 = vmatpush2.msra.mxu0 0.0
      %2271 = vmatprep.subr.mxu0 0.0
      %2272 = vmatpush2.msra.mxu0 0.0
      %2273 = vmatprep.subr.mxu0 0.0
      %2274 = vmatpush2.msra.mxu0 0.0
      %2275 = vmatprep.subr.mxu0 0.0
      %2276 = vmatpush2.msra.mxu0 0.0
      %2277 = vmatprep.subr.mxu0 0.0
      %2278 = vmatpush2.msra.mxu0 0.0
      %2279 = vmatprep.subr.mxu0 0.0
      %2280 = vmatpush2.msra.mxu0 0.0
      %2281 = vmatprep.subr.mxu0 0.0
      %2282 = vmatpush2.msra.mxu0 0.0
      %2283 = vmatprep.subr.mxu0 0.0
      %2284 = vmatpush2.msra.mxu0 0.0
      %2285 = vmatprep.subr.mxu0 0.0
      %2286 = vmatpush2.msra.mxu0 0.0
      %2287 = vmatprep.subr.mxu0 0.0
      %2288 = vmatpush2.msra.mxu0 0.0
      %2289 = vmatprep.subr.mxu0 0.0
      %2290 = vmatpush2.msra.mxu0 0.0
      %2291 = vmatprep.mubr.f32.mxu0 0.0
      %2292 = vmatmul.mubr.f32.gmra.mxu0 %v2223
      %v2293 = vpop.f32.mrf.mxu0
      %v2294 = vadd.f32 0.0, %v2293
      %v2295 = vpop.f32.mrf.mxu0
      %2296 = vdwg.mxu0
      %v2297 = vadd.f32 %v2217, %v2294
      %s2298 = scalar_lea.vmem %s2, 96
      %v2299 = vld [vmem:[%s2298] sm:$0xff]
      %2300 = vrot.lane.b32.xlu0 %v1336, 102
      %v2301 = vpop.permute.xlu0 %2300
      %v2303 = vsel %vm1346, %v2299, 0
      %v2305 = vsel %vm1350, %v2301, 0
      %2307 = vmatprep.subr.mxu0 0.0
      %2308 = vmatpush1.msra.mxu0 0.0
      %2309 = vmatprep.subr.mxu0 0.0
      %2310 = vmatpush1.msra.mxu0 0.0
      %2311 = vmatprep.subr.mxu0 0.0
      %2312 = vmatpush1.msra.mxu0 0.0
      %2313 = vmatprep.subr.mxu0 0.0
      %2314 = vmatpush1.msra.mxu0 0.0
      %2315 = vmatprep.subr.mxu0 0.0
      %2316 = vmatpush1.msra.mxu0 0.0
      %2317 = vmatprep.subr.mxu0 0.0
      %2318 = vmatpush1.msra.mxu0 0.0
      %2319 = vmatprep.subr.mxu0 0.0
      %2320 = vmatpush1.msra.mxu0 0.0
      %2321 = vmatprep.subr.mxu0 0.0
      %2322 = vmatpush1.msra.mxu0 0.0
      %2323 = vmatprep.subr.mxu0 0.0
      %2324 = vmatpush1.msra.mxu0 0.0
      %2325 = vmatprep.subr.mxu0 0.0
      %2326 = vmatpush1.msra.mxu0 0.0
      %2327 = vmatprep.subr.mxu0 0.0
      %2328 = vmatpush1.msra.mxu0 0.0
      %2329 = vmatprep.subr.mxu0 0.0
      %2330 = vmatpush1.msra.mxu0 0.0
      %2331 = vmatprep.subr.mxu0 0.0
      %2332 = vmatpush1.msra.mxu0 0.0
      %2333 = vmatprep.subr.mxu0 0.0
      %2334 = vmatpush1.msra.mxu0 0.0
      %2335 = vmatprep.subr.mxu0 0.0
      %2336 = vmatpush1.msra.mxu0 0.0
      %2337 = vmatprep.subr.mxu0 0.0
      %2338 = vmatpush1.msra.mxu0 %v2305
      %2339 = vmatprep.subr.mxu0 0.0
      %2340 = vmatpush2.msra.mxu0 0.0
      %2341 = vmatprep.subr.mxu0 0.0
      %2342 = vmatpush2.msra.mxu0 0.0
      %2343 = vmatprep.subr.mxu0 0.0
      %2344 = vmatpush2.msra.mxu0 0.0
      %2345 = vmatprep.subr.mxu0 0.0
      %2346 = vmatpush2.msra.mxu0 0.0
      %2347 = vmatprep.subr.mxu0 0.0
      %2348 = vmatpush2.msra.mxu0 0.0
      %2349 = vmatprep.subr.mxu0 0.0
      %2350 = vmatpush2.msra.mxu0 0.0
      %2351 = vmatprep.subr.mxu0 0.0
      %2352 = vmatpush2.msra.mxu0 0.0
      %2353 = vmatprep.subr.mxu0 0.0
      %2354 = vmatpush2.msra.mxu0 0.0
      %2355 = vmatprep.subr.mxu0 0.0
      %2356 = vmatpush2.msra.mxu0 0.0
      %2357 = vmatprep.subr.mxu0 0.0
      %2358 = vmatpush2.msra.mxu0 0.0
      %2359 = vmatprep.subr.mxu0 0.0
      %2360 = vmatpush2.msra.mxu0 0.0
      %2361 = vmatprep.subr.mxu0 0.0
      %2362 = vmatpush2.msra.mxu0 0.0
      %2363 = vmatprep.subr.mxu0 0.0
      %2364 = vmatpush2.msra.mxu0 0.0
      %2365 = vmatprep.subr.mxu0 0.0
      %2366 = vmatpush2.msra.mxu0 0.0
      %2367 = vmatprep.subr.mxu0 0.0
      %2368 = vmatpush2.msra.mxu0 0.0
      %2369 = vmatprep.subr.mxu0 0.0
      %2370 = vmatpush2.msra.mxu0 0.0
      %2371 = vmatprep.mubr.f32.mxu0 0.0
      %2372 = vmatmul.mubr.f32.gmra.mxu0 %v2303
      %v2373 = vpop.f32.mrf.mxu0
      %v2374 = vadd.f32 0.0, %v2373
      %v2375 = vpop.f32.mrf.mxu0
      %2376 = vdwg.mxu0
      %v2377 = vadd.f32 %v2297, %v2374
      %s2378 = scalar_lea.vmem %s2, 104
      %v2379 = vld [vmem:[%s2378] sm:$0xff]
      %2380 = vrot.lane.b32.xlu0 %v1336, 101
      %v2381 = vpop.permute.xlu0 %2380
      %v2383 = vsel %vm1346, %v2379, 0
      %v2385 = vsel %vm1350, %v2381, 0
      %2387 = vmatprep.subr.mxu0 0.0
      %2388 = vmatpush1.msra.mxu0 0.0
      %2389 = vmatprep.subr.mxu0 0.0
      %2390 = vmatpush1.msra.mxu0 0.0
      %2391 = vmatprep.subr.mxu0 0.0
      %2392 = vmatpush1.msra.mxu0 0.0
      %2393 = vmatprep.subr.mxu0 0.0
      %2394 = vmatpush1.msra.mxu0 0.0
      %2395 = vmatprep.subr.mxu0 0.0
      %2396 = vmatpush1.msra.mxu0 0.0
      %2397 = vmatprep.subr.mxu0 0.0
      %2398 = vmatpush1.msra.mxu0 0.0
      %2399 = vmatprep.subr.mxu0 0.0
      %2400 = vmatpush1.msra.mxu0 0.0
      %2401 = vmatprep.subr.mxu0 0.0
      %2402 = vmatpush1.msra.mxu0 0.0
      %2403 = vmatprep.subr.mxu0 0.0
      %2404 = vmatpush1.msra.mxu0 0.0
      %2405 = vmatprep.subr.mxu0 0.0
      %2406 = vmatpush1.msra.mxu0 0.0
      %2407 = vmatprep.subr.mxu0 0.0
      %2408 = vmatpush1.msra.mxu0 0.0
      %2409 = vmatprep.subr.mxu0 0.0
      %2410 = vmatpush1.msra.mxu0 0.0
      %2411 = vmatprep.subr.mxu0 0.0
      %2412 = vmatpush1.msra.mxu0 0.0
      %2413 = vmatprep.subr.mxu0 0.0
      %2414 = vmatpush1.msra.mxu0 0.0
      %2415 = vmatprep.subr.mxu0 0.0
      %2416 = vmatpush1.msra.mxu0 0.0
      %2417 = vmatprep.subr.mxu0 0.0
      %2418 = vmatpush1.msra.mxu0 %v2385
      %2419 = vmatprep.subr.mxu0 0.0
      %2420 = vmatpush2.msra.mxu0 0.0
      %2421 = vmatprep.subr.mxu0 0.0
      %2422 = vmatpush2.msra.mxu0 0.0
      %2423 = vmatprep.subr.mxu0 0.0
      %2424 = vmatpush2.msra.mxu0 0.0
      %2425 = vmatprep.subr.mxu0 0.0
      %2426 = vmatpush2.msra.mxu0 0.0
      %2427 = vmatprep.subr.mxu0 0.0
      %2428 = vmatpush2.msra.mxu0 0.0
      %2429 = vmatprep.subr.mxu0 0.0
      %2430 = vmatpush2.msra.mxu0 0.0
      %2431 = vmatprep.subr.mxu0 0.0
      %2432 = vmatpush2.msra.mxu0 0.0
      %2433 = vmatprep.subr.mxu0 0.0
      %2434 = vmatpush2.msra.mxu0 0.0
      %2435 = vmatprep.subr.mxu0 0.0
      %2436 = vmatpush2.msra.mxu0 0.0
      %2437 = vmatprep.subr.mxu0 0.0
      %2438 = vmatpush2.msra.mxu0 0.0
      %2439 = vmatprep.subr.mxu0 0.0
      %2440 = vmatpush2.msra.mxu0 0.0
      %2441 = vmatprep.subr.mxu0 0.0
      %2442 = vmatpush2.msra.mxu0 0.0
      %2443 = vmatprep.subr.mxu0 0.0
      %2444 = vmatpush2.msra.mxu0 0.0
      %2445 = vmatprep.subr.mxu0 0.0
      %2446 = vmatpush2.msra.mxu0 0.0
      %2447 = vmatprep.subr.mxu0 0.0
      %2448 = vmatpush2.msra.mxu0 0.0
      %2449 = vmatprep.subr.mxu0 0.0
      %2450 = vmatpush2.msra.mxu0 0.0
      %2451 = vmatprep.mubr.f32.mxu0 0.0
      %2452 = vmatmul.mubr.f32.gmra.mxu0 %v2383
      %v2453 = vpop.f32.mrf.mxu0
      %v2454 = vadd.f32 0.0, %v2453
      %v2455 = vpop.f32.mrf.mxu0
      %2456 = vdwg.mxu0
      %v2457 = vadd.f32 %v2377, %v2454
      %s2458 = scalar_lea.vmem %s2, 112
      %v2459 = vld [vmem:[%s2458] sm:$0xff]
      %2460 = vrot.lane.b32.xlu0 %v1336, 100
      %v2461 = vpop.permute.xlu0 %2460
      %v2463 = vsel %vm1346, %v2459, 0
      %v2465 = vsel %vm1350, %v2461, 0
      %2467 = vmatprep.subr.mxu0 0.0
      %2468 = vmatpush1.msra.mxu0 0.0
      %2469 = vmatprep.subr.mxu0 0.0
      %2470 = vmatpush1.msra.mxu0 0.0
      %2471 = vmatprep.subr.mxu0 0.0
      %2472 = vmatpush1.msra.mxu0 0.0
      %2473 = vmatprep.subr.mxu0 0.0
      %2474 = vmatpush1.msra.mxu0 0.0
      %2475 = vmatprep.subr.mxu0 0.0
      %2476 = vmatpush1.msra.mxu0 0.0
      %2477 = vmatprep.subr.mxu0 0.0
      %2478 = vmatpush1.msra.mxu0 0.0
      %2479 = vmatprep.subr.mxu0 0.0
      %2480 = vmatpush1.msra.mxu0 0.0
      %2481 = vmatprep.subr.mxu0 0.0
      %2482 = vmatpush1.msra.mxu0 0.0
      %2483 = vmatprep.subr.mxu0 0.0
      %2484 = vmatpush1.msra.mxu0 0.0
      %2485 = vmatprep.subr.mxu0 0.0
      %2486 = vmatpush1.msra.mxu0 0.0
      %2487 = vmatprep.subr.mxu0 0.0
      %2488 = vmatpush1.msra.mxu0 0.0
      %2489 = vmatprep.subr.mxu0 0.0
      %2490 = vmatpush1.msra.mxu0 0.0
      %2491 = vmatprep.subr.mxu0 0.0
      %2492 = vmatpush1.msra.mxu0 0.0
      %2493 = vmatprep.subr.mxu0 0.0
      %2494 = vmatpush1.msra.mxu0 0.0
      %2495 = vmatprep.subr.mxu0 0.0
      %2496 = vmatpush1.msra.mxu0 0.0
      %2497 = vmatprep.subr.mxu0 0.0
      %2498 = vmatpush1.msra.mxu0 %v2465
      %2499 = vmatprep.subr.mxu0 0.0
      %2500 = vmatpush2.msra.mxu0 0.0
      %2501 = vmatprep.subr.mxu0 0.0
      %2502 = vmatpush2.msra.mxu0 0.0
      %2503 = vmatprep.subr.mxu0 0.0
      %2504 = vmatpush2.msra.mxu0 0.0
      %2505 = vmatprep.subr.mxu0 0.0
      %2506 = vmatpush2.msra.mxu0 0.0
      %2507 = vmatprep.subr.mxu0 0.0
      %2508 = vmatpush2.msra.mxu0 0.0
      %2509 = vmatprep.subr.mxu0 0.0
      %2510 = vmatpush2.msra.mxu0 0.0
      %2511 = vmatprep.subr.mxu0 0.0
      %2512 = vmatpush2.msra.mxu0 0.0
      %2513 = vmatprep.subr.mxu0 0.0
      %2514 = vmatpush2.msra.mxu0 0.0
      %2515 = vmatprep.subr.mxu0 0.0
      %2516 = vmatpush2.msra.mxu0 0.0
      %2517 = vmatprep.subr.mxu0 0.0
      %2518 = vmatpush2.msra.mxu0 0.0
      %2519 = vmatprep.subr.mxu0 0.0
      %2520 = vmatpush2.msra.mxu0 0.0
      %2521 = vmatprep.subr.mxu0 0.0
      %2522 = vmatpush2.msra.mxu0 0.0
      %2523 = vmatprep.subr.mxu0 0.0
      %2524 = vmatpush2.msra.mxu0 0.0
      %2525 = vmatprep.subr.mxu0 0.0
      %2526 = vmatpush2.msra.mxu0 0.0
      %2527 = vmatprep.subr.mxu0 0.0
      %2528 = vmatpush2.msra.mxu0 0.0
      %2529 = vmatprep.subr.mxu0 0.0
      %2530 = vmatpush2.msra.mxu0 0.0
      %2531 = vmatprep.mubr.f32.mxu0 0.0
      %2532 = vmatmul.mubr.f32.gmra.mxu0 %v2463
      %v2533 = vpop.f32.mrf.mxu0
      %v2534 = vadd.f32 0.0, %v2533
      %v2535 = vpop.f32.mrf.mxu0
      %2536 = vdwg.mxu0
      %v2537 = vadd.f32 %v2457, %v2534
      %s2538 = scalar_lea.vmem %s2, 120
      %v2539 = vld [vmem:[%s2538] sm:$0xff]
      %2541 = vrot.lane.b32.xlu0 %v1336, 92
      %v2542 = vpop.permute.xlu0 %2541
      %2543 = vrot.lane.b32.xlu0 %v1338, 92
      %v2544 = vpop.permute.xlu0 %2543
      %vm2545 = vcmask 752640
      %v2546 = vsel %vm2545, %v2542, %v2544
      %v2548 = vsel %vm1346, %v2539, 0
      %v2550 = vsel %vm1350, %v2546, 0
      %2552 = vmatprep.subr.mxu0 0.0
      %2553 = vmatpush1.msra.mxu0 0.0
      %2554 = vmatprep.subr.mxu0 0.0
      %2555 = vmatpush1.msra.mxu0 0.0
      %2556 = vmatprep.subr.mxu0 0.0
      %2557 = vmatpush1.msra.mxu0 0.0
      %2558 = vmatprep.subr.mxu0 0.0
      %2559 = vmatpush1.msra.mxu0 0.0
      %2560 = vmatprep.subr.mxu0 0.0
      %2561 = vmatpush1.msra.mxu0 0.0
      %2562 = vmatprep.subr.mxu0 0.0
      %2563 = vmatpush1.msra.mxu0 0.0
      %2564 = vmatprep.subr.mxu0 0.0
      %2565 = vmatpush1.msra.mxu0 0.0
      %2566 = vmatprep.subr.mxu0 0.0
      %2567 = vmatpush1.msra.mxu0 0.0
      %2568 = vmatprep.subr.mxu0 0.0
      %2569 = vmatpush1.msra.mxu0 0.0
      %2570 = vmatprep.subr.mxu0 0.0
      %2571 = vmatpush1.msra.mxu0 0.0
      %2572 = vmatprep.subr.mxu0 0.0
      %2573 = vmatpush1.msra.mxu0 0.0
      %2574 = vmatprep.subr.mxu0 0.0
      %2575 = vmatpush1.msra.mxu0 0.0
      %2576 = vmatprep.subr.mxu0 0.0
      %2577 = vmatpush1.msra.mxu0 0.0
      %2578 = vmatprep.subr.mxu0 0.0
      %2579 = vmatpush1.msra.mxu0 0.0
      %2580 = vmatprep.subr.mxu0 0.0
      %2581 = vmatpush1.msra.mxu0 0.0
      %2582 = vmatprep.subr.mxu0 0.0
      %2583 = vmatpush1.msra.mxu0 %v2550
      %2584 = vmatprep.subr.mxu0 0.0
      %2585 = vmatpush2.msra.mxu0 0.0
      %2586 = vmatprep.subr.mxu0 0.0
      %2587 = vmatpush2.msra.mxu0 0.0
      %2588 = vmatprep.subr.mxu0 0.0
      %2589 = vmatpush2.msra.mxu0 0.0
      %2590 = vmatprep.subr.mxu0 0.0
      %2591 = vmatpush2.msra.mxu0 0.0
      %2592 = vmatprep.subr.mxu0 0.0
      %2593 = vmatpush2.msra.mxu0 0.0
      %2594 = vmatprep.subr.mxu0 0.0
      %2595 = vmatpush2.msra.mxu0 0.0
      %2596 = vmatprep.subr.mxu0 0.0
      %2597 = vmatpush2.msra.mxu0 0.0
      %2598 = vmatprep.subr.mxu0 0.0
      %2599 = vmatpush2.msra.mxu0 0.0
      %2600 = vmatprep.subr.mxu0 0.0
      %2601 = vmatpush2.msra.mxu0 0.0
      %2602 = vmatprep.subr.mxu0 0.0
      %2603 = vmatpush2.msra.mxu0 0.0
      %2604 = vmatprep.subr.mxu0 0.0
      %2605 = vmatpush2.msra.mxu0 0.0
      %2606 = vmatprep.subr.mxu0 0.0
      %2607 = vmatpush2.msra.mxu0 0.0
      %2608 = vmatprep.subr.mxu0 0.0
      %2609 = vmatpush2.msra.mxu0 0.0
      %2610 = vmatprep.subr.mxu0 0.0
      %2611 = vmatpush2.msra.mxu0 0.0
      %2612 = vmatprep.subr.mxu0 0.0
      %2613 = vmatpush2.msra.mxu0 0.0
      %2614 = vmatprep.subr.mxu0 0.0
      %2615 = vmatpush2.msra.mxu0 0.0
      %2616 = vmatprep.mubr.f32.mxu0 0.0
      %2617 = vmatmul.mubr.f32.gmra.mxu0 %v2548
      %v2618 = vpop.f32.mrf.mxu0
      %v2619 = vadd.f32 0.0, %v2618
      %v2620 = vpop.f32.mrf.mxu0
      %2621 = vdwg.mxu0
      %v2622 = vadd.f32 %v2537, %v2619
      %s2623 = scalar_lea.vmem %s2, 128
      %v2624 = vld [vmem:[%s2623] sm:$0xff]
      %2625 = vrot.lane.b32.xlu0 %v1336, 91
      %v2626 = vpop.permute.xlu0 %2625
      %2627 = vrot.lane.b32.xlu0 %v1338, 91
      %v2628 = vpop.permute.xlu0 %2627
      %vm2629 = vcmask 744448
      %v2630 = vsel %vm2629, %v2626, %v2628
      %v2632 = vsel %vm1346, %v2624, 0
      %v2634 = vsel %vm1350, %v2630, 0
      %2636 = vmatprep.subr.mxu0 0.0
      %2637 = vmatpush1.msra.mxu0 0.0
      %2638 = vmatprep.subr.mxu0 0.0
      %2639 = vmatpush1.msra.mxu0 0.0
      %2640 = vmatprep.subr.mxu0 0.0
      %2641 = vmatpush1.msra.mxu0 0.0
      %2642 = vmatprep.subr.mxu0 0.0
      %2643 = vmatpush1.msra.mxu0 0.0
      %2644 = vmatprep.subr.mxu0 0.0
      %2645 = vmatpush1.msra.mxu0 0.0
      %2646 = vmatprep.subr.mxu0 0.0
      %2647 = vmatpush1.msra.mxu0 0.0
      %2648 = vmatprep.subr.mxu0 0.0
      %2649 = vmatpush1.msra.mxu0 0.0
      %2650 = vmatprep.subr.mxu0 0.0
      %2651 = vmatpush1.msra.mxu0 0.0
      %2652 = vmatprep.subr.mxu0 0.0
      %2653 = vmatpush1.msra.mxu0 0.0
      %2654 = vmatprep.subr.mxu0 0.0
      %2655 = vmatpush1.msra.mxu0 0.0
      %2656 = vmatprep.subr.mxu0 0.0
      %2657 = vmatpush1.msra.mxu0 0.0
      %2658 = vmatprep.subr.mxu0 0.0
      %2659 = vmatpush1.msra.mxu0 0.0
      %2660 = vmatprep.subr.mxu0 0.0
      %2661 = vmatpush1.msra.mxu0 0.0
      %2662 = vmatprep.subr.mxu0 0.0
      %2663 = vmatpush1.msra.mxu0 0.0
      %2664 = vmatprep.subr.mxu0 0.0
      %2665 = vmatpush1.msra.mxu0 0.0
      %2666 = vmatprep.subr.mxu0 0.0
      %2667 = vmatpush1.msra.mxu0 %v2634
      %2668 = vmatprep.subr.mxu0 0.0
      %2669 = vmatpush2.msra.mxu0 0.0
      %2670 = vmatprep.subr.mxu0 0.0
      %2671 = vmatpush2.msra.mxu0 0.0
      %2672 = vmatprep.subr.mxu0 0.0
      %2673 = vmatpush2.msra.mxu0 0.0
      %2674 = vmatprep.subr.mxu0 0.0
      %2675 = vmatpush2.msra.mxu0 0.0
      %2676 = vmatprep.subr.mxu0 0.0
      %2677 = vmatpush2.msra.mxu0 0.0
      %2678 = vmatprep.subr.mxu0 0.0
      %2679 = vmatpush2.msra.mxu0 0.0
      %2680 = vmatprep.subr.mxu0 0.0
      %2681 = vmatpush2.msra.mxu0 0.0
      %2682 = vmatprep.subr.mxu0 0.0
      %2683 = vmatpush2.msra.mxu0 0.0
      %2684 = vmatprep.subr.mxu0 0.0
      %2685 = vmatpush2.msra.mxu0 0.0
      %2686 = vmatprep.subr.mxu0 0.0
      %2687 = vmatpush2.msra.mxu0 0.0
      %2688 = vmatprep.subr.mxu0 0.0
      %2689 = vmatpush2.msra.mxu0 0.0
      %2690 = vmatprep.subr.mxu0 0.0
      %2691 = vmatpush2.msra.mxu0 0.0
      %2692 = vmatprep.subr.mxu0 0.0
      %2693 = vmatpush2.msra.mxu0 0.0
      %2694 = vmatprep.subr.mxu0 0.0
      %2695 = vmatpush2.msra.mxu0 0.0
      %2696 = vmatprep.subr.mxu0 0.0
      %2697 = vmatpush2.msra.mxu0 0.0
      %2698 = vmatprep.subr.mxu0 0.0
      %2699 = vmatpush2.msra.mxu0 0.0
      %2700 = vmatprep.mubr.f32.mxu0 0.0
      %2701 = vmatmul.mubr.f32.gmra.mxu0 %v2632
      %v2702 = vpop.f32.mrf.mxu0
      %v2703 = vadd.f32 0.0, %v2702
      %v2704 = vpop.f32.mrf.mxu0
      %2705 = vdwg.mxu0
      %v2706 = vadd.f32 %v2622, %v2703
      %s2707 = scalar_lea.vmem %s2, 136
      %v2708 = vld [vmem:[%s2707] sm:$0xff]
      %2709 = vrot.lane.b32.xlu0 %v1336, 90
      %v2710 = vpop.permute.xlu0 %2709
      %2711 = vrot.lane.b32.xlu0 %v1338, 90
      %v2712 = vpop.permute.xlu0 %2711
      %vm2713 = vcmask 736256
      %v2714 = vsel %vm2713, %v2710, %v2712
      %v2716 = vsel %vm1346, %v2708, 0
      %v2718 = vsel %vm1350, %v2714, 0
      %2720 = vmatprep.subr.mxu0 0.0
      %2721 = vmatpush1.msra.mxu0 0.0
      %2722 = vmatprep.subr.mxu0 0.0
      %2723 = vmatpush1.msra.mxu0 0.0
      %2724 = vmatprep.subr.mxu0 0.0
      %2725 = vmatpush1.msra.mxu0 0.0
      %2726 = vmatprep.subr.mxu0 0.0
      %2727 = vmatpush1.msra.mxu0 0.0
      %2728 = vmatprep.subr.mxu0 0.0
      %2729 = vmatpush1.msra.mxu0 0.0
      %2730 = vmatprep.subr.mxu0 0.0
      %2731 = vmatpush1.msra.mxu0 0.0
      %2732 = vmatprep.subr.mxu0 0.0
      %2733 = vmatpush1.msra.mxu0 0.0
      %2734 = vmatprep.subr.mxu0 0.0
      %2735 = vmatpush1.msra.mxu0 0.0
      %2736 = vmatprep.subr.mxu0 0.0
      %2737 = vmatpush1.msra.mxu0 0.0
      %2738 = vmatprep.subr.mxu0 0.0
      %2739 = vmatpush1.msra.mxu0 0.0
      %2740 = vmatprep.subr.mxu0 0.0
      %2741 = vmatpush1.msra.mxu0 0.0
      %2742 = vmatprep.subr.mxu0 0.0
      %2743 = vmatpush1.msra.mxu0 0.0
      %2744 = vmatprep.subr.mxu0 0.0
      %2745 = vmatpush1.msra.mxu0 0.0
      %2746 = vmatprep.subr.mxu0 0.0
      %2747 = vmatpush1.msra.mxu0 0.0
      %2748 = vmatprep.subr.mxu0 0.0
      %2749 = vmatpush1.msra.mxu0 0.0
      %2750 = vmatprep.subr.mxu0 0.0
      %2751 = vmatpush1.msra.mxu0 %v2718
      %2752 = vmatprep.subr.mxu0 0.0
      %2753 = vmatpush2.msra.mxu0 0.0
      %2754 = vmatprep.subr.mxu0 0.0
      %2755 = vmatpush2.msra.mxu0 0.0
      %2756 = vmatprep.subr.mxu0 0.0
      %2757 = vmatpush2.msra.mxu0 0.0
      %2758 = vmatprep.subr.mxu0 0.0
      %2759 = vmatpush2.msra.mxu0 0.0
      %2760 = vmatprep.subr.mxu0 0.0
      %2761 = vmatpush2.msra.mxu0 0.0
      %2762 = vmatprep.subr.mxu0 0.0
      %2763 = vmatpush2.msra.mxu0 0.0
      %2764 = vmatprep.subr.mxu0 0.0
      %2765 = vmatpush2.msra.mxu0 0.0
      %2766 = vmatprep.subr.mxu0 0.0
      %2767 = vmatpush2.msra.mxu0 0.0
      %2768 = vmatprep.subr.mxu0 0.0
      %2769 = vmatpush2.msra.mxu0 0.0
      %2770 = vmatprep.subr.mxu0 0.0
      %2771 = vmatpush2.msra.mxu0 0.0
      %2772 = vmatprep.subr.mxu0 0.0
      %2773 = vmatpush2.msra.mxu0 0.0
      %2774 = vmatprep.subr.mxu0 0.0
      %2775 = vmatpush2.msra.mxu0 0.0
      %2776 = vmatprep.subr.mxu0 0.0
      %2777 = vmatpush2.msra.mxu0 0.0
      %2778 = vmatprep.subr.mxu0 0.0
      %2779 = vmatpush2.msra.mxu0 0.0
      %2780 = vmatprep.subr.mxu0 0.0
      %2781 = vmatpush2.msra.mxu0 0.0
      %2782 = vmatprep.subr.mxu0 0.0
      %2783 = vmatpush2.msra.mxu0 0.0
      %2784 = vmatprep.mubr.f32.mxu0 0.0
      %2785 = vmatmul.mubr.f32.gmra.mxu0 %v2716
      %v2786 = vpop.f32.mrf.mxu0
      %v2787 = vadd.f32 0.0, %v2786
      %v2788 = vpop.f32.mrf.mxu0
      %2789 = vdwg.mxu0
      %v2790 = vadd.f32 %v2706, %v2787
      %s2791 = scalar_lea.vmem %s2, 144
      %v2792 = vld [vmem:[%s2791] sm:$0xff]
      %2793 = vrot.lane.b32.xlu0 %v1336, 89
      %v2794 = vpop.permute.xlu0 %2793
      %2795 = vrot.lane.b32.xlu0 %v1338, 89
      %v2796 = vpop.permute.xlu0 %2795
      %vm2797 = vcmask 728064
      %v2798 = vsel %vm2797, %v2794, %v2796
      %v2800 = vsel %vm1346, %v2792, 0
      %v2802 = vsel %vm1350, %v2798, 0
      %2804 = vmatprep.subr.mxu0 0.0
      %2805 = vmatpush1.msra.mxu0 0.0
      %2806 = vmatprep.subr.mxu0 0.0
      %2807 = vmatpush1.msra.mxu0 0.0
      %2808 = vmatprep.subr.mxu0 0.0
      %2809 = vmatpush1.msra.mxu0 0.0
      %2810 = vmatprep.subr.mxu0 0.0
      %2811 = vmatpush1.msra.mxu0 0.0
      %2812 = vmatprep.subr.mxu0 0.0
      %2813 = vmatpush1.msra.mxu0 0.0
      %2814 = vmatprep.subr.mxu0 0.0
      %2815 = vmatpush1.msra.mxu0 0.0
      %2816 = vmatprep.subr.mxu0 0.0
      %2817 = vmatpush1.msra.mxu0 0.0
      %2818 = vmatprep.subr.mxu0 0.0
      %2819 = vmatpush1.msra.mxu0 0.0
      %2820 = vmatprep.subr.mxu0 0.0
      %2821 = vmatpush1.msra.mxu0 0.0
      %2822 = vmatprep.subr.mxu0 0.0
      %2823 = vmatpush1.msra.mxu0 0.0
      %2824 = vmatprep.subr.mxu0 0.0
      %2825 = vmatpush1.msra.mxu0 0.0
      %2826 = vmatprep.subr.mxu0 0.0
      %2827 = vmatpush1.msra.mxu0 0.0
      %2828 = vmatprep.subr.mxu0 0.0
      %2829 = vmatpush1.msra.mxu0 0.0
      %2830 = vmatprep.subr.mxu0 0.0
      %2831 = vmatpush1.msra.mxu0 0.0
      %2832 = vmatprep.subr.mxu0 0.0
      %2833 = vmatpush1.msra.mxu0 0.0
      %2834 = vmatprep.subr.mxu0 0.0
      %2835 = vmatpush1.msra.mxu0 %v2802
      %2836 = vmatprep.subr.mxu0 0.0
      %2837 = vmatpush2.msra.mxu0 0.0
      %2838 = vmatprep.subr.mxu0 0.0
      %2839 = vmatpush2.msra.mxu0 0.0
      %2840 = vmatprep.subr.mxu0 0.0
      %2841 = vmatpush2.msra.mxu0 0.0
      %2842 = vmatprep.subr.mxu0 0.0
      %2843 = vmatpush2.msra.mxu0 0.0
      %2844 = vmatprep.subr.mxu0 0.0
      %2845 = vmatpush2.msra.mxu0 0.0
      %2846 = vmatprep.subr.mxu0 0.0
      %2847 = vmatpush2.msra.mxu0 0.0
      %2848 = vmatprep.subr.mxu0 0.0
      %2849 = vmatpush2.msra.mxu0 0.0
      %2850 = vmatprep.subr.mxu0 0.0
      %2851 = vmatpush2.msra.mxu0 0.0
      %2852 = vmatprep.subr.mxu0 0.0
      %2853 = vmatpush2.msra.mxu0 0.0
      %2854 = vmatprep.subr.mxu0 0.0
      %2855 = vmatpush2.msra.mxu0 0.0
      %2856 = vmatprep.subr.mxu0 0.0
      %2857 = vmatpush2.msra.mxu0 0.0
      %2858 = vmatprep.subr.mxu0 0.0
      %2859 = vmatpush2.msra.mxu0 0.0
      %2860 = vmatprep.subr.mxu0 0.0
      %2861 = vmatpush2.msra.mxu0 0.0
      %2862 = vmatprep.subr.mxu0 0.0
      %2863 = vmatpush2.msra.mxu0 0.0
      %2864 = vmatprep.subr.mxu0 0.0
      %2865 = vmatpush2.msra.mxu0 0.0
      %2866 = vmatprep.subr.mxu0 0.0
      %2867 = vmatpush2.msra.mxu0 0.0
      %2868 = vmatprep.mubr.f32.mxu0 0.0
      %2869 = vmatmul.mubr.f32.gmra.mxu0 %v2800
      %v2870 = vpop.f32.mrf.mxu0
      %v2871 = vadd.f32 0.0, %v2870
      %v2872 = vpop.f32.mrf.mxu0
      %2873 = vdwg.mxu0
      %v2874 = vadd.f32 %v2790, %v2871
      %s2875 = scalar_lea.vmem %s2, 152
      %v2876 = vld [vmem:[%s2875] sm:$0xff]
      %2877 = vrot.lane.b32.xlu0 %v1336, 88
      %v2878 = vpop.permute.xlu0 %2877
      %2879 = vrot.lane.b32.xlu0 %v1338, 88
      %v2880 = vpop.permute.xlu0 %2879
      %v2881 = vsel %vm625, %v2878, %v2880
      %v2883 = vsel %vm1346, %v2876, 0
      %v2885 = vsel %vm1350, %v2881, 0
      %2887 = vmatprep.subr.mxu0 0.0
      %2888 = vmatpush1.msra.mxu0 0.0
      %2889 = vmatprep.subr.mxu0 0.0
      %2890 = vmatpush1.msra.mxu0 0.0
      %2891 = vmatprep.subr.mxu0 0.0
      %2892 = vmatpush1.msra.mxu0 0.0
      %2893 = vmatprep.subr.mxu0 0.0
      %2894 = vmatpush1.msra.mxu0 0.0
      %2895 = vmatprep.subr.mxu0 0.0
      %2896 = vmatpush1.msra.mxu0 0.0
      %2897 = vmatprep.subr.mxu0 0.0
      %2898 = vmatpush1.msra.mxu0 0.0
      %2899 = vmatprep.subr.mxu0 0.0
      %2900 = vmatpush1.msra.mxu0 0.0
      %2901 = vmatprep.subr.mxu0 0.0
      %2902 = vmatpush1.msra.mxu0 0.0
      %2903 = vmatprep.subr.mxu0 0.0
      %2904 = vmatpush1.msra.mxu0 0.0
      %2905 = vmatprep.subr.mxu0 0.0
      %2906 = vmatpush1.msra.mxu0 0.0
      %2907 = vmatprep.subr.mxu0 0.0
      %2908 = vmatpush1.msra.mxu0 0.0
      %2909 = vmatprep.subr.mxu0 0.0
      %2910 = vmatpush1.msra.mxu0 0.0
      %2911 = vmatprep.subr.mxu0 0.0
      %2912 = vmatpush1.msra.mxu0 0.0
      %2913 = vmatprep.subr.mxu0 0.0
      %2914 = vmatpush1.msra.mxu0 0.0
      %2915 = vmatprep.subr.mxu0 0.0
      %2916 = vmatpush1.msra.mxu0 0.0
      %2917 = vmatprep.subr.mxu0 0.0
      %2918 = vmatpush1.msra.mxu0 %v2885
      %2919 = vmatprep.subr.mxu0 0.0
      %2920 = vmatpush2.msra.mxu0 0.0
      %2921 = vmatprep.subr.mxu0 0.0
      %2922 = vmatpush2.msra.mxu0 0.0
      %2923 = vmatprep.subr.mxu0 0.0
      %2924 = vmatpush2.msra.mxu0 0.0
      %2925 = vmatprep.subr.mxu0 0.0
      %2926 = vmatpush2.msra.mxu0 0.0
      %2927 = vmatprep.subr.mxu0 0.0
      %2928 = vmatpush2.msra.mxu0 0.0
      %2929 = vmatprep.subr.mxu0 0.0
      %2930 = vmatpush2.msra.mxu0 0.0
      %2931 = vmatprep.subr.mxu0 0.0
      %2932 = vmatpush2.msra.mxu0 0.0
      %2933 = vmatprep.subr.mxu0 0.0
      %2934 = vmatpush2.msra.mxu0 0.0
      %2935 = vmatprep.subr.mxu0 0.0
      %2936 = vmatpush2.msra.mxu0 0.0
      %2937 = vmatprep.subr.mxu0 0.0
      %2938 = vmatpush2.msra.mxu0 0.0
      %2939 = vmatprep.subr.mxu0 0.0
      %2940 = vmatpush2.msra.mxu0 0.0
      %2941 = vmatprep.subr.mxu0 0.0
      %2942 = vmatpush2.msra.mxu0 0.0
      %2943 = vmatprep.subr.mxu0 0.0
      %2944 = vmatpush2.msra.mxu0 0.0
      %2945 = vmatprep.subr.mxu0 0.0
      %2946 = vmatpush2.msra.mxu0 0.0
      %2947 = vmatprep.subr.mxu0 0.0
      %2948 = vmatpush2.msra.mxu0 0.0
      %2949 = vmatprep.subr.mxu0 0.0
      %2950 = vmatpush2.msra.mxu0 0.0
      %2951 = vmatprep.mubr.f32.mxu0 0.0
      %2952 = vmatmul.mubr.f32.gmra.mxu0 %v2883
      %v2953 = vpop.f32.mrf.mxu0
      %v2954 = vadd.f32 0.0, %v2953
      %v2955 = vpop.f32.mrf.mxu0
      %2956 = vdwg.mxu0
      %v2957 = vadd.f32 %v2874, %v2954
      %s2958 = scalar_lea.vmem %s2, 160
      %v2959 = vld [vmem:[%s2958] sm:$0xff]
      %2960 = vrot.lane.b32.xlu0 %v1336, 80
      %v2961 = vpop.permute.xlu0 %2960
      %2962 = vrot.lane.b32.xlu0 %v1338, 80
      %v2963 = vpop.permute.xlu0 %2962
      %vm2964 = vcmask 654336
      %v2965 = vsel %vm2964, %v2961, %v2963
      %v2967 = vsel %vm1346, %v2959, 0
      %v2969 = vsel %vm1350, %v2965, 0
      %2971 = vmatprep.subr.mxu0 0.0
      %2972 = vmatpush1.msra.mxu0 0.0
      %2973 = vmatprep.subr.mxu0 0.0
      %2974 = vmatpush1.msra.mxu0 0.0
      %2975 = vmatprep.subr.mxu0 0.0
      %2976 = vmatpush1.msra.mxu0 0.0
      %2977 = vmatprep.subr.mxu0 0.0
      %2978 = vmatpush1.msra.mxu0 0.0
      %2979 = vmatprep.subr.mxu0 0.0
      %2980 = vmatpush1.msra.mxu0 0.0
      %2981 = vmatprep.subr.mxu0 0.0
      %2982 = vmatpush1.msra.mxu0 0.0
      %2983 = vmatprep.subr.mxu0 0.0
      %2984 = vmatpush1.msra.mxu0 0.0
      %2985 = vmatprep.subr.mxu0 0.0
      %2986 = vmatpush1.msra.mxu0 0.0
      %2987 = vmatprep.subr.mxu0 0.0
      %2988 = vmatpush1.msra.mxu0 0.0
      %2989 = vmatprep.subr.mxu0 0.0
      %2990 = vmatpush1.msra.mxu0 0.0
      %2991 = vmatprep.subr.mxu0 0.0
      %2992 = vmatpush1.msra.mxu0 0.0
      %2993 = vmatprep.subr.mxu0 0.0
      %2994 = vmatpush1.msra.mxu0 0.0
      %2995 = vmatprep.subr.mxu0 0.0
      %2996 = vmatpush1.msra.mxu0 0.0
      %2997 = vmatprep.subr.mxu0 0.0
      %2998 = vmatpush1.msra.mxu0 0.0
      %2999 = vmatprep.subr.mxu0 0.0
      %3000 = vmatpush1.msra.mxu0 0.0
      %3001 = vmatprep.subr.mxu0 0.0
      %3002 = vmatpush1.msra.mxu0 %v2969
      %3003 = vmatprep.subr.mxu0 0.0
      %3004 = vmatpush2.msra.mxu0 0.0
      %3005 = vmatprep.subr.mxu0 0.0
      %3006 = vmatpush2.msra.mxu0 0.0
      %3007 = vmatprep.subr.mxu0 0.0
      %3008 = vmatpush2.msra.mxu0 0.0
      %3009 = vmatprep.subr.mxu0 0.0
      %3010 = vmatpush2.msra.mxu0 0.0
      %3011 = vmatprep.subr.mxu0 0.0
      %3012 = vmatpush2.msra.mxu0 0.0
      %3013 = vmatprep.subr.mxu0 0.0
      %3014 = vmatpush2.msra.mxu0 0.0
      %3015 = vmatprep.subr.mxu0 0.0
      %3016 = vmatpush2.msra.mxu0 0.0
      %3017 = vmatprep.subr.mxu0 0.0
      %3018 = vmatpush2.msra.mxu0 0.0
      %3019 = vmatprep.subr.mxu0 0.0
      %3020 = vmatpush2.msra.mxu0 0.0
      %3021 = vmatprep.subr.mxu0 0.0
      %3022 = vmatpush2.msra.mxu0 0.0
      %3023 = vmatprep.subr.mxu0 0.0
      %3024 = vmatpush2.msra.mxu0 0.0
      %3025 = vmatprep.subr.mxu0 0.0
      %3026 = vmatpush2.msra.mxu0 0.0
      %3027 = vmatprep.subr.mxu0 0.0
      %3028 = vmatpush2.msra.mxu0 0.0
      %3029 = vmatprep.subr.mxu0 0.0
      %3030 = vmatpush2.msra.mxu0 0.0
      %3031 = vmatprep.subr.mxu0 0.0
      %3032 = vmatpush2.msra.mxu0 0.0
      %3033 = vmatprep.subr.mxu0 0.0
      %3034 = vmatpush2.msra.mxu0 0.0
      %3035 = vmatprep.mubr.f32.mxu0 0.0
      %3036 = vmatmul.mubr.f32.gmra.mxu0 %v2967
      %v3037 = vpop.f32.mrf.mxu0
      %v3038 = vadd.f32 0.0, %v3037
      %v3039 = vpop.f32.mrf.mxu0
      %3040 = vdwg.mxu0
      %v3041 = vadd.f32 %v2957, %v3038
      %s3042 = scalar_lea.vmem %s2, 168
      %v3043 = vld [vmem:[%s3042] sm:$0xff]
      %3044 = vrot.lane.b32.xlu0 %v1336, 79
      %v3045 = vpop.permute.xlu0 %3044
      %3046 = vrot.lane.b32.xlu0 %v1338, 79
      %v3047 = vpop.permute.xlu0 %3046
      %vm3048 = vcmask 646144
      %v3049 = vsel %vm3048, %v3045, %v3047
      %v3051 = vsel %vm1346, %v3043, 0
      %v3053 = vsel %vm1350, %v3049, 0
      %3055 = vmatprep.subr.mxu0 0.0
      %3056 = vmatpush1.msra.mxu0 0.0
      %3057 = vmatprep.subr.mxu0 0.0
      %3058 = vmatpush1.msra.mxu0 0.0
      %3059 = vmatprep.subr.mxu0 0.0
      %3060 = vmatpush1.msra.mxu0 0.0
      %3061 = vmatprep.subr.mxu0 0.0
      %3062 = vmatpush1.msra.mxu0 0.0
      %3063 = vmatprep.subr.mxu0 0.0
      %3064 = vmatpush1.msra.mxu0 0.0
      %3065 = vmatprep.subr.mxu0 0.0
      %3066 = vmatpush1.msra.mxu0 0.0
      %3067 = vmatprep.subr.mxu0 0.0
      %3068 = vmatpush1.msra.mxu0 0.0
      %3069 = vmatprep.subr.mxu0 0.0
      %3070 = vmatpush1.msra.mxu0 0.0
      %3071 = vmatprep.subr.mxu0 0.0
      %3072 = vmatpush1.msra.mxu0 0.0
      %3073 = vmatprep.subr.mxu0 0.0
      %3074 = vmatpush1.msra.mxu0 0.0
      %3075 = vmatprep.subr.mxu0 0.0
      %3076 = vmatpush1.msra.mxu0 0.0
      %3077 = vmatprep.subr.mxu0 0.0
      %3078 = vmatpush1.msra.mxu0 0.0
      %3079 = vmatprep.subr.mxu0 0.0
      %3080 = vmatpush1.msra.mxu0 0.0
      %3081 = vmatprep.subr.mxu0 0.0
      %3082 = vmatpush1.msra.mxu0 0.0
      %3083 = vmatprep.subr.mxu0 0.0
      %3084 = vmatpush1.msra.mxu0 0.0
      %3085 = vmatprep.subr.mxu0 0.0
      %3086 = vmatpush1.msra.mxu0 %v3053
      %3087 = vmatprep.subr.mxu0 0.0
      %3088 = vmatpush2.msra.mxu0 0.0
      %3089 = vmatprep.subr.mxu0 0.0
      %3090 = vmatpush2.msra.mxu0 0.0
      %3091 = vmatprep.subr.mxu0 0.0
      %3092 = vmatpush2.msra.mxu0 0.0
      %3093 = vmatprep.subr.mxu0 0.0
      %3094 = vmatpush2.msra.mxu0 0.0
      %3095 = vmatprep.subr.mxu0 0.0
      %3096 = vmatpush2.msra.mxu0 0.0
      %3097 = vmatprep.subr.mxu0 0.0
      %3098 = vmatpush2.msra.mxu0 0.0
      %3099 = vmatprep.subr.mxu0 0.0
      %3100 = vmatpush2.msra.mxu0 0.0
      %3101 = vmatprep.subr.mxu0 0.0
      %3102 = vmatpush2.msra.mxu0 0.0
      %3103 = vmatprep.subr.mxu0 0.0
      %3104 = vmatpush2.msra.mxu0 0.0
      %3105 = vmatprep.subr.mxu0 0.0
      %3106 = vmatpush2.msra.mxu0 0.0
      %3107 = vmatprep.subr.mxu0 0.0
      %3108 = vmatpush2.msra.mxu0 0.0
      %3109 = vmatprep.subr.mxu0 0.0
      %3110 = vmatpush2.msra.mxu0 0.0
      %3111 = vmatprep.subr.mxu0 0.0
      %3112 = vmatpush2.msra.mxu0 0.0
      %3113 = vmatprep.subr.mxu0 0.0
      %3114 = vmatpush2.msra.mxu0 0.0
      %3115 = vmatprep.subr.mxu0 0.0
      %3116 = vmatpush2.msra.mxu0 0.0
      %3117 = vmatprep.subr.mxu0 0.0
      %3118 = vmatpush2.msra.mxu0 0.0
      %3119 = vmatprep.mubr.f32.mxu0 0.0
      %3120 = vmatmul.mubr.f32.gmra.mxu0 %v3051
      %v3121 = vpop.f32.mrf.mxu0
      %v3122 = vadd.f32 0.0, %v3121
      %v3123 = vpop.f32.mrf.mxu0
      %3124 = vdwg.mxu0
      %v3125 = vadd.f32 %v3041, %v3122
      %s3126 = scalar_lea.vmem %s2, 176
      %v3127 = vld [vmem:[%s3126] sm:$0xff]
      %3128 = vrot.lane.b32.xlu0 %v1336, 78
      %v3129 = vpop.permute.xlu0 %3128
      %3130 = vrot.lane.b32.xlu0 %v1338, 78
      %v3131 = vpop.permute.xlu0 %3130
      %vm3132 = vcmask 637952
      %v3133 = vsel %vm3132, %v3129, %v3131
      %v3135 = vsel %vm1346, %v3127, 0
      %v3137 = vsel %vm1350, %v3133, 0
      %3139 = vmatprep.subr.mxu0 0.0
      %3140 = vmatpush1.msra.mxu0 0.0
      %3141 = vmatprep.subr.mxu0 0.0
      %3142 = vmatpush1.msra.mxu0 0.0
      %3143 = vmatprep.subr.mxu0 0.0
      %3144 = vmatpush1.msra.mxu0 0.0
      %3145 = vmatprep.subr.mxu0 0.0
      %3146 = vmatpush1.msra.mxu0 0.0
      %3147 = vmatprep.subr.mxu0 0.0
      %3148 = vmatpush1.msra.mxu0 0.0
      %3149 = vmatprep.subr.mxu0 0.0
      %3150 = vmatpush1.msra.mxu0 0.0
      %3151 = vmatprep.subr.mxu0 0.0
      %3152 = vmatpush1.msra.mxu0 0.0
      %3153 = vmatprep.subr.mxu0 0.0
      %3154 = vmatpush1.msra.mxu0 0.0
      %3155 = vmatprep.subr.mxu0 0.0
      %3156 = vmatpush1.msra.mxu0 0.0
      %3157 = vmatprep.subr.mxu0 0.0
      %3158 = vmatpush1.msra.mxu0 0.0
      %3159 = vmatprep.subr.mxu0 0.0
      %3160 = vmatpush1.msra.mxu0 0.0
      %3161 = vmatprep.subr.mxu0 0.0
      %3162 = vmatpush1.msra.mxu0 0.0
      %3163 = vmatprep.subr.mxu0 0.0
      %3164 = vmatpush1.msra.mxu0 0.0
      %3165 = vmatprep.subr.mxu0 0.0
      %3166 = vmatpush1.msra.mxu0 0.0
      %3167 = vmatprep.subr.mxu0 0.0
      %3168 = vmatpush1.msra.mxu0 0.0
      %3169 = vmatprep.subr.mxu0 0.0
      %3170 = vmatpush1.msra.mxu0 %v3137
      %3171 = vmatprep.subr.mxu0 0.0
      %3172 = vmatpush2.msra.mxu0 0.0
      %3173 = vmatprep.subr.mxu0 0.0
      %3174 = vmatpush2.msra.mxu0 0.0
      %3175 = vmatprep.subr.mxu0 0.0
      %3176 = vmatpush2.msra.mxu0 0.0
      %3177 = vmatprep.subr.mxu0 0.0
      %3178 = vmatpush2.msra.mxu0 0.0
      %3179 = vmatprep.subr.mxu0 0.0
      %3180 = vmatpush2.msra.mxu0 0.0
      %3181 = vmatprep.subr.mxu0 0.0
      %3182 = vmatpush2.msra.mxu0 0.0
      %3183 = vmatprep.subr.mxu0 0.0
      %3184 = vmatpush2.msra.mxu0 0.0
      %3185 = vmatprep.subr.mxu0 0.0
      %3186 = vmatpush2.msra.mxu0 0.0
      %3187 = vmatprep.subr.mxu0 0.0
      %3188 = vmatpush2.msra.mxu0 0.0
      %3189 = vmatprep.subr.mxu0 0.0
      %3190 = vmatpush2.msra.mxu0 0.0
      %3191 = vmatprep.subr.mxu0 0.0
      %3192 = vmatpush2.msra.mxu0 0.0
      %3193 = vmatprep.subr.mxu0 0.0
      %3194 = vmatpush2.msra.mxu0 0.0
      %3195 = vmatprep.subr.mxu0 0.0
      %3196 = vmatpush2.msra.mxu0 0.0
      %3197 = vmatprep.subr.mxu0 0.0
      %3198 = vmatpush2.msra.mxu0 0.0
      %3199 = vmatprep.subr.mxu0 0.0
      %3200 = vmatpush2.msra.mxu0 0.0
      %3201 = vmatprep.subr.mxu0 0.0
      %3202 = vmatpush2.msra.mxu0 0.0
      %3203 = vmatprep.mubr.f32.mxu0 0.0
      %3204 = vmatmul.mubr.f32.gmra.mxu0 %v3135
      %v3205 = vpop.f32.mrf.mxu0
      %v3206 = vadd.f32 0.0, %v3205
      %v3207 = vpop.f32.mrf.mxu0
      %3208 = vdwg.mxu0
      %v3209 = vadd.f32 %v3125, %v3206
      %s3210 = scalar_lea.vmem %s2, 184
      %v3211 = vld [vmem:[%s3210] sm:$0xff]
      %3212 = vrot.lane.b32.xlu0 %v1336, 77
      %v3213 = vpop.permute.xlu0 %3212
      %3214 = vrot.lane.b32.xlu0 %v1338, 77
      %v3215 = vpop.permute.xlu0 %3214
      %vm3216 = vcmask 629760
      %v3217 = vsel %vm3216, %v3213, %v3215
      %v3219 = vsel %vm1346, %v3211, 0
      %v3221 = vsel %vm1350, %v3217, 0
      %3223 = vmatprep.subr.mxu0 0.0
      %3224 = vmatpush1.msra.mxu0 0.0
      %3225 = vmatprep.subr.mxu0 0.0
      %3226 = vmatpush1.msra.mxu0 0.0
      %3227 = vmatprep.subr.mxu0 0.0
      %3228 = vmatpush1.msra.mxu0 0.0
      %3229 = vmatprep.subr.mxu0 0.0
      %3230 = vmatpush1.msra.mxu0 0.0
      %3231 = vmatprep.subr.mxu0 0.0
      %3232 = vmatpush1.msra.mxu0 0.0
      %3233 = vmatprep.subr.mxu0 0.0
      %3234 = vmatpush1.msra.mxu0 0.0
      %3235 = vmatprep.subr.mxu0 0.0
      %3236 = vmatpush1.msra.mxu0 0.0
      %3237 = vmatprep.subr.mxu0 0.0
      %3238 = vmatpush1.msra.mxu0 0.0
      %3239 = vmatprep.subr.mxu0 0.0
      %3240 = vmatpush1.msra.mxu0 0.0
      %3241 = vmatprep.subr.mxu0 0.0
      %3242 = vmatpush1.msra.mxu0 0.0
      %3243 = vmatprep.subr.mxu0 0.0
      %3244 = vmatpush1.msra.mxu0 0.0
      %3245 = vmatprep.subr.mxu0 0.0
      %3246 = vmatpush1.msra.mxu0 0.0
      %3247 = vmatprep.subr.mxu0 0.0
      %3248 = vmatpush1.msra.mxu0 0.0
      %3249 = vmatprep.subr.mxu0 0.0
      %3250 = vmatpush1.msra.mxu0 0.0
      %3251 = vmatprep.subr.mxu0 0.0
      %3252 = vmatpush1.msra.mxu0 0.0
      %3253 = vmatprep.subr.mxu0 0.0
      %3254 = vmatpush1.msra.mxu0 %v3221
      %3255 = vmatprep.subr.mxu0 0.0
      %3256 = vmatpush2.msra.mxu0 0.0
      %3257 = vmatprep.subr.mxu0 0.0
      %3258 = vmatpush2.msra.mxu0 0.0
      %3259 = vmatprep.subr.mxu0 0.0
      %3260 = vmatpush2.msra.mxu0 0.0
      %3261 = vmatprep.subr.mxu0 0.0
      %3262 = vmatpush2.msra.mxu0 0.0
      %3263 = vmatprep.subr.mxu0 0.0
      %3264 = vmatpush2.msra.mxu0 0.0
      %3265 = vmatprep.subr.mxu0 0.0
      %3266 = vmatpush2.msra.mxu0 0.0
      %3267 = vmatprep.subr.mxu0 0.0
      %3268 = vmatpush2.msra.mxu0 0.0
      %3269 = vmatprep.subr.mxu0 0.0
      %3270 = vmatpush2.msra.mxu0 0.0
      %3271 = vmatprep.subr.mxu0 0.0
      %3272 = vmatpush2.msra.mxu0 0.0
      %3273 = vmatprep.subr.mxu0 0.0
      %3274 = vmatpush2.msra.mxu0 0.0
      %3275 = vmatprep.subr.mxu0 0.0
      %3276 = vmatpush2.msra.mxu0 0.0
      %3277 = vmatprep.subr.mxu0 0.0
      %3278 = vmatpush2.msra.mxu0 0.0
      %3279 = vmatprep.subr.mxu0 0.0
      %3280 = vmatpush2.msra.mxu0 0.0
      %3281 = vmatprep.subr.mxu0 0.0
      %3282 = vmatpush2.msra.mxu0 0.0
      %3283 = vmatprep.subr.mxu0 0.0
      %3284 = vmatpush2.msra.mxu0 0.0
      %3285 = vmatprep.subr.mxu0 0.0
      %3286 = vmatpush2.msra.mxu0 0.0
      %3287 = vmatprep.mubr.f32.mxu0 0.0
      %3288 = vmatmul.mubr.f32.gmra.mxu0 %v3219
      %v3289 = vpop.f32.mrf.mxu0
      %v3290 = vadd.f32 0.0, %v3289
      %v3291 = vpop.f32.mrf.mxu0
      %3292 = vdwg.mxu0
      %v3293 = vadd.f32 %v3209, %v3290
      %s3294 = scalar_lea.vmem %s2, 192
      %v3295 = vld [vmem:[%s3294] sm:$0xff]
      %3296 = vrot.lane.b32.xlu0 %v1336, 76
      %v3297 = vpop.permute.xlu0 %3296
      %3298 = vrot.lane.b32.xlu0 %v1338, 76
      %v3299 = vpop.permute.xlu0 %3298
      %vm3300 = vcmask 621568
      %v3301 = vsel %vm3300, %v3297, %v3299
      %v3303 = vsel %vm1346, %v3295, 0
      %v3305 = vsel %vm1350, %v3301, 0
      %3307 = vmatprep.subr.mxu0 0.0
      %3308 = vmatpush1.msra.mxu0 0.0
      %3309 = vmatprep.subr.mxu0 0.0
      %3310 = vmatpush1.msra.mxu0 0.0
      %3311 = vmatprep.subr.mxu0 0.0
      %3312 = vmatpush1.msra.mxu0 0.0
      %3313 = vmatprep.subr.mxu0 0.0
      %3314 = vmatpush1.msra.mxu0 0.0
      %3315 = vmatprep.subr.mxu0 0.0
      %3316 = vmatpush1.msra.mxu0 0.0
      %3317 = vmatprep.subr.mxu0 0.0
      %3318 = vmatpush1.msra.mxu0 0.0
      %3319 = vmatprep.subr.mxu0 0.0
      %3320 = vmatpush1.msra.mxu0 0.0
      %3321 = vmatprep.subr.mxu0 0.0
      %3322 = vmatpush1.msra.mxu0 0.0
      %3323 = vmatprep.subr.mxu0 0.0
      %3324 = vmatpush1.msra.mxu0 0.0
      %3325 = vmatprep.subr.mxu0 0.0
      %3326 = vmatpush1.msra.mxu0 0.0
      %3327 = vmatprep.subr.mxu0 0.0
      %3328 = vmatpush1.msra.mxu0 0.0
      %3329 = vmatprep.subr.mxu0 0.0
      %3330 = vmatpush1.msra.mxu0 0.0
      %3331 = vmatprep.subr.mxu0 0.0
      %3332 = vmatpush1.msra.mxu0 0.0
      %3333 = vmatprep.subr.mxu0 0.0
      %3334 = vmatpush1.msra.mxu0 0.0
      %3335 = vmatprep.subr.mxu0 0.0
      %3336 = vmatpush1.msra.mxu0 0.0
      %3337 = vmatprep.subr.mxu0 0.0
      %3338 = vmatpush1.msra.mxu0 %v3305
      %3339 = vmatprep.subr.mxu0 0.0
      %3340 = vmatpush2.msra.mxu0 0.0
      %3341 = vmatprep.subr.mxu0 0.0
      %3342 = vmatpush2.msra.mxu0 0.0
      %3343 = vmatprep.subr.mxu0 0.0
      %3344 = vmatpush2.msra.mxu0 0.0
      %3345 = vmatprep.subr.mxu0 0.0
      %3346 = vmatpush2.msra.mxu0 0.0
      %3347 = vmatprep.subr.mxu0 0.0
      %3348 = vmatpush2.msra.mxu0 0.0
      %3349 = vmatprep.subr.mxu0 0.0
      %3350 = vmatpush2.msra.mxu0 0.0
      %3351 = vmatprep.subr.mxu0 0.0
      %3352 = vmatpush2.msra.mxu0 0.0
      %3353 = vmatprep.subr.mxu0 0.0
      %3354 = vmatpush2.msra.mxu0 0.0
      %3355 = vmatprep.subr.mxu0 0.0
      %3356 = vmatpush2.msra.mxu0 0.0
      %3357 = vmatprep.subr.mxu0 0.0
      %3358 = vmatpush2.msra.mxu0 0.0
      %3359 = vmatprep.subr.mxu0 0.0
      %3360 = vmatpush2.msra.mxu0 0.0
      %3361 = vmatprep.subr.mxu0 0.0
      %3362 = vmatpush2.msra.mxu0 0.0
      %3363 = vmatprep.subr.mxu0 0.0
      %3364 = vmatpush2.msra.mxu0 0.0
      %3365 = vmatprep.subr.mxu0 0.0
      %3366 = vmatpush2.msra.mxu0 0.0
      %3367 = vmatprep.subr.mxu0 0.0
      %3368 = vmatpush2.msra.mxu0 0.0
      %3369 = vmatprep.subr.mxu0 0.0
      %3370 = vmatpush2.msra.mxu0 0.0
      %3371 = vmatprep.mubr.f32.mxu0 0.0
      %3372 = vmatmul.mubr.f32.gmra.mxu0 %v3303
      %v3373 = vpop.f32.mrf.mxu0
      %v3374 = vadd.f32 0.0, %v3373
      %v3375 = vpop.f32.mrf.mxu0
      %3376 = vdwg.mxu0
      %v3377 = vadd.f32 %v3293, %v3374
      %v3378 = vld [vmem:[%s5] sm:$0xff]
      %3380 = vset.pattern.permute.xlu0 0
      %3381 = vperm.xlu0 %3380, %v3378
      %v3382 = vpop.permute.xlu0 %3381
      %v3384 = vmul.f32 %v3377, %v3382
      %v3385 = vld [vmem:[%s6] sm:$0xff]
      %3387 = vset.pattern.permute.xlu0 0
      %3388 = vperm.xlu0 %3387, %v3385
      %v3389 = vpop.permute.xlu0 %3388
      %v3391 = vadd.f32 %v3384, %v3389
      %v3392 = vmax.f32 %v3391, 0.0
      %3394 = vrot.lane.b32.xlu0 %v3392, 127
      %v3395 = vpop.permute.xlu0 %3394
      %v3397 = vmax.f32 %v3392, %v3395
      %3399 = vrot.lane.b32.xlu0 %v3397, 116
      %v3400 = vpop.permute.xlu0 %3399
      %v3402 = vmax.f32 %v3397, %v3400
      %v3403 = vld [vmem:[%s8] sm:$0xff]
      %v3404 = vld [vmem:[%s8 + $0x8] sm:$0xff]
      %v3405 = vld [vmem:[%s8 + $0x10] sm:$0xff]
      %v3406 = vld [vmem:[%s8 + $0x18] sm:$0xff]
      %v3407 = vld [vmem:[%s8 + $0x20] sm:$0xff]
      %v3408 = vld [vmem:[%s8 + $0x28] sm:$0xff]
      %v3409 = vld [vmem:[%s8 + $0x30] sm:$0xff]
      %v3410 = vld [vmem:[%s8 + $0x38] sm:$0xff]
      %v3411 = vld [vmem:[%s8 + $0x40] sm:$0xff]
      %v3412 = vld [vmem:[%s8 + $0x48] sm:$0xff]
      %v3413 = vld [vmem:[%s8 + $0x50] sm:$0x7]
      %vm3414 = vcmask 678912
      %v3416 = vsel %vm3414, %v3402, 0
      %v3419 = vsel %vm1191, %v3413, 0
      %3421 = vmatprep.subr.mxu0 0.0
      %3422 = vmatpush1.msra.mxu0 0.0
      %3423 = vmatprep.subr.mxu0 0.0
      %3424 = vmatpush1.msra.mxu0 0.0
      %3425 = vmatprep.subr.mxu0 0.0
      %3426 = vmatpush1.msra.mxu0 0.0
      %3427 = vmatprep.subr.mxu0 0.0
      %3428 = vmatpush1.msra.mxu0 0.0
      %3429 = vmatprep.subr.mxu0 0.0
      %3430 = vmatpush1.msra.mxu0 0.0
      %3431 = vmatprep.subr.mxu0 0.0
      %3432 = vmatpush1.msra.mxu0 %v3419
      %3433 = vmatprep.subr.mxu0 0.0
      %3434 = vmatpush1.msra.mxu0 %v3412
      %3435 = vmatprep.subr.mxu0 0.0
      %3436 = vmatpush1.msra.mxu0 %v3411
      %3437 = vmatprep.subr.mxu0 0.0
      %3438 = vmatpush1.msra.mxu0 %v3410
      %3439 = vmatprep.subr.mxu0 0.0
      %3440 = vmatpush1.msra.mxu0 %v3409
      %3441 = vmatprep.subr.mxu0 0.0
      %3442 = vmatpush1.msra.mxu0 %v3408
      %3443 = vmatprep.subr.mxu0 0.0
      %3444 = vmatpush1.msra.mxu0 %v3407
      %3445 = vmatprep.subr.mxu0 0.0
      %3446 = vmatpush1.msra.mxu0 %v3406
      %3447 = vmatprep.subr.mxu0 0.0
      %3448 = vmatpush1.msra.mxu0 %v3405
      %3449 = vmatprep.subr.mxu0 0.0
      %3450 = vmatpush1.msra.mxu0 %v3404
      %3451 = vmatprep.subr.mxu0 0.0
      %3452 = vmatpush1.msra.mxu0 %v3403
      %3453 = vmatprep.subr.mxu0 0.0
      %3454 = vmatpush2.msra.mxu0 0.0
      %3455 = vmatprep.subr.mxu0 0.0
      %3456 = vmatpush2.msra.mxu0 0.0
      %3457 = vmatprep.subr.mxu0 0.0
      %3458 = vmatpush2.msra.mxu0 0.0
      %3459 = vmatprep.subr.mxu0 0.0
      %3460 = vmatpush2.msra.mxu0 0.0
      %3461 = vmatprep.subr.mxu0 0.0
      %3462 = vmatpush2.msra.mxu0 0.0
      %3463 = vmatprep.subr.mxu0 0.0
      %3464 = vmatpush2.msra.mxu0 0.0
      %3465 = vmatprep.subr.mxu0 0.0
      %3466 = vmatpush2.msra.mxu0 0.0
      %3467 = vmatprep.subr.mxu0 0.0
      %3468 = vmatpush2.msra.mxu0 0.0
      %3469 = vmatprep.subr.mxu0 0.0
      %3470 = vmatpush2.msra.mxu0 0.0
      %3471 = vmatprep.subr.mxu0 0.0
      %3472 = vmatpush2.msra.mxu0 0.0
      %3473 = vmatprep.subr.mxu0 0.0
      %3474 = vmatpush2.msra.mxu0 0.0
      %3475 = vmatprep.subr.mxu0 0.0
      %3476 = vmatpush2.msra.mxu0 0.0
      %3477 = vmatprep.subr.mxu0 0.0
      %3478 = vmatpush2.msra.mxu0 0.0
      %3479 = vmatprep.subr.mxu0 0.0
      %3480 = vmatpush2.msra.mxu0 0.0
      %3481 = vmatprep.subr.mxu0 0.0
      %3482 = vmatpush2.msra.mxu0 0.0
      %3483 = vmatprep.subr.mxu0 0.0
      %3484 = vmatpush2.msra.mxu0 0.0
      %3485 = vmatprep.mubr.f32.mxu0 0.0
      %3486 = vmatmul.mubr.f32.gmra.mxu0 %v3416
      %v3487 = vpop.f32.mrf.mxu0
      %v3488 = vadd.f32 0.0, %v3487
      %v3489 = vpop.f32.mrf.mxu0
      %3490 = vdwg.mxu0
      %vm3491 = vcmask 130048
      %3492 = vst.msk [vmem:[%s327] sm:$0xff] %vm3491, %v3488
      %p3493 = scmp.lt.s32.totalorder %s20, 1
      %s3494 = scalar_select %p3493, %s20, 1
      %s3495 = smul.addr %s3494, 8
      %s3496 = scalar_lea.vmem %s9, %s3495
      // Predicated region
      $region57: #{cnn_forward.1} parent=55 // pred_check
        %p3497 = pneg %p232
      $region58: #{cnn_forward.1} parent=55 // pred_check_branch
        %3499 = sbr.rel (%p3497) target = $region60
      $region59: #{cnn_forward.1} parent=55 // pred_region
        _
      $region60: #{cnn_forward.1} parent=55 // pred_fallthru
        _
    $region56: #{cnn_forward.1} parent=5 // pred_fallthru
      _
    %p3500 = scmp.le.s32.totalorder 2, %s15
    // Predicated region
    $region61: #{cnn_forward.1} parent=5 // pred_check
      %p3501 = pneg %p3500
    $region62: #{cnn_forward.1} parent=5 // pred_check_branch
      %3503 = sbr.rel (%p3501) target = $region64
    $region63: #{cnn_forward.1} parent=5 // pred_region
      %s3504 = ssub.s32 %s15, 2
      // Predicated region
      $region65: #{cnn_forward.1} parent=63 // pred_check
        %p3505 = pneg %p238
      $region66: #{cnn_forward.1} parent=63 // pred_check_branch
        %3507 = sbr.rel (%p3505) target = $region68
      $region67: #{cnn_forward.1} parent=63 // pred_region
        %p3508 = scmp.lt.s32.totalorder %s21, 1
        %s3509 = scalar_select %p3508, %s21, 1
        %s3510 = smul.addr %s3509, 8
        %s3511 = scalar_lea.vmem %s9, %s3510
      $region68: #{cnn_forward.1} parent=63 // pred_fallthru
        _
    $region64: #{cnn_forward.1} parent=5 // pred_fallthru
      _
  $region6: #{cnn_forward.1} parent=0 // loop_footer
    %s19 = sadd.s32 1, %s15
  $region7: #{cnn_forward.1} parent=0 // loop_footer_branch
    %14 = sbr.rel target = $region3
  $region8: #{cnn_forward.1} parent=0 // loop_exit
    _

</llo_original>
